<compile_context>
chip_gen: v6e
topology: v6e:2x2x1
jax: 0.10.0
libtpu: 0.0.40
codegen_flags: <defaults>
</compile_context>

<pallas_src>
import functools

import jax
import jax.numpy as jnp
from jax import lax
from jax.experimental import pallas as pl
from jax.experimental.pallas import tpu as pltpu


# ----------------------------- tiled matmul ----------------------------------

def _round_up(v, m):
    return (v + m - 1) // m * m


def _matmul_kernel(a_ref, b_ref, o_ref, acc_ref):
    @pl.when(pl.program_id(2) == 0)
    def _():
        acc_ref[...] = jnp.zeros_like(acc_ref)

    acc_ref[...] += jnp.dot(a_ref[...], b_ref[...],
                            preferred_element_type=jnp.float32)

    @pl.when(pl.program_id(2) == pl.num_programs(2) - 1)
    def _():
        o_ref[...] = acc_ref[...].astype(o_ref.dtype)


def pallas_matmul(a, b, *, out_dtype=jnp.float32, tm=512, tn=256, tk=None):
    """Tiled MXU matmul (bf16/f32 inputs, f32 accumulation in VMEM scratch)."""
    M, K = a.shape
    K2, N = b.shape
    assert K == K2
    if tk is None:                       # K (= Cin*9 here) is small: single k step
        tk = min(_round_up(K, 128), 2048)
    tm = min(tm, _round_up(M, 16))       # bf16 sublane tile is 16
    tn = min(tn, _round_up(N, 128))
    tk = min(tk, _round_up(K, 128))
    Mp, Np, Kp = _round_up(M, tm), _round_up(N, tn), _round_up(K, tk)
    if (Mp, Kp) != (M, K):
        a = jnp.pad(a, ((0, Mp - M), (0, Kp - K)))
    if (Kp, Np) != (K, N):
        b = jnp.pad(b, ((0, Kp - K), (0, Np - N)))
    cost = pl.CostEstimate(
        flops=2 * M * N * K,
        transcendentals=0,
        bytes_accessed=int(M * K * a.dtype.itemsize
                           + K * N * b.dtype.itemsize
                           + M * N * jnp.dtype(out_dtype).itemsize))
    out = pl.pallas_call(
        _matmul_kernel,
        grid=(Mp // tm, Np // tn, Kp // tk),
        in_specs=[pl.BlockSpec((tm, tk), lambda i, j, k: (i, k)),
                  pl.BlockSpec((tk, tn), lambda i, j, k: (k, j))],
        out_specs=pl.BlockSpec((tm, tn), lambda i, j, k: (i, j)),
        out_shape=jax.ShapeDtypeStruct((Mp, Np), out_dtype),
        scratch_shapes=[pltpu.VMEM((tm, tn), jnp.float32)],
        compiler_params=pltpu.CompilerParams(
            dimension_semantics=("parallel", "parallel", "arbitrary"),
            vmem_limit_bytes=32 * 1024 * 1024),
        cost_estimate=cost,
    )(a, b)
    if (Mp, Np) != (M, N):
        out = out[:M, :N]
    return out


# --------------------------- bucket attention --------------------------------

def _attn_kernel(x_ref, y_ref, fcs_ref, ret_ref, lse_ref, knorm_ref, *,
                 n_chunks, chunk_size):
    """One (batch, hash round) per grid step; pl.loop over chunks."""
    cs = chunk_size

    # L2-normalize the keys ONCE over the whole (L, C) block.
    # F.normalize(p=2, eps=5e-5) == x * rsqrt(max(||x||^2, eps^2)).
    xf = x_ref[0].astype(jnp.float32)                              # (L, C)
    inv_n = lax.rsqrt(jnp.maximum(jnp.sum(xf * xf, axis=-1, keepdims=True),
                                  5e-5 * 5e-5))
    knorm_ref[...] = (xf * inv_n).astype(jnp.bfloat16)             # (L, C) bf16

    @pl.loop(0, n_chunks)
    def _(k):
        kb = (k + n_chunks - 1) % n_chunks
        kf = (k + 1) % n_chunks
        q_start = pl.multiple_of(k * cs, cs)

        def krows(j):
            return knorm_ref[pl.ds(pl.multiple_of(j * cs, cs), cs), :]

        def rows3(ref3):
            return jnp.concatenate(
                [ref3[0, pl.ds(pl.multiple_of(k * cs, cs), cs), :],
                 ref3[0, pl.ds(pl.multiple_of(kb * cs, cs), cs), :],
                 ref3[0, pl.ds(pl.multiple_of(kf * cs, cs), cs), :]], axis=0)

        q = x_ref[0, pl.ds(q_start, cs), :]                        # (cs, C)  bf16
        k_slab = jnp.concatenate([krows(k), krows(kb), krows(kf)], axis=0)
        v_slab = rows3(y_ref)                                      # (3cs, Cy) bf16
        fc_slab = rows3(fcs_ref)                                   # (3cs, cs) bf16

        # ONE stacked score matmul per query chunk (keys = self|back|fwd).
        s = lax.dot_general(q, k_slab, (((1,), (1,)), ((), ())),
                            preferred_element_type=jnp.float32)    # (cs, 3cs)
        s = s + jnp.transpose(fc_slab.astype(jnp.float32), (1, 0))
        m = jnp.max(s, axis=-1, keepdims=True)                     # (cs, 1)
        e = jnp.exp(s - m)                                         # (cs, 3cs)
        denom = jnp.sum(e, axis=-1, keepdims=True)                 # (cs, 1)

        # ONE stacked PV matmul; normalize AFTER (inv commutes with the key sum).
        pv = jnp.dot(e.astype(jnp.bfloat16), v_slab,
                     preferred_element_type=jnp.float32)           # (cs, Cy)
        inv = pl.reciprocal(denom, approx=True)                    # EUP slot
        ret_ref[0, pl.ds(q_start, cs), :] = pv * inv
        lse_ref[0, pl.ds(q_start, cs), :] = m + jnp.log(denom)


def pallas_bucket_attention(x_s, y_s, fcs, *, chunk_size):
    NH, L, C = x_s.shape
    Cy = y_s.shape[-1]
    cs = chunk_size
    n_chunks = L // cs
    flops = NH * n_chunks * 2 * cs * 3 * cs * (C + Cy)
    cost = pl.CostEstimate(
        flops=int(flops),
        transcendentals=int(NH * n_chunks * cs * (3 * cs + 1) + NH * L),
        bytes_accessed=int(NH * L * (2 * (C + Cy + cs) + 4 * (Cy + 1))))
    kernel = functools.partial(_attn_kernel, n_chunks=n_chunks, chunk_size=cs)
    ret, lse = pl.pallas_call(
        kernel,
        grid=(NH,),
        in_specs=[
            pl.BlockSpec((1, L, C), lambda g: (g, 0, 0)),
            pl.BlockSpec((1, L, Cy), lambda g: (g, 0, 0)),
            pl.BlockSpec((1, L, cs), lambda g: (g, 0, 0)),
        ],
        out_specs=[
            pl.BlockSpec((1, L, Cy), lambda g: (g, 0, 0)),
            pl.BlockSpec((1, L, 1), lambda g: (g, 0, 0)),
        ],
        out_shape=[
            jax.ShapeDtypeStruct((NH, L, Cy), jnp.float32),
            jax.ShapeDtypeStruct((NH, L, 1), jnp.float32),
        ],
        scratch_shapes=[pltpu.VMEM((L, C), jnp.bfloat16)],
        compiler_params=pltpu.CompilerParams(
            dimension_semantics=("parallel",),
            vmem_limit_bytes=32 * 1024 * 1024),
        cost_estimate=cost,
    )(x_s, y_s, fcs)
    return ret, lse


# ------------------------- hash-round combine ---------------------------------

def _combine_kernel(ret_ref, sc_ref, inp_ref, o_ref, *, n_hashes, res_scale):
    s = sc_ref[0]                                           # (n_hashes, tl)
    m = jnp.max(s, axis=0, keepdims=True)
    e = jnp.exp(s - m)
    p = e * pl.reciprocal(jnp.sum(e, axis=0, keepdims=True), approx=True)

    acc = None
    for h in range(n_hashes):                               # static, small
        rt = jnp.transpose(ret_ref[0, h], (1, 0))           # (Cy, tl) lane-dense
        term = rt * p[h][None, :]
        acc = term if acc is None else acc + term
    o_ref[0] = acc * res_scale + inp_ref[0]                 # residual, NCL layout


def _pick_l_tile(L, n_hashes, cy, budget_bytes=8 * 1024 * 1024):
    # double-buffered per-step bytes per unit of tl (ret + score + inp + out)
    per_tl = 2 * (n_hashes * cy * 4 + n_hashes * 4 + 2 * cy * 4)
    max_tl = max(128, budget_bytes // max(per_tl, 1))
    if L <= max_tl:
        return L
    t = (max_tl // 128) * 128
    while t >= 128:
        if L % t == 0:
            return t
        t -= 128
    return L


def pallas_combine(ret_all, score_all, inp_ncl, res_scale):
    N, n_hashes, L, Cy = ret_all.shape
    Cin = inp_ncl.shape[1]
    tl = _pick_l_tile(L, n_hashes, Cy)
    kernel = functools.partial(_combine_kernel, n_hashes=n_hashes,
                               res_scale=float(res_scale))
    return pl.pallas_call(
        kernel,
        grid=(N, L // tl),
        in_specs=[
            pl.BlockSpec((1, n_hashes, tl, Cy), lambda n, l: (n, 0, l, 0)),
            pl.BlockSpec((1, n_hashes, tl), lambda n, l: (n, 0, l)),
            pl.BlockSpec((1, Cin, tl), lambda n, l: (n, 0, l)),
        ],
        out_specs=pl.BlockSpec((1, Cin, tl), lambda n, l: (n, 0, l)),
        out_shape=jax.ShapeDtypeStruct((N, Cin, L), jnp.float32),
        compiler_params=pltpu.CompilerParams(
            dimension_semantics=("parallel", "parallel"),
            vmem_limit_bytes=32 * 1024 * 1024),
    )(ret_all, score_all, inp_ncl)


# ------------------------------- JAX glue -------------------------------------

def im2col_3x3(x_nchw):
    """3x3, stride 1, padding 1 patch extraction. Output (N*H*W, Cin*9)."""
    # TODO(synk): fuse the 9 taps into the matmul k-axis (manual DMA of shifted
    # windows) instead of materializing the 9x patch tensor in HBM.
    N, Cin, H, W = x_nchw.shape
    xp = jnp.pad(x_nchw, ((0, 0), (0, 0), (1, 1), (1, 1)))
    cols = []
    for kh in range(3):
        for kw in range(3):
            cols.append(xp[:, :, kh:kh + H, kw:kw + W])
    patches = jnp.stack(cols, axis=2)               # (N, Cin, 9, H, W)
    patches = patches.reshape(N, Cin * 9, H * W)
    patches = patches.transpose(0, 2, 1).reshape(N * H * W, Cin * 9)
    return patches


def _orthogonal(key, rows, cols):
    n = max(rows, cols)
    a = jax.random.normal(key, (n, n), jnp.float32)
    q, _ = jnp.linalg.qr(a)
    return q[:rows, :cols]


def gla_forward(x, params, *, n_hashes, reduction, chunk_size, res_scale):
    N, Cin, H, W = x.shape
    L = H * W
    C = Cin // reduction      # conv_match output channels
    Cy = Cin                  # conv_assembly output channels
    cs = chunk_size

    hash_buckets = min(L // cs + (L // cs) % 2, 128)

    # --- fused 3x3 convs + first fc Linear + LSH projection: ONE tiled matmul.
    # bf16 operands / f32 MXU accumulation / bf16 output (halves HBM writeback
    # and all downstream gather traffic).  Folds: rot_cols = Wm @ R (LSH is a
    # linear map of the raw x_embed) and w_fc1 = W_assembly_fc @ fc.Linear1.W.
    patches = im2col_3x3(x.astype(jnp.bfloat16))                   # (N*L, Cin*9)
    w_fc1 = jnp.dot(params["w_assembly_fc"], params["fc_w1"])      # (Cin*9, cs)
    rot_cols = jnp.dot(params["w_match"], params["rotations"])     # (Cin*9, nh*hb)
    w_fused = jnp.concatenate(
        [params["w_match"], params["w_assembly"], w_fc1, rot_cols],
        axis=1).astype(jnp.bfloat16)
    fused = pallas_matmul(patches, w_fused, out_dtype=jnp.bfloat16)

    x_embed = fused[:, :C].reshape(N, L, C)                        # bf16
    y_embed = fused[:, C:C + Cy].reshape(N, L, Cy)                 # bf16
    fc_pre = fused[:, C + Cy:C + Cy + cs]                          # (N*L, cs)
    rotated = fused[:, C + Cy + cs:].reshape(N, L, n_hashes, hash_buckets)

    # --- tokenwise fc MLP hoisted out of the attention kernel (once per token,
    # not once per hash round): ReLU(pre + b1) @ W2 + b2.
    fc_h = jnp.maximum(fc_pre.astype(jnp.float32) + params["fc_b1"], 0.0)
    fc_tok = (jnp.dot(fc_h, params["fc_w2"], preferred_element_type=jnp.float32)
              + params["fc_b2"]).astype(jnp.bfloat16).reshape(N, L, cs)

    # --- LSH bucket ids (argmax over rotated directions), offset per round.
    codes = jnp.argmax(rotated, axis=-1)                 # (N, L, n_hashes)
    codes = jnp.transpose(codes, (0, 2, 1))              # (N, n_hashes, L)
    offsets = (jnp.arange(n_hashes) * hash_buckets).reshape(1, n_hashes, 1)
    hash_codes = (codes + offsets).reshape(N, n_hashes * L)

    # --- sort tokens by bucket id, gather features (plain-JAX glue, bf16).
    indices = jnp.argsort(hash_codes, axis=-1)
    undo_sort = jnp.argsort(indices, axis=-1)
    mod_indices = indices % L

    def gather(v, idx):
        return jnp.take_along_axis(v, idx[:, :, None], axis=1)

    x_sorted = gather(x_embed, mod_indices)      # (N, n_hashes*L, C)
    y_sorted = gather(y_embed, mod_indices)      # (N, n_hashes*L, Cy)
    fc_sorted = gather(fc_tok, mod_indices)      # (N, n_hashes*L, cs)

    # TODO(synk): padding branch (L % chunk_size != 0) not implemented.
    assert L % cs == 0
    NH = N * n_hashes

    ret, lse = pallas_bucket_attention(
        x_sorted.reshape(NH, L, C),
        y_sorted.reshape(NH, L, Cy),
        fc_sorted.reshape(NH, L, cs),
        chunk_size=cs)

    ret = ret.reshape(N, n_hashes * L, Cy)
    bucket_score = lse.reshape(N, n_hashes * L)

    # unsort back to the original token order (row gather, plain JAX)
    ret = jnp.take_along_axis(ret, undo_sort[:, :, None], axis=1)
    bucket_score = jnp.take_along_axis(bucket_score, undo_sort, axis=1)

    ret = ret.reshape(N, n_hashes, L, Cy)
    bucket_score = bucket_score.reshape(N, n_hashes, L)

    # residual consumed in natural NCL layout; combine output is lane-dense
    # (N, Cin, L), so no final transpose is needed.
    inp_ncl = x.reshape(N, Cin, L)
    out_ncl = pallas_combine(ret, bucket_score, inp_ncl, res_scale)
    return out_ncl.reshape(N, Cin, H, W)


def make_params(key, channels, reduction, chunk_size, n_hashes, hash_buckets):
    C = channels // reduction
    ks = jax.random.split(key, 8)

    def w(k, shape, fan_in):
        return jax.random.normal(k, shape, jnp.float32) * (1.0 / jnp.sqrt(fan_in))

    # conv weights stored pre-flattened in (Cin*9, Cout) layout for the matmul
    params = {
        "w_match": w(ks[0], (channels * 9, C), channels * 9),
        "w_assembly": w(ks[1], (channels * 9, channels), channels * 9),
        "w_assembly_fc": w(ks[2], (channels * 9, channels), channels * 9),
        # fc: Linear(channels, chunk_size) -> ReLU -> Linear(chunk_size, chunk_size)
        "fc_w1": w(ks[3], (channels, chunk_size), channels),
        "fc_b1": w(ks[4], (1, chunk_size), channels),
        "fc_w2": w(ks[5], (chunk_size, chunk_size), chunk_size),
        "fc_b2": w(ks[6], (1, chunk_size), chunk_size),
    }
    # deterministic "random orthogonal" LSH rotations, one per hash round
    rot_keys = jax.random.split(ks[7], n_hashes)
    rots = [_orthogonal(k, C, hash_buckets) for k in rot_keys]
    params["rotations"] = jnp.concatenate(rots, axis=-1)   # (C, n_hashes*hb)
    return params


if __name__ == "__main__":
    # small, module-consistent configuration
    N, channels, H, W = 2, 16, 16, 16
    n_hashes, reduction, chunk_size, res_scale = 4, 4, 32, 1.0
    L = H * W
    hash_buckets = min(L // chunk_size + (L // chunk_size) % 2, 128)

    key = jax.random.PRNGKey(0)
    k_in, k_par = jax.random.split(key)
    x = jax.random.normal(k_in, (N, channels, H, W), jnp.float32)
    params = make_params(k_par, channels, reduction, chunk_size,
                         n_hashes, hash_buckets)

    fwd = jax.jit(functools.partial(
        gla_forward, n_hashes=n_hashes, reduction=reduction,
        chunk_size=chunk_size, res_scale=res_scale))
    out = fwd(x, params)
    out = jax.block_until_ready(out)
    assert out.shape == (N, channels, H, W)
    assert bool(jnp.all(jnp.isfinite(out)))
    print("KERNEL_OK")
</pallas_src>

<mosaic_0001>
module attributes {stable_mosaic.version = 11 : i64} {
  func.func @_matmul_kernel(%arg0: i32, %arg1: i32, %arg2: i32, %arg3: memref<512x256xbf16, #tpu.memory_space<vmem>>, %arg4: memref<256x128xbf16, #tpu.memory_space<vmem>>, %arg5: memref<512x128xbf16, #tpu.memory_space<vmem>>, %arg6: memref<512x128xf32, #tpu.memory_space<vmem>>) attributes {dimension_semantics = [#tpu.dimension_semantics<parallel>, #tpu.dimension_semantics<parallel>, #tpu.dimension_semantics<arbitrary>], iteration_bounds = array<i64: 1, 1, 1>, scalar_prefetch = 0 : i64, scratch_operands = 1 : i64, tpu.core_type = #tpu.core_type<tc>, window_params = [{transform_indices = @transform_0, window_bounds = array<i64: 512, 256>}, {transform_indices = @transform_1, window_bounds = array<i64: 256, 128>}, {transform_indices = @transform_2, window_bounds = array<i64: 512, 128>}]} {
    %c0_i32 = arith.constant 0 : i32
    %0 = arith.cmpi eq, %arg2, %c0_i32 : i32
    %1 = arith.extui %0 : i1 to i32
    %c0_i32_0 = arith.constant 0 : i32
    %2 = arith.cmpi ne, %1, %c0_i32_0 : i32
    scf.if %2 {
      %cst_10 = arith.constant 0.000000e+00 : f32
      %12 = vector.broadcast %cst_10 : f32 to vector<512x128xf32>
      %c0_11 = arith.constant 0 : index
      %c0_12 = arith.constant 0 : index
      %13 = vector.load %arg6[%c0_11, %c0_12] : memref<512x128xf32, #tpu.memory_space<vmem>>, vector<512x128xf32>
      tpu.vector_store %arg6[%c0_11, %c0_12], %12 {strides = array<i32>} : memref<512x128xf32, #tpu.memory_space<vmem>>, vector<512x128xf32>,
    } else {
    }
    %c0 = arith.constant 0 : index
    %c0_1 = arith.constant 0 : index
    %3 = vector.load %arg6[%c0, %c0_1] : memref<512x128xf32, #tpu.memory_space<vmem>>, vector<512x128xf32>
    %c0_2 = arith.constant 0 : index
    %c0_3 = arith.constant 0 : index
    %4 = vector.load %arg3[%c0_2, %c0_3] : memref<512x256xbf16, #tpu.memory_space<vmem>>, vector<512x256xbf16>
    %c0_4 = arith.constant 0 : index
    %c0_5 = arith.constant 0 : index
    %5 = vector.load %arg4[%c0_4, %c0_5] : memref<256x128xbf16, #tpu.memory_space<vmem>>, vector<256x128xbf16>
    %cst = arith.constant dense<0.000000e+00> : vector<512x128xf32>
    %6 = tpu.matmul %4, %5, %cst {dimension_numbers = #tpu.dot_dimension_numbers<[1], [0], [0], [1], [0, 0, 1, 1], [], []>} : vector<512x256xbf16>, vector<256x128xbf16>, vector<512x128xf32> -> vector<512x128xf32>
    %7 = arith.addf %3, %6 : vector<512x128xf32>
    %c0_6 = arith.constant 0 : index
    %c0_7 = arith.constant 0 : index
    %8 = vector.load %arg6[%c0_6, %c0_7] : memref<512x128xf32, #tpu.memory_space<vmem>>, vector<512x128xf32>
    tpu.vector_store %arg6[%c0_6, %c0_7], %7 {strides = array<i32>} : memref<512x128xf32, #tpu.memory_space<vmem>>, vector<512x128xf32>,
    %c0_i32_8 = arith.constant 0 : i32
    %9 = arith.cmpi eq, %arg2, %c0_i32_8 : i32
    %10 = arith.extui %9 : i1 to i32
    %c0_i32_9 = arith.constant 0 : i32
    %11 = arith.cmpi ne, %10, %c0_i32_9 : i32
    scf.if %11 {
      %c0_10 = arith.constant 0 : index
      %c0_11 = arith.constant 0 : index
      %12 = vector.load %arg6[%c0_10, %c0_11] : memref<512x128xf32, #tpu.memory_space<vmem>>, vector<512x128xf32>
      %13 = arith.truncf %12 : vector<512x128xf32> to vector<512x128xbf16>
      %c0_12 = arith.constant 0 : index
      %c0_13 = arith.constant 0 : index
      %14 = vector.load %arg5[%c0_12, %c0_13] : memref<512x128xbf16, #tpu.memory_space<vmem>>, vector<512x128xbf16>
      tpu.vector_store %arg5[%c0_12, %c0_13], %13 {strides = array<i32>} : memref<512x128xbf16, #tpu.memory_space<vmem>>, vector<512x128xbf16>,
    } else {
    }
    return
  }
  func.func @transform_0(%arg0: i32, %arg1: i32, %arg2: i32) -> (i32, i32) {
    %c0_i32 = arith.constant 0 : i32
    return %arg0, %arg2 : i32, i32
  }
  func.func @transform_1(%arg0: i32, %arg1: i32, %arg2: i32) -> (i32, i32) {
    %c0_i32 = arith.constant 0 : i32
    return %arg2, %arg1 : i32, i32
  }
  func.func @transform_2(%arg0: i32, %arg1: i32, %arg2: i32) -> (i32, i32) {
    %c0_i32 = arith.constant 0 : i32
    return %arg0, %arg1 : i32, i32
  }
}

module attributes {stable_mosaic.version = 11 : i64} {
  func.func @_attn_kernel(%arg0: i32, %arg1: memref<1x256x4xbf16, #tpu.memory_space<vmem>>, %arg2: memref<1x256x16xbf16, #tpu.memory_space<vmem>>, %arg3: memref<1x256x32xbf16, #tpu.memory_space<vmem>>, %arg4: memref<1x256x16xf32, #tpu.memory_space<vmem>>, %arg5: memref<1x256x1xf32, #tpu.memory_space<vmem>>, %arg6: memref<256x4xbf16, #tpu.memory_space<vmem>>) attributes {dimension_semantics = [#tpu.dimension_semantics<parallel>], iteration_bounds = array<i64: 8>, scalar_prefetch = 0 : i64, scratch_operands = 1 : i64, tpu.core_type = #tpu.core_type<tc>, window_params = [{transform_indices = @transform_0, window_bounds = array<i64: 1, 256, 4>}, {transform_indices = @transform_1, window_bounds = array<i64: 1, 256, 16>}, {transform_indices = @transform_2, window_bounds = array<i64: 1, 256, 32>}, {transform_indices = @transform_3, window_bounds = array<i64: 1, 256, 16>}, {transform_indices = @transform_4, window_bounds = array<i64: 1, 256, 1>}]} {
    %c0 = arith.constant 0 : index
    %c0_0 = arith.constant 0 : index
    %c0_1 = arith.constant 0 : index
    %0 = vector.load %arg1[%c0, %c0_0, %c0_1] : memref<1x256x4xbf16, #tpu.memory_space<vmem>>, vector<1x256x4xbf16>
    %1 = vector.shape_cast %0 : vector<1x256x4xbf16> to vector<256x4xbf16>
    %2 = arith.extf %1 : vector<256x4xbf16> to vector<256x4xf32>
    %3 = arith.mulf %2, %2 : vector<256x4xf32>
    %cst = arith.constant dense<0.000000e+00> : vector<256xf32>
    %4 = vector.multi_reduction <add>, %3, %cst [1] : vector<256x4xf32> to vector<256xf32>
    %5 = vector.shape_cast %4 : vector<256xf32> to vector<256x1xf32>
    %cst_2 = arith.constant 2.500000e-09 : f32
    %6 = vector.broadcast %cst_2 : f32 to vector<256x1xf32>
    %7 = arith.maximumf %5, %6 : vector<256x1xf32>
    %8 = math.rsqrt %7 : vector<256x1xf32>
    %9 = vector.broadcast %8 : vector<256x1xf32> to vector<256x4xf32>
    %10 = arith.mulf %2, %9 : vector<256x4xf32>
    %11 = arith.truncf %10 : vector<256x4xf32> to vector<256x4xbf16>
    %c0_3 = arith.constant 0 : index
    %c0_4 = arith.constant 0 : index
    %12 = vector.load %arg6[%c0_3, %c0_4] : memref<256x4xbf16, #tpu.memory_space<vmem>>, vector<256x4xbf16>
    tpu.vector_store %arg6[%c0_3, %c0_4], %11 {strides = array<i32>} : memref<256x4xbf16, #tpu.memory_space<vmem>>, vector<256x4xbf16>,
    %c0_i32 = arith.constant 0 : i32
    %c8_i32 = arith.constant 8 : i32
    %13 = arith.addi %c0_i32, %c8_i32 : i32
    %c1_i32 = arith.constant 1 : i32
    scf.for %arg7 = %c0_i32 to %13 step %c1_i32  : i32 {
      %c1_i32_6 = arith.constant 1 : i32
      %14 = arith.muli %arg7, %c1_i32_6 : i32
      %c0_i32_7 = arith.constant 0 : i32
      %15 = arith.addi %c0_i32_7, %14 : i32
      %c8_i32_8 = arith.constant 8 : i32
      %16 = arith.addi %15, %c8_i32_8 : i32
      %c1_i32_9 = arith.constant 1 : i32
      %17 = arith.subi %16, %c1_i32_9 : i32
      %c8_i32_10 = arith.constant 8 : i32
      %c0_i32_11 = arith.constant 0 : i32
      %18 = arith.cmpi eq, %c8_i32_10, %c0_i32_11 : i32
      %c1_i32_12 = arith.constant 1 : i32
      %19 = arith.select %18, %c1_i32_12, %c8_i32_10 : i32
      %20 = arith.remsi %17, %19 : i32
      %c0_i32_13 = arith.constant 0 : i32
      %21 = arith.cmpi ne, %20, %c0_i32_13 : i32
      %c0_i32_14 = arith.constant 0 : i32
      %22 = arith.cmpi slt, %20, %c0_i32_14 : i32
      %c0_i32_15 = arith.constant 0 : i32
      %23 = arith.cmpi slt, %19, %c0_i32_15 : i32
      %24 = arith.xori %22, %23 : i1
      %25 = arith.andi %24, %21 : i1
      %26 = arith.addi %20, %19 : i32
      %27 = arith.select %25, %26, %20 : i32
      %c1_i32_16 = arith.constant 1 : i32
      %28 = arith.addi %15, %c1_i32_16 : i32
      %c8_i32_17 = arith.constant 8 : i32
      %c0_i32_18 = arith.constant 0 : i32
      %29 = arith.cmpi eq, %c8_i32_17, %c0_i32_18 : i32
      %c1_i32_19 = arith.constant 1 : i32
      %30 = arith.select %29, %c1_i32_19, %c8_i32_17 : i32
      %31 = arith.remsi %28, %30 : i32
      %c0_i32_20 = arith.constant 0 : i32
      %32 = arith.cmpi ne, %31, %c0_i32_20 : i32
      %c0_i32_21 = arith.constant 0 : i32
      %33 = arith.cmpi slt, %31, %c0_i32_21 : i32
      %c0_i32_22 = arith.constant 0 : i32
      %34 = arith.cmpi slt, %30, %c0_i32_22 : i32
      %35 = arith.xori %33, %34 : i1
      %36 = arith.andi %35, %32 : i1
      %37 = arith.addi %31, %30 : i32
      %38 = arith.select %36, %37, %31 : i32
      %c32_i32 = arith.constant 32 : i32
      %39 = arith.muli %15, %c32_i32 : i32
      %40 = tpu.assume_multiple %39, 32 : i32
      %c0_23 = arith.constant 0 : index
      %41 = arith.index_cast %40 : i32 to index
      %c0_24 = arith.constant 0 : index
      %42 = vector.load %arg1[%c0_23, %41, %c0_24] : memref<1x256x4xbf16, #tpu.memory_space<vmem>>, vector<1x32x4xbf16>
      %43 = vector.shape_cast %42 : vector<1x32x4xbf16> to vector<32x4xbf16>
      %c32_i32_25 = arith.constant 32 : i32
      %44 = arith.muli %15, %c32_i32_25 : i32
      %45 = tpu.assume_multiple %44, 32 : i32
      %46 = arith.index_cast %45 : i32 to index
      %c0_26 = arith.constant 0 : index
      %47 = vector.load %arg6[%46, %c0_26] : memref<256x4xbf16, #tpu.memory_space<vmem>>, vector<32x4xbf16>
      %c32_i32_27 = arith.constant 32 : i32
      %48 = arith.muli %27, %c32_i32_27 : i32
      %49 = tpu.assume_multiple %48, 32 : i32
      %50 = arith.index_cast %49 : i32 to index
      %c0_28 = arith.constant 0 : index
      %51 = vector.load %arg6[%50, %c0_28] : memref<256x4xbf16, #tpu.memory_space<vmem>>, vector<32x4xbf16>
      %c32_i32_29 = arith.constant 32 : i32
      %52 = arith.muli %38, %c32_i32_29 : i32
      %53 = tpu.assume_multiple %52, 32 : i32
      %54 = arith.index_cast %53 : i32 to index
      %c0_30 = arith.constant 0 : index
      %55 = vector.load %arg6[%54, %c0_30] : memref<256x4xbf16, #tpu.memory_space<vmem>>, vector<32x4xbf16>
      %56 = tpu.concatenate %47, %51, %55 in 0 : vector<32x4xbf16>, vector<32x4xbf16>, vector<32x4xbf16> -> vector<96x4xbf16>
      %c32_i32_31 = arith.constant 32 : i32
      %57 = arith.muli %15, %c32_i32_31 : i32
      %58 = tpu.assume_multiple %57, 32 : i32
      %c0_32 = arith.constant 0 : index
      %59 = arith.index_cast %58 : i32 to index
      %c0_33 = arith.constant 0 : index
      %60 = vector.load %arg2[%c0_32, %59, %c0_33] : memref<1x256x16xbf16, #tpu.memory_space<vmem>>, vector<1x32x16xbf16>
      %61 = vector.shape_cast %60 : vector<1x32x16xbf16> to vector<32x16xbf16>
      %c32_i32_34 = arith.constant 32 : i32
      %62 = arith.muli %27, %c32_i32_34 : i32
      %63 = tpu.assume_multiple %62, 32 : i32
      %c0_35 = arith.constant 0 : index
      %64 = arith.index_cast %63 : i32 to index
      %c0_36 = arith.constant 0 : index
      %65 = vector.load %arg2[%c0_35, %64, %c0_36] : memref<1x256x16xbf16, #tpu.memory_space<vmem>>, vector<1x32x16xbf16>
      %66 = vector.shape_cast %65 : vector<1x32x16xbf16> to vector<32x16xbf16>
      %c32_i32_37 = arith.constant 32 : i32
      %67 = arith.muli %38, %c32_i32_37 : i32
      %68 = tpu.assume_multiple %67, 32 : i32
      %c0_38 = arith.constant 0 : index
      %69 = arith.index_cast %68 : i32 to index
      %c0_39 = arith.constant 0 : index
      %70 = vector.load %arg2[%c0_38, %69, %c0_39] : memref<1x256x16xbf16, #tpu.memory_space<vmem>>, vector<1x32x16xbf16>
      %71 = vector.shape_cast %70 : vector<1x32x16xbf16> to vector<32x16xbf16>
      %72 = tpu.concatenate %61, %66, %71 in 0 : vector<32x16xbf16>, vector<32x16xbf16>, vector<32x16xbf16> -> vector<96x16xbf16>
      %c32_i32_40 = arith.constant 32 : i32
      %73 = arith.muli %15, %c32_i32_40 : i32
      %74 = tpu.assume_multiple %73, 32 : i32
      %c0_41 = arith.constant 0 : index
      %75 = arith.index_cast %74 : i32 to index
      %c0_42 = arith.constant 0 : index
      %76 = vector.load %arg3[%c0_41, %75, %c0_42] : memref<1x256x32xbf16, #tpu.memory_space<vmem>>, vector<1x32x32xbf16>
      %77 = vector.shape_cast %76 : vector<1x32x32xbf16> to vector<32x32xbf16>
      %c32_i32_43 = arith.constant 32 : i32
      %78 = arith.muli %27, %c32_i32_43 : i32
      %79 = tpu.assume_multiple %78, 32 : i32
      %c0_44 = arith.constant 0 : index
      %80 = arith.index_cast %79 : i32 to index
      %c0_45 = arith.constant 0 : index
      %81 = vector.load %arg3[%c0_44, %80, %c0_45] : memref<1x256x32xbf16, #tpu.memory_space<vmem>>, vector<1x32x32xbf16>
      %82 = vector.shape_cast %81 : vector<1x32x32xbf16> to vector<32x32xbf16>
      %c32_i32_46 = arith.constant 32 : i32
      %83 = arith.muli %38, %c32_i32_46 : i32
      %84 = tpu.assume_multiple %83, 32 : i32
      %c0_47 = arith.constant 0 : index
      %85 = arith.index_cast %84 : i32 to index
      %c0_48 = arith.constant 0 : index
      %86 = vector.load %arg3[%c0_47, %85, %c0_48] : memref<1x256x32xbf16, #tpu.memory_space<vmem>>, vector<1x32x32xbf16>
      %87 = vector.shape_cast %86 : vector<1x32x32xbf16> to vector<32x32xbf16>
      %88 = tpu.concatenate %77, %82, %87 in 0 : vector<32x32xbf16>, vector<32x32xbf16>, vector<32x32xbf16> -> vector<96x32xbf16>
      %cst_49 = arith.constant dense<0.000000e+00> : vector<32x96xf32>
      %89 = tpu.matmul %43, %56, %cst_49 {dimension_numbers = #tpu.dot_dimension_numbers<[1], [1], [0], [0], [0, 0, 1, 0], [], []>} : vector<32x4xbf16>, vector<96x4xbf16>, vector<32x96xf32> -> vector<32x96xf32>
      %90 = arith.extf %88 : vector<96x32xbf16> to vector<96x32xf32>
      %91 = tpu.transpose %90, [1, 0] : vector<96x32xf32> -> vector<32x96xf32>
      %92 = arith.addf %89, %91 : vector<32x96xf32>
      %cst_50 = arith.constant dense<0xFF800000> : vector<32xf32>
      %93 = vector.multi_reduction <maximumf>, %92, %cst_50 [1] : vector<32x96xf32> to vector<32xf32>
      %94 = vector.shape_cast %93 : vector<32xf32> to vector<32x1xf32>
      %95 = vector.broadcast %94 : vector<32x1xf32> to vector<32x96xf32>
      %96 = arith.subf %92, %95 : vector<32x96xf32>
      %97 = math.exp %96 : vector<32x96xf32>
      %cst_51 = arith.constant dense<0.000000e+00> : vector<32xf32>
      %98 = vector.multi_reduction <add>, %97, %cst_51 [1] : vector<32x96xf32> to vector<32xf32>
      %99 = vector.shape_cast %98 : vector<32xf32> to vector<32x1xf32>
      %100 = arith.truncf %97 : vector<32x96xf32> to vector<32x96xbf16>
      %cst_52 = arith.constant dense<0.000000e+00> : vector<32x16xf32>
      %101 = tpu.matmul %100, %72, %cst_52 {dimension_numbers = #tpu.dot_dimension_numbers<[1], [0], [0], [1], [0, 0, 1, 1], [], []>} : vector<32x96xbf16>, vector<96x16xbf16>, vector<32x16xf32> -> vector<32x16xf32>
      %102 = tpu.reciprocal %99 {approx = true} : vector<32x1xf32> -> vector<32x1xf32>
      %103 = vector.broadcast %102 : vector<32x1xf32> to vector<32x16xf32>
      %104 = arith.mulf %101, %103 : vector<32x16xf32>
      %c0_53 = arith.constant 0 : index
      %105 = arith.index_cast %40 : i32 to index
      %c0_54 = arith.constant 0 : index
      %106 = vector.load %arg4[%c0_53, %105, %c0_54] : memref<1x256x16xf32, #tpu.memory_space<vmem>>, vector<1x32x16xf32>
      %107 = vector.shape_cast %106 : vector<1x32x16xf32> to vector<32x16xf32>
      %108 = vector.shape_cast %104 : vector<32x16xf32> to vector<1x32x16xf32>
      tpu.vector_store %arg4[%c0_53, %105, %c0_54], %108 {strides = array<i32>} : memref<1x256x16xf32, #tpu.memory_space<vmem>>, vector<1x32x16xf32>,
      %109 = math.log %99 : vector<32x1xf32>
      %110 = arith.addf %94, %109 : vector<32x1xf32>
      %c0_55 = arith.constant 0 : index
      %111 = arith.index_cast %40 : i32 to index
      %c0_56 = arith.constant 0 : index
      %112 = vector.load %arg5[%c0_55, %111, %c0_56] : memref<1x256x1xf32, #tpu.memory_space<vmem>>, vector<1x32x1xf32>
      %113 = vector.shape_cast %112 : vector<1x32x1xf32> to vector<32x1xf32>
      %114 = vector.shape_cast %110 : vector<32x1xf32> to vector<1x32x1xf32>
      tpu.vector_store %arg5[%c0_55, %111, %c0_56], %114 {strides = array<i32>} : memref<1x256x1xf32, #tpu.memory_space<vmem>>, vector<1x32x1xf32>,
    }
    %c8_i32_5 = arith.constant 8 : i32
    return
  }
  func.func @transform_0(%arg0: i32) -> (i32, i32, i32) {
    %c0_i32 = arith.constant 0 : i32
    %c0_i32_0 = arith.constant 0 : i32
    %c0_i32_1 = arith.constant 0 : i32
    return %arg0, %c0_i32, %c0_i32_0 : i32, i32, i32
  }
  func.func @transform_1(%arg0: i32) -> (i32, i32, i32) {
    %c0_i32 = arith.constant 0 : i32
    %c0_i32_0 = arith.constant 0 : i32
    %c0_i32_1 = arith.constant 0 : i32
    return %arg0, %c0_i32, %c0_i32_0 : i32, i32, i32
  }
  func.func @transform_2(%arg0: i32) -> (i32, i32, i32) {
    %c0_i32 = arith.constant 0 : i32
    %c0_i32_0 = arith.constant 0 : i32
    %c0_i32_1 = arith.constant 0 : i32
    return %arg0, %c0_i32, %c0_i32_0 : i32, i32, i32
  }
  func.func @transform_3(%arg0: i32) -> (i32, i32, i32) {
    %c0_i32 = arith.constant 0 : i32
    %c0_i32_0 = arith.constant 0 : i32
    %c0_i32_1 = arith.constant 0 : i32
    return %arg0, %c0_i32, %c0_i32_0 : i32, i32, i32
  }
  func.func @transform_4(%arg0: i32) -> (i32, i32, i32) {
    %c0_i32 = arith.constant 0 : i32
    %c0_i32_0 = arith.constant 0 : i32
    %c0_i32_1 = arith.constant 0 : i32
    return %arg0, %c0_i32, %c0_i32_0 : i32, i32, i32
  }
}

module attributes {stable_mosaic.version = 11 : i64} {
  func.func @_combine_kernel(%arg0: i32, %arg1: i32, %arg2: memref<1x4x256x16xf32, #tpu.memory_space<vmem>>, %arg3: memref<1x4x256xf32, #tpu.memory_space<vmem>>, %arg4: memref<1x16x256xf32, #tpu.memory_space<vmem>>, %arg5: memref<1x16x256xf32, #tpu.memory_space<vmem>>) attributes {dimension_semantics = [#tpu.dimension_semantics<parallel>, #tpu.dimension_semantics<parallel>], iteration_bounds = array<i64: 2, 1>, scalar_prefetch = 0 : i64, scratch_operands = 0 : i64, tpu.core_type = #tpu.core_type<tc>, window_params = [{transform_indices = @transform_0, window_bounds = array<i64: 1, 4, 256, 16>}, {transform_indices = @transform_1, window_bounds = array<i64: 1, 4, 256>}, {transform_indices = @transform_2, window_bounds = array<i64: 1, 16, 256>}, {transform_indices = @transform_3, window_bounds = array<i64: 1, 16, 256>}]} {
    %c0 = arith.constant 0 : index
    %c0_0 = arith.constant 0 : index
    %c0_1 = arith.constant 0 : index
    %0 = vector.load %arg3[%c0, %c0_0, %c0_1] : memref<1x4x256xf32, #tpu.memory_space<vmem>>, vector<1x4x256xf32>
    %1 = vector.shape_cast %0 : vector<1x4x256xf32> to vector<4x256xf32>
    %cst = arith.constant dense<0xFF800000> : vector<256xf32>
    %2 = vector.multi_reduction <maximumf>, %1, %cst [0] : vector<4x256xf32> to vector<256xf32>
    %3 = vector.shape_cast %2 : vector<256xf32> to vector<1x256xf32>
    %4 = vector.broadcast %3 : vector<1x256xf32> to vector<4x256xf32>
    %5 = arith.subf %1, %4 : vector<4x256xf32>
    %6 = math.exp %5 : vector<4x256xf32>
    %cst_2 = arith.constant dense<0.000000e+00> : vector<256xf32>
    %7 = vector.multi_reduction <add>, %6, %cst_2 [0] : vector<4x256xf32> to vector<256xf32>
    %8 = vector.shape_cast %7 : vector<256xf32> to vector<1x256xf32>
    %9 = tpu.reciprocal %8 {approx = true} : vector<1x256xf32> -> vector<1x256xf32>
    %10 = vector.broadcast %9 : vector<1x256xf32> to vector<4x256xf32>
    %11 = arith.mulf %6, %10 : vector<4x256xf32>
    %c0_3 = arith.constant 0 : index
    %c0_4 = arith.constant 0 : index
    %c0_5 = arith.constant 0 : index
    %c0_6 = arith.constant 0 : index
    %12 = vector.load %arg2[%c0_3, %c0_4, %c0_5, %c0_6] : memref<1x4x256x16xf32, #tpu.memory_space<vmem>>, vector<1x1x256x16xf32>
    %13 = vector.shape_cast %12 : vector<1x1x256x16xf32> to vector<256x16xf32>
    %14 = tpu.transpose %13, [1, 0] : vector<256x16xf32> -> vector<16x256xf32>
    %15 = vector.extract_strided_slice %11 {offsets = [0, 0], sizes = [1, 256], strides = [1, 1]} : vector<4x256xf32> to vector<1x256xf32>
    %16 = vector.shape_cast %15 : vector<1x256xf32> to vector<256xf32>
    %17 = vector.shape_cast %16 : vector<256xf32> to vector<1x256xf32>
    %18 = vector.broadcast %17 : vector<1x256xf32> to vector<16x256xf32>
    %19 = arith.mulf %14, %18 : vector<16x256xf32>
    %c0_7 = arith.constant 0 : index
    %c1 = arith.constant 1 : index
    %c0_8 = arith.constant 0 : index
    %c0_9 = arith.constant 0 : index
    %20 = vector.load %arg2[%c0_7, %c1, %c0_8, %c0_9] : memref<1x4x256x16xf32, #tpu.memory_space<vmem>>, vector<1x1x256x16xf32>
    %21 = vector.shape_cast %20 : vector<1x1x256x16xf32> to vector<256x16xf32>
    %22 = tpu.transpose %21, [1, 0] : vector<256x16xf32> -> vector<16x256xf32>
    %23 = vector.extract_strided_slice %11 {offsets = [1, 0], sizes = [1, 256], strides = [1, 1]} : vector<4x256xf32> to vector<1x256xf32>
    %24 = vector.shape_cast %23 : vector<1x256xf32> to vector<256xf32>
    %25 = vector.shape_cast %24 : vector<256xf32> to vector<1x256xf32>
    %26 = vector.broadcast %25 : vector<1x256xf32> to vector<16x256xf32>
    %27 = arith.mulf %22, %26 : vector<16x256xf32>
    %28 = arith.addf %19, %27 : vector<16x256xf32>
    %c0_10 = arith.constant 0 : index
    %c2 = arith.constant 2 : index
    %c0_11 = arith.constant 0 : index
    %c0_12 = arith.constant 0 : index
    %29 = vector.load %arg2[%c0_10, %c2, %c0_11, %c0_12] : memref<1x4x256x16xf32, #tpu.memory_space<vmem>>, vector<1x1x256x16xf32>
    %30 = vector.shape_cast %29 : vector<1x1x256x16xf32> to vector<256x16xf32>
    %31 = tpu.transpose %30, [1, 0] : vector<256x16xf32> -> vector<16x256xf32>
    %32 = vector.extract_strided_slice %11 {offsets = [2, 0], sizes = [1, 256], strides = [1, 1]} : vector<4x256xf32> to vector<1x256xf32>
    %33 = vector.shape_cast %32 : vector<1x256xf32> to vector<256xf32>
    %34 = vector.shape_cast %33 : vector<256xf32> to vector<1x256xf32>
    %35 = vector.broadcast %34 : vector<1x256xf32> to vector<16x256xf32>
    %36 = arith.mulf %31, %35 : vector<16x256xf32>
    %37 = arith.addf %28, %36 : vector<16x256xf32>
    %c0_13 = arith.constant 0 : index
    %c3 = arith.constant 3 : index
    %c0_14 = arith.constant 0 : index
    %c0_15 = arith.constant 0 : index
    %38 = vector.load %arg2[%c0_13, %c3, %c0_14, %c0_15] : memref<1x4x256x16xf32, #tpu.memory_space<vmem>>, vector<1x1x256x16xf32>
    %39 = vector.shape_cast %38 : vector<1x1x256x16xf32> to vector<256x16xf32>
    %40 = tpu.transpose %39, [1, 0] : vector<256x16xf32> -> vector<16x256xf32>
    %41 = vector.extract_strided_slice %11 {offsets = [3, 0], sizes = [1, 256], strides = [1, 1]} : vector<4x256xf32> to vector<1x256xf32>
    %42 = vector.shape_cast %41 : vector<1x256xf32> to vector<256xf32>
    %43 = vector.shape_cast %42 : vector<256xf32> to vector<1x256xf32>
    %44 = vector.broadcast %43 : vector<1x256xf32> to vector<16x256xf32>
    %45 = arith.mulf %40, %44 : vector<16x256xf32>
    %46 = arith.addf %37, %45 : vector<16x256xf32>
    %cst_16 = arith.constant 1.000000e+00 : f32
    %47 = vector.broadcast %cst_16 : f32 to vector<16x256xf32>
    %48 = arith.mulf %46, %47 : vector<16x256xf32>
    %c0_17 = arith.constant 0 : index
    %c0_18 = arith.constant 0 : index
    %c0_19 = arith.constant 0 : index
    %49 = vector.load %arg4[%c0_17, %c0_18, %c0_19] : memref<1x16x256xf32, #tpu.memory_space<vmem>>, vector<1x16x256xf32>
    %50 = vector.shape_cast %49 : vector<1x16x256xf32> to vector<16x256xf32>
    %51 = arith.addf %48, %50 : vector<16x256xf32>
    %c0_20 = arith.constant 0 : index
    %c0_21 = arith.constant 0 : index
    %c0_22 = arith.constant 0 : index
    %52 = vector.load %arg5[%c0_20, %c0_21, %c0_22] : memref<1x16x256xf32, #tpu.memory_space<vmem>>, vector<1x16x256xf32>
    %53 = vector.shape_cast %52 : vector<1x16x256xf32> to vector<16x256xf32>
    %54 = vector.shape_cast %51 : vector<16x256xf32> to vector<1x16x256xf32>
    tpu.vector_store %arg5[%c0_20, %c0_21, %c0_22], %54 {strides = array<i32>} : memref<1x16x256xf32, #tpu.memory_space<vmem>>, vector<1x16x256xf32>,
    return
  }
  func.func @transform_0(%arg0: i32, %arg1: i32) -> (i32, i32, i32, i32) {
    %c0_i32 = arith.constant 0 : i32
    %c0_i32_0 = arith.constant 0 : i32
    %c0_i32_1 = arith.constant 0 : i32
    return %arg0, %c0_i32, %arg1, %c0_i32_0 : i32, i32, i32, i32
  }
  func.func @transform_1(%arg0: i32, %arg1: i32) -> (i32, i32, i32) {
    %c0_i32 = arith.constant 0 : i32
    %c0_i32_0 = arith.constant 0 : i32
    return %arg0, %c0_i32, %arg1 : i32, i32, i32
  }
  func.func @transform_2(%arg0: i32, %arg1: i32) -> (i32, i32, i32) {
    %c0_i32 = arith.constant 0 : i32
    %c0_i32_0 = arith.constant 0 : i32
    return %arg0, %c0_i32, %arg1 : i32, i32, i32
  }
  func.func @transform_3(%arg0: i32, %arg1: i32) -> (i32, i32, i32) {
    %c0_i32 = arith.constant 0 : i32
    %c0_i32_0 = arith.constant 0 : i32
    return %arg0, %c0_i32, %arg1 : i32, i32, i32
  }
}

</mosaic_0001>

<llo_original>
// kernel: gla_forward.3
$region0: #{gla_forward.3}
  #allocation0 [shape = 'u32[]', space=smem, size = 0x4, offset = 0x4, fixed_abs, tag = 'smem constant byte address 0x4 - core index']
  #allocation1 [shape = 'u32[144,128]{1,0:T(1,128)}', space=vmem, size = 0x12000, scoped, tag = 'internal scratch']
  #allocation2 [shape = 'f32[512,128]{1,0:T(8,128)}', space=vmem, size = 0x40000, scoped, tag = 'scratch operand']
  %s0 = inlined_call_operand.vmem [shape: bf16[512,256], index: 0, kind: input, shape index: {}]
  %s1 = inlined_call_operand.vmem [shape: bf16[256,128], index: 1, kind: input, shape index: {}]
  %s2 = inlined_call_operand.vmem [shape: bf16[512,128], index: 2, kind: output, shape index: {}]
  %s3 = sld [smem:[#allocation0]]
  $region26: #{gla_forward.3} parent=0
    _
  %s5 = ssub.s32 1, %s3
  %s6 = scalar_select 0, %s5, %s3
  // Predicated region
  $region2: #{gla_forward.3} parent=0 // pred_check
    _
  $region3: #{gla_forward.3} parent=0 // pred_check_branch
    %8 = sbr.rel (0) target = $region5
  $region4: #{gla_forward.3} parent=0 // pred_region
    _
  $region5: #{gla_forward.3} parent=0 // pred_fallthru
    _
  // Predicated region
  $region6: #{gla_forward.3} parent=0 // pred_check
    _
  $region7: #{gla_forward.3} parent=0 // pred_check_branch
    %10 = sbr.rel (0) target = $region9
  $region8: #{gla_forward.3} parent=0 // pred_region
    _
  $region9: #{gla_forward.3} parent=0 // pred_fallthru
    _
  %p12 = scmp.eq.s32.totalorder 0, 0
  // Predicated region
  $region10: #{gla_forward.3} parent=0 // pred_check
    %p13 = pneg %p12
  $region11: #{gla_forward.3} parent=0 // pred_check_branch
    %15 = sbr.rel (%p13) target = $region13
  $region12: #{gla_forward.3} parent=0 // pred_region
    %16 = vst [vmem:[#allocation2] sm:$0xff] 0.0
    %17 = vst [vmem:[#allocation2 + $0x8] sm:$0xff] 0.0
    %18 = vst [vmem:[#allocation2 + $0x10] sm:$0xff] 0.0
    %19 = vst [vmem:[#allocation2 + $0x18] sm:$0xff] 0.0
    %20 = vst [vmem:[#allocation2 + $0x20] sm:$0xff] 0.0
    %21 = vst [vmem:[#allocation2 + $0x28] sm:$0xff] 0.0
    %22 = vst [vmem:[#allocation2 + $0x30] sm:$0xff] 0.0
    %23 = vst [vmem:[#allocation2 + $0x38] sm:$0xff] 0.0
    %24 = vst [vmem:[#allocation2 + $0x40] sm:$0xff] 0.0
    %25 = vst [vmem:[#allocation2 + $0x48] sm:$0xff] 0.0
    %26 = vst [vmem:[#allocation2 + $0x50] sm:$0xff] 0.0
    %27 = vst [vmem:[#allocation2 + $0x58] sm:$0xff] 0.0
    %28 = vst [vmem:[#allocation2 + $0x60] sm:$0xff] 0.0
    %29 = vst [vmem:[#allocation2 + $0x68] sm:$0xff] 0.0
    %30 = vst [vmem:[#allocation2 + $0x70] sm:$0xff] 0.0
    %31 = vst [vmem:[#allocation2 + $0x78] sm:$0xff] 0.0
    %32 = vst [vmem:[#allocation2 + $0x80] sm:$0xff] 0.0
    %33 = vst [vmem:[#allocation2 + $0x88] sm:$0xff] 0.0
    %34 = vst [vmem:[#allocation2 + $0x90] sm:$0xff] 0.0
    %35 = vst [vmem:[#allocation2 + $0x98] sm:$0xff] 0.0
    %36 = vst [vmem:[#allocation2 + $0xa0] sm:$0xff] 0.0
    %37 = vst [vmem:[#allocation2 + $0xa8] sm:$0xff] 0.0
    %38 = vst [vmem:[#allocation2 + $0xb0] sm:$0xff] 0.0
    %39 = vst [vmem:[#allocation2 + $0xb8] sm:$0xff] 0.0
    %40 = vst [vmem:[#allocation2 + $0xc0] sm:$0xff] 0.0
    %41 = vst [vmem:[#allocation2 + $0xc8] sm:$0xff] 0.0
    %42 = vst [vmem:[#allocation2 + $0xd0] sm:$0xff] 0.0
    %43 = vst [vmem:[#allocation2 + $0xd8] sm:$0xff] 0.0
    %44 = vst [vmem:[#allocation2 + $0xe0] sm:$0xff] 0.0
    %45 = vst [vmem:[#allocation2 + $0xe8] sm:$0xff] 0.0
    %46 = vst [vmem:[#allocation2 + $0xf0] sm:$0xff] 0.0
    %47 = vst [vmem:[#allocation2 + $0xf8] sm:$0xff] 0.0
    %48 = vst [vmem:[#allocation2 + $0x100] sm:$0xff] 0.0
    %49 = vst [vmem:[#allocation2 + $0x108] sm:$0xff] 0.0
    %50 = vst [vmem:[#allocation2 + $0x110] sm:$0xff] 0.0
    %51 = vst [vmem:[#allocation2 + $0x118] sm:$0xff] 0.0
    %52 = vst [vmem:[#allocation2 + $0x120] sm:$0xff] 0.0
    %53 = vst [vmem:[#allocation2 + $0x128] sm:$0xff] 0.0
    %54 = vst [vmem:[#allocation2 + $0x130] sm:$0xff] 0.0
    %55 = vst [vmem:[#allocation2 + $0x138] sm:$0xff] 0.0
    %56 = vst [vmem:[#allocation2 + $0x140] sm:$0xff] 0.0
    %57 = vst [vmem:[#allocation2 + $0x148] sm:$0xff] 0.0
    %58 = vst [vmem:[#allocation2 + $0x150] sm:$0xff] 0.0
    %59 = vst [vmem:[#allocation2 + $0x158] sm:$0xff] 0.0
    %60 = vst [vmem:[#allocation2 + $0x160] sm:$0xff] 0.0
    %61 = vst [vmem:[#allocation2 + $0x168] sm:$0xff] 0.0
    %62 = vst [vmem:[#allocation2 + $0x170] sm:$0xff] 0.0
    %63 = vst [vmem:[#allocation2 + $0x178] sm:$0xff] 0.0
    %64 = vst [vmem:[#allocation2 + $0x180] sm:$0xff] 0.0
    %65 = vst [vmem:[#allocation2 + $0x188] sm:$0xff] 0.0
    %66 = vst [vmem:[#allocation2 + $0x190] sm:$0xff] 0.0
    %67 = vst [vmem:[#allocation2 + $0x198] sm:$0xff] 0.0
    %68 = vst [vmem:[#allocation2 + $0x1a0] sm:$0xff] 0.0
    %69 = vst [vmem:[#allocation2 + $0x1a8] sm:$0xff] 0.0
    %70 = vst [vmem:[#allocation2 + $0x1b0] sm:$0xff] 0.0
    %71 = vst [vmem:[#allocation2 + $0x1b8] sm:$0xff] 0.0
    %72 = vst [vmem:[#allocation2 + $0x1c0] sm:$0xff] 0.0
    %73 = vst [vmem:[#allocation2 + $0x1c8] sm:$0xff] 0.0
    %74 = vst [vmem:[#allocation2 + $0x1d0] sm:$0xff] 0.0
    %75 = vst [vmem:[#allocation2 + $0x1d8] sm:$0xff] 0.0
    %76 = vst [vmem:[#allocation2 + $0x1e0] sm:$0xff] 0.0
    %77 = vst [vmem:[#allocation2 + $0x1e8] sm:$0xff] 0.0
    %78 = vst [vmem:[#allocation2 + $0x1f0] sm:$0xff] 0.0
    %79 = vst [vmem:[#allocation2 + $0x1f8] sm:$0xff] 0.0
  $region13: #{gla_forward.3} parent=0 // pred_fallthru
    _
  %v80 = vld [vmem:[#allocation2] sm:$0xff]
  %v81 = vld [vmem:[#allocation2 + $0x8] sm:$0xff]
  %v82 = vld [vmem:[#allocation2 + $0x10] sm:$0xff]
  %v83 = vld [vmem:[#allocation2 + $0x18] sm:$0xff]
  %v84 = vld [vmem:[#allocation2 + $0x20] sm:$0xff]
  %v85 = vld [vmem:[#allocation2 + $0x28] sm:$0xff]
  %v86 = vld [vmem:[#allocation2 + $0x30] sm:$0xff]
  %v87 = vld [vmem:[#allocation2 + $0x38] sm:$0xff]
  %v88 = vld [vmem:[#allocation2 + $0x40] sm:$0xff]
  %v89 = vld [vmem:[#allocation2 + $0x48] sm:$0xff]
  %v90 = vld [vmem:[#allocation2 + $0x50] sm:$0xff]
  %v91 = vld [vmem:[#allocation2 + $0x58] sm:$0xff]
  %v92 = vld [vmem:[#allocation2 + $0x60] sm:$0xff]
  %v93 = vld [vmem:[#allocation2 + $0x68] sm:$0xff]
  %v94 = vld [vmem:[#allocation2 + $0x70] sm:$0xff]
  %v95 = vld [vmem:[#allocation2 + $0x78] sm:$0xff]
  %v96 = vld [vmem:[#allocation2 + $0x80] sm:$0xff]
  %v97 = vld [vmem:[#allocation2 + $0x88] sm:$0xff]
  %v98 = vld [vmem:[#allocation2 + $0x90] sm:$0xff]
  %v99 = vld [vmem:[#allocation2 + $0x98] sm:$0xff]
  %v100 = vld [vmem:[#allocation2 + $0xa0] sm:$0xff]
  %v101 = vld [vmem:[#allocation2 + $0xa8] sm:$0xff]
  %v102 = vld [vmem:[#allocation2 + $0xb0] sm:$0xff]
  %v103 = vld [vmem:[#allocation2 + $0xb8] sm:$0xff]
  %v104 = vld [vmem:[#allocation2 + $0xc0] sm:$0xff]
  %v105 = vld [vmem:[#allocation2 + $0xc8] sm:$0xff]
  %v106 = vld [vmem:[#allocation2 + $0xd0] sm:$0xff]
  %v107 = vld [vmem:[#allocation2 + $0xd8] sm:$0xff]
  %v108 = vld [vmem:[#allocation2 + $0xe0] sm:$0xff]
  %v109 = vld [vmem:[#allocation2 + $0xe8] sm:$0xff]
  %v110 = vld [vmem:[#allocation2 + $0xf0] sm:$0xff]
  %v111 = vld [vmem:[#allocation2 + $0xf8] sm:$0xff]
  %v112 = vld [vmem:[#allocation2 + $0x100] sm:$0xff]
  %v113 = vld [vmem:[#allocation2 + $0x108] sm:$0xff]
  %v114 = vld [vmem:[#allocation2 + $0x110] sm:$0xff]
  %v115 = vld [vmem:[#allocation2 + $0x118] sm:$0xff]
  %v116 = vld [vmem:[#allocation2 + $0x120] sm:$0xff]
  %v117 = vld [vmem:[#allocation2 + $0x128] sm:$0xff]
  %v118 = vld [vmem:[#allocation2 + $0x130] sm:$0xff]
  %v119 = vld [vmem:[#allocation2 + $0x138] sm:$0xff]
  %v120 = vld [vmem:[#allocation2 + $0x140] sm:$0xff]
  %v121 = vld [vmem:[#allocation2 + $0x148] sm:$0xff]
  %v122 = vld [vmem:[#allocation2 + $0x150] sm:$0xff]
  %v123 = vld [vmem:[#allocation2 + $0x158] sm:$0xff]
  %v124 = vld [vmem:[#allocation2 + $0x160] sm:$0xff]
  %v125 = vld [vmem:[#allocation2 + $0x168] sm:$0xff]
  %v126 = vld [vmem:[#allocation2 + $0x170] sm:$0xff]
  %v127 = vld [vmem:[#allocation2 + $0x178] sm:$0xff]
  %v128 = vld [vmem:[#allocation2 + $0x180] sm:$0xff]
  %v129 = vld [vmem:[#allocation2 + $0x188] sm:$0xff]
  %v130 = vld [vmem:[#allocation2 + $0x190] sm:$0xff]
  %v131 = vld [vmem:[#allocation2 + $0x198] sm:$0xff]
  %v132 = vld [vmem:[#allocation2 + $0x1a0] sm:$0xff]
  %v133 = vld [vmem:[#allocation2 + $0x1a8] sm:$0xff]
  %v134 = vld [vmem:[#allocation2 + $0x1b0] sm:$0xff]
  %v135 = vld [vmem:[#allocation2 + $0x1b8] sm:$0xff]
  %v136 = vld [vmem:[#allocation2 + $0x1c0] sm:$0xff]
  %v137 = vld [vmem:[#allocation2 + $0x1c8] sm:$0xff]
  %v138 = vld [vmem:[#allocation2 + $0x1d0] sm:$0xff]
  %v139 = vld [vmem:[#allocation2 + $0x1d8] sm:$0xff]
  %v140 = vld [vmem:[#allocation2 + $0x1e0] sm:$0xff]
  %v141 = vld [vmem:[#allocation2 + $0x1e8] sm:$0xff]
  %v142 = vld [vmem:[#allocation2 + $0x1f0] sm:$0xff]
  %v143 = vld [vmem:[#allocation2 + $0x1f8] sm:$0xff]
  %v144 = vld [vmem:[%s0] sm:$0xff]
  %v145 = vld [vmem:[%s0 + $0x8] sm:$0xff]
  %v146 = vld [vmem:[%s0 + $0x10] sm:$0xff]
  %v147 = vld [vmem:[%s0 + $0x18] sm:$0xff]
  %v148 = vld [vmem:[%s0 + $0x20] sm:$0xff]
  %v149 = vld [vmem:[%s0 + $0x28] sm:$0xff]
  %v150 = vld [vmem:[%s0 + $0x30] sm:$0xff]
  %v151 = vld [vmem:[%s0 + $0x38] sm:$0xff]
  %v152 = vld [vmem:[%s0 + $0x40] sm:$0xff]
  %v153 = vld [vmem:[%s0 + $0x48] sm:$0xff]
  %v154 = vld [vmem:[%s0 + $0x50] sm:$0xff]
  %v155 = vld [vmem:[%s0 + $0x58] sm:$0xff]
  %v156 = vld [vmem:[%s0 + $0x60] sm:$0xff]
  %v157 = vld [vmem:[%s0 + $0x68] sm:$0xff]
  %v158 = vld [vmem:[%s0 + $0x70] sm:$0xff]
  %v159 = vld [vmem:[%s0 + $0x78] sm:$0xff]
  %v160 = vld [vmem:[%s0 + $0x80] sm:$0xff]
  %v161 = vld [vmem:[%s0 + $0x88] sm:$0xff]
  %v162 = vld [vmem:[%s0 + $0x90] sm:$0xff]
  %v163 = vld [vmem:[%s0 + $0x98] sm:$0xff]
  %v164 = vld [vmem:[%s0 + $0xa0] sm:$0xff]
  %v165 = vld [vmem:[%s0 + $0xa8] sm:$0xff]
  %v166 = vld [vmem:[%s0 + $0xb0] sm:$0xff]
  %v167 = vld [vmem:[%s0 + $0xb8] sm:$0xff]
  %v168 = vld [vmem:[%s0 + $0xc0] sm:$0xff]
  %v169 = vld [vmem:[%s0 + $0xc8] sm:$0xff]
  %v170 = vld [vmem:[%s0 + $0xd0] sm:$0xff]
  %v171 = vld [vmem:[%s0 + $0xd8] sm:$0xff]
  %v172 = vld [vmem:[%s0 + $0xe0] sm:$0xff]
  %v173 = vld [vmem:[%s0 + $0xe8] sm:$0xff]
  %v174 = vld [vmem:[%s0 + $0xf0] sm:$0xff]
  %v175 = vld [vmem:[%s0 + $0xf8] sm:$0xff]
  %v176 = vld [vmem:[%s0 + $0x100] sm:$0xff]
  %v177 = vld [vmem:[%s0 + $0x108] sm:$0xff]
  %v178 = vld [vmem:[%s0 + $0x110] sm:$0xff]
  %v179 = vld [vmem:[%s0 + $0x118] sm:$0xff]
  %v180 = vld [vmem:[%s0 + $0x120] sm:$0xff]
  %v181 = vld [vmem:[%s0 + $0x128] sm:$0xff]
  %v182 = vld [vmem:[%s0 + $0x130] sm:$0xff]
  %v183 = vld [vmem:[%s0 + $0x138] sm:$0xff]
  %v184 = vld [vmem:[%s0 + $0x140] sm:$0xff]
  %v185 = vld [vmem:[%s0 + $0x148] sm:$0xff]
  %v186 = vld [vmem:[%s0 + $0x150] sm:$0xff]
  %v187 = vld [vmem:[%s0 + $0x158] sm:$0xff]
  %v188 = vld [vmem:[%s0 + $0x160] sm:$0xff]
  %v189 = vld [vmem:[%s0 + $0x168] sm:$0xff]
  %v190 = vld [vmem:[%s0 + $0x170] sm:$0xff]
  %v191 = vld [vmem:[%s0 + $0x178] sm:$0xff]
  %v192 = vld [vmem:[%s0 + $0x180] sm:$0xff]
  %v193 = vld [vmem:[%s0 + $0x188] sm:$0xff]
  %v194 = vld [vmem:[%s0 + $0x190] sm:$0xff]
  %v195 = vld [vmem:[%s0 + $0x198] sm:$0xff]
  %v196 = vld [vmem:[%s0 + $0x1a0] sm:$0xff]
  %v197 = vld [vmem:[%s0 + $0x1a8] sm:$0xff]
  %v198 = vld [vmem:[%s0 + $0x1b0] sm:$0xff]
  %v199 = vld [vmem:[%s0 + $0x1b8] sm:$0xff]
  %v200 = vld [vmem:[%s0 + $0x1c0] sm:$0xff]
  %v201 = vld [vmem:[%s0 + $0x1c8] sm:$0xff]
  %v202 = vld [vmem:[%s0 + $0x1d0] sm:$0xff]
  %v203 = vld [vmem:[%s0 + $0x1d8] sm:$0xff]
  %v204 = vld [vmem:[%s0 + $0x1e0] sm:$0xff]
  %v205 = vld [vmem:[%s0 + $0x1e8] sm:$0xff]
  %v206 = vld [vmem:[%s0 + $0x1f0] sm:$0xff]
  %v207 = vld [vmem:[%s0 + $0x1f8] sm:$0xff]
  %v208 = vld [vmem:[%s1] sm:$0xf]
  %v209 = vld [vmem:[%s1 + $0x4] sm:$0xf]
  %v210 = vld [vmem:[%s1 + $0x8] sm:$0xf]
  %v211 = vld [vmem:[%s1 + $0xc] sm:$0xf]
  %v212 = vld [vmem:[%s1 + $0x10] sm:$0xf]
  %v213 = vld [vmem:[%s1 + $0x14] sm:$0xf]
  %v214 = vld [vmem:[%s1 + $0x18] sm:$0xf]
  %v215 = vld [vmem:[%s1 + $0x1c] sm:$0xf]
  %v216 = vld [vmem:[%s1 + $0x20] sm:$0xf]
  %v217 = vld [vmem:[%s1 + $0x24] sm:$0xf]
  %v218 = vld [vmem:[%s1 + $0x28] sm:$0xf]
  %v219 = vld [vmem:[%s1 + $0x2c] sm:$0xf]
  %v220 = vld [vmem:[%s1 + $0x30] sm:$0xf]
  %v221 = vld [vmem:[%s1 + $0x34] sm:$0xf]
  %v222 = vld [vmem:[%s1 + $0x38] sm:$0xf]
  %v223 = vld [vmem:[%s1 + $0x3c] sm:$0xf]
  %v224 = vld [vmem:[%s1 + $0x40] sm:$0xf]
  %v225 = vld [vmem:[%s1 + $0x44] sm:$0xf]
  %v226 = vld [vmem:[%s1 + $0x48] sm:$0xf]
  %v227 = vld [vmem:[%s1 + $0x4c] sm:$0xf]
  %v228 = vld [vmem:[%s1 + $0x50] sm:$0xf]
  %v229 = vld [vmem:[%s1 + $0x54] sm:$0xf]
  %v230 = vld [vmem:[%s1 + $0x58] sm:$0xf]
  %v231 = vld [vmem:[%s1 + $0x5c] sm:$0xf]
  %v232 = vld [vmem:[%s1 + $0x60] sm:$0xf]
  %v233 = vld [vmem:[%s1 + $0x64] sm:$0xf]
  %v234 = vld [vmem:[%s1 + $0x68] sm:$0xf]
  %v235 = vld [vmem:[%s1 + $0x6c] sm:$0xf]
  %v236 = vld [vmem:[%s1 + $0x70] sm:$0xf]
  %v237 = vld [vmem:[%s1 + $0x74] sm:$0xf]
  %v238 = vld [vmem:[%s1 + $0x78] sm:$0xf]
  %v239 = vld [vmem:[%s1 + $0x7c] sm:$0xf]
  %v304 = vunpack.c.l.b16 %v144
  %v305 = vunpack.c.h.b16 %v144
  %v306 = vunpack.c.l.b16 %v145
  %v307 = vunpack.c.h.b16 %v145
  %v308 = vunpack.c.l.b16 %v146
  %v309 = vunpack.c.h.b16 %v146
  %v310 = vunpack.c.l.b16 %v147
  %v311 = vunpack.c.h.b16 %v147
  %v312 = vunpack.c.l.b16 %v148
  %v313 = vunpack.c.h.b16 %v148
  %v314 = vunpack.c.l.b16 %v149
  %v315 = vunpack.c.h.b16 %v149
  %v316 = vunpack.c.l.b16 %v150
  %v317 = vunpack.c.h.b16 %v150
  %v318 = vunpack.c.l.b16 %v151
  %v319 = vunpack.c.h.b16 %v151
  %v320 = vunpack.c.l.b16 %v152
  %v321 = vunpack.c.h.b16 %v152
  %v322 = vunpack.c.l.b16 %v153
  %v323 = vunpack.c.h.b16 %v153
  %v324 = vunpack.c.l.b16 %v154
  %v325 = vunpack.c.h.b16 %v154
  %v326 = vunpack.c.l.b16 %v155
  %v327 = vunpack.c.h.b16 %v155
  %v328 = vunpack.c.l.b16 %v156
  %v329 = vunpack.c.h.b16 %v156
  %v330 = vunpack.c.l.b16 %v157
  %v331 = vunpack.c.h.b16 %v157
  %v332 = vunpack.c.l.b16 %v158
  %v333 = vunpack.c.h.b16 %v158
  %v334 = vunpack.c.l.b16 %v159
  %v335 = vunpack.c.h.b16 %v159
  %v336 = vunpack.c.l.b16 %v160
  %v337 = vunpack.c.h.b16 %v160
  %v338 = vunpack.c.l.b16 %v161
  %v339 = vunpack.c.h.b16 %v161
  %v340 = vunpack.c.l.b16 %v162
  %v341 = vunpack.c.h.b16 %v162
  %v342 = vunpack.c.l.b16 %v163
  %v343 = vunpack.c.h.b16 %v163
  %v344 = vunpack.c.l.b16 %v164
  %v345 = vunpack.c.h.b16 %v164
  %v346 = vunpack.c.l.b16 %v165
  %v347 = vunpack.c.h.b16 %v165
  %v348 = vunpack.c.l.b16 %v166
  %v349 = vunpack.c.h.b16 %v166
  %v350 = vunpack.c.l.b16 %v167
  %v351 = vunpack.c.h.b16 %v167
  %v352 = vunpack.c.l.b16 %v168
  %v353 = vunpack.c.h.b16 %v168
  %v354 = vunpack.c.l.b16 %v169
  %v355 = vunpack.c.h.b16 %v169
  %v356 = vunpack.c.l.b16 %v170
  %v357 = vunpack.c.h.b16 %v170
  %v358 = vunpack.c.l.b16 %v171
  %v359 = vunpack.c.h.b16 %v171
  %v360 = vunpack.c.l.b16 %v172
  %v361 = vunpack.c.h.b16 %v172
  %v362 = vunpack.c.l.b16 %v173
  %v363 = vunpack.c.h.b16 %v173
  %v364 = vunpack.c.l.b16 %v174
  %v365 = vunpack.c.h.b16 %v174
  %v366 = vunpack.c.l.b16 %v175
  %v367 = vunpack.c.h.b16 %v175
  %v368 = vunpack.c.l.b16 %v176
  %v369 = vunpack.c.h.b16 %v176
  %v370 = vunpack.c.l.b16 %v177
  %v371 = vunpack.c.h.b16 %v177
  %v372 = vunpack.c.l.b16 %v178
  %v373 = vunpack.c.h.b16 %v178
  %v374 = vunpack.c.l.b16 %v179
  %v375 = vunpack.c.h.b16 %v179
  %v376 = vunpack.c.l.b16 %v180
  %v377 = vunpack.c.h.b16 %v180
  %v378 = vunpack.c.l.b16 %v181
  %v379 = vunpack.c.h.b16 %v181
  %v380 = vunpack.c.l.b16 %v182
  %v381 = vunpack.c.h.b16 %v182
  %v382 = vunpack.c.l.b16 %v183
  %v383 = vunpack.c.h.b16 %v183
  %v384 = vunpack.c.l.b16 %v184
  %v385 = vunpack.c.h.b16 %v184
  %v386 = vunpack.c.l.b16 %v185
  %v387 = vunpack.c.h.b16 %v185
  %v388 = vunpack.c.l.b16 %v186
  %v389 = vunpack.c.h.b16 %v186
  %v390 = vunpack.c.l.b16 %v187
  %v391 = vunpack.c.h.b16 %v187
  %v392 = vunpack.c.l.b16 %v188
  %v393 = vunpack.c.h.b16 %v188
  %v394 = vunpack.c.l.b16 %v189
  %v395 = vunpack.c.h.b16 %v189
  %v396 = vunpack.c.l.b16 %v190
  %v397 = vunpack.c.h.b16 %v190
  %v398 = vunpack.c.l.b16 %v191
  %v399 = vunpack.c.h.b16 %v191
  %v400 = vunpack.c.l.b16 %v192
  %v401 = vunpack.c.h.b16 %v192
  %v402 = vunpack.c.l.b16 %v193
  %v403 = vunpack.c.h.b16 %v193
  %v404 = vunpack.c.l.b16 %v194
  %v405 = vunpack.c.h.b16 %v194
  %v406 = vunpack.c.l.b16 %v195
  %v407 = vunpack.c.h.b16 %v195
  %v408 = vunpack.c.l.b16 %v196
  %v409 = vunpack.c.h.b16 %v196
  %v410 = vunpack.c.l.b16 %v197
  %v411 = vunpack.c.h.b16 %v197
  %v412 = vunpack.c.l.b16 %v198
  %v413 = vunpack.c.h.b16 %v198
  %v414 = vunpack.c.l.b16 %v199
  %v415 = vunpack.c.h.b16 %v199
  %v416 = vunpack.c.l.b16 %v200
  %v417 = vunpack.c.h.b16 %v200
  %v418 = vunpack.c.l.b16 %v201
  %v419 = vunpack.c.h.b16 %v201
  %v420 = vunpack.c.l.b16 %v202
  %v421 = vunpack.c.h.b16 %v202
  %v422 = vunpack.c.l.b16 %v203
  %v423 = vunpack.c.h.b16 %v203
  %v424 = vunpack.c.l.b16 %v204
  %v425 = vunpack.c.h.b16 %v204
  %v426 = vunpack.c.l.b16 %v205
  %v427 = vunpack.c.h.b16 %v205
  %v428 = vunpack.c.l.b16 %v206
  %v429 = vunpack.c.h.b16 %v206
  %v430 = vunpack.c.l.b16 %v207
  %v431 = vunpack.c.h.b16 %v207
  %v432 = vpack.c.b16 %v306, %v304
  %v433 = vpack.c.b16 %v307, %v305
  %v434 = vpack.c.b16 %v310, %v308
  %v435 = vpack.c.b16 %v311, %v309
  %v436 = vpack.c.b16 %v314, %v312
  %v437 = vpack.c.b16 %v315, %v313
  %v438 = vpack.c.b16 %v318, %v316
  %v439 = vpack.c.b16 %v319, %v317
  %v440 = vpack.c.b16 %v322, %v320
  %v441 = vpack.c.b16 %v323, %v321
  %v442 = vpack.c.b16 %v326, %v324
  %v443 = vpack.c.b16 %v327, %v325
  %v444 = vpack.c.b16 %v330, %v328
  %v445 = vpack.c.b16 %v331, %v329
  %v446 = vpack.c.b16 %v334, %v332
  %v447 = vpack.c.b16 %v335, %v333
  %v448 = vpack.c.b16 %v338, %v336
  %v449 = vpack.c.b16 %v339, %v337
  %v450 = vpack.c.b16 %v342, %v340
  %v451 = vpack.c.b16 %v343, %v341
  %v452 = vpack.c.b16 %v346, %v344
  %v453 = vpack.c.b16 %v347, %v345
  %v454 = vpack.c.b16 %v350, %v348
  %v455 = vpack.c.b16 %v351, %v349
  %v456 = vpack.c.b16 %v354, %v352
  %v457 = vpack.c.b16 %v355, %v353
  %v458 = vpack.c.b16 %v358, %v356
  %v459 = vpack.c.b16 %v359, %v357
  %v460 = vpack.c.b16 %v362, %v360
  %v461 = vpack.c.b16 %v363, %v361
  %v462 = vpack.c.b16 %v366, %v364
  %v463 = vpack.c.b16 %v367, %v365
  %v464 = vpack.c.b16 %v370, %v368
  %v465 = vpack.c.b16 %v371, %v369
  %v466 = vpack.c.b16 %v374, %v372
  %v467 = vpack.c.b16 %v375, %v373
  %v468 = vpack.c.b16 %v378, %v376
  %v469 = vpack.c.b16 %v379, %v377
  %v470 = vpack.c.b16 %v382, %v380
  %v471 = vpack.c.b16 %v383, %v381
  %v472 = vpack.c.b16 %v386, %v384
  %v473 = vpack.c.b16 %v387, %v385
  %v474 = vpack.c.b16 %v390, %v388
  %v475 = vpack.c.b16 %v391, %v389
  %v476 = vpack.c.b16 %v394, %v392
  %v477 = vpack.c.b16 %v395, %v393
  %v478 = vpack.c.b16 %v398, %v396
  %v479 = vpack.c.b16 %v399, %v397
  %v480 = vpack.c.b16 %v402, %v400
  %v481 = vpack.c.b16 %v403, %v401
  %v482 = vpack.c.b16 %v406, %v404
  %v483 = vpack.c.b16 %v407, %v405
  %v484 = vpack.c.b16 %v410, %v408
  %v485 = vpack.c.b16 %v411, %v409
  %v486 = vpack.c.b16 %v414, %v412
  %v487 = vpack.c.b16 %v415, %v413
  %v488 = vpack.c.b16 %v418, %v416
  %v489 = vpack.c.b16 %v419, %v417
  %v490 = vpack.c.b16 %v422, %v420
  %v491 = vpack.c.b16 %v423, %v421
  %v492 = vpack.c.b16 %v426, %v424
  %v493 = vpack.c.b16 %v427, %v425
  %v494 = vpack.c.b16 %v430, %v428
  %v495 = vpack.c.b16 %v431, %v429
  %v592 = vunpack.c.l.b16 %v208
  %v593 = vunpack.c.l.b16 %v209
  %v594 = vunpack.c.l.b16 %v210
  %v595 = vunpack.c.l.b16 %v211
  %v596 = vunpack.c.l.b16 %v212
  %v597 = vunpack.c.l.b16 %v213
  %v598 = vunpack.c.l.b16 %v214
  %v599 = vunpack.c.l.b16 %v215
  %v600 = vunpack.c.l.b16 %v216
  %v601 = vunpack.c.l.b16 %v217
  %v602 = vunpack.c.l.b16 %v218
  %v603 = vunpack.c.l.b16 %v219
  %v604 = vunpack.c.l.b16 %v220
  %v605 = vunpack.c.l.b16 %v221
  %v606 = vunpack.c.l.b16 %v222
  %v607 = vunpack.c.l.b16 %v223
  %v608 = vunpack.c.l.b16 %v224
  %v609 = vunpack.c.l.b16 %v225
  %v610 = vunpack.c.l.b16 %v226
  %v611 = vunpack.c.l.b16 %v227
  %v612 = vunpack.c.l.b16 %v228
  %v613 = vunpack.c.l.b16 %v229
  %v614 = vunpack.c.l.b16 %v230
  %v615 = vunpack.c.l.b16 %v231
  %v616 = vunpack.c.l.b16 %v232
  %v617 = vunpack.c.l.b16 %v233
  %v618 = vunpack.c.l.b16 %v234
  %v619 = vunpack.c.l.b16 %v235
  %v620 = vunpack.c.l.b16 %v236
  %v621 = vunpack.c.l.b16 %v237
  %v622 = vunpack.c.l.b16 %v238
  %v623 = vunpack.c.l.b16 %v239
  %v624 = vpack.c.b16 %v593, %v592
  %v625 = vpack.c.b16 %v595, %v594
  %v626 = vpack.c.b16 %v597, %v596
  %v627 = vpack.c.b16 %v599, %v598
  %v628 = vpack.c.b16 %v601, %v600
  %v629 = vpack.c.b16 %v603, %v602
  %v630 = vpack.c.b16 %v605, %v604
  %v631 = vpack.c.b16 %v607, %v606
  %v632 = vpack.c.b16 %v609, %v608
  %v633 = vpack.c.b16 %v611, %v610
  %v634 = vpack.c.b16 %v613, %v612
  %v635 = vpack.c.b16 %v615, %v614
  %v636 = vpack.c.b16 %v617, %v616
  %v637 = vpack.c.b16 %v619, %v618
  %v638 = vpack.c.b16 %v621, %v620
  %v639 = vpack.c.b16 %v623, %v622
  %656 = vmatprep.subr.bf16.mxu0 0
  %657 = vmatpush1.bf16.msra.mxu0 %v631
  %658 = vmatprep.subr.bf16.mxu0 0
  %659 = vmatpush1.bf16.msra.mxu0 %v630
  %660 = vmatprep.subr.bf16.mxu0 0
  %661 = vmatpush1.bf16.msra.mxu0 %v629
  %662 = vmatprep.subr.bf16.mxu0 0
  %663 = vmatpush1.bf16.msra.mxu0 %v628
  %664 = vmatprep.subr.bf16.mxu0 0
  %665 = vmatpush1.bf16.msra.mxu0 %v627
  %666 = vmatprep.subr.bf16.mxu0 0
  %667 = vmatpush1.bf16.msra.mxu0 %v626
  %668 = vmatprep.subr.bf16.mxu0 0
  %669 = vmatpush1.bf16.msra.mxu0 %v625
  %670 = vmatprep.subr.bf16.mxu0 0
  %671 = vmatpush1.bf16.msra.mxu0 %v624
  %672 = vmatprep.subr.bf16.mxu0 0
  %673 = vmatpush2.bf16.msra.mxu0 %v639
  %674 = vmatprep.subr.bf16.mxu0 0
  %675 = vmatpush2.bf16.msra.mxu0 %v638
  %676 = vmatprep.subr.bf16.mxu0 0
  %677 = vmatpush2.bf16.msra.mxu0 %v637
  %678 = vmatprep.subr.bf16.mxu0 0
  %679 = vmatpush2.bf16.msra.mxu0 %v636
  %680 = vmatprep.subr.bf16.mxu0 0
  %681 = vmatpush2.bf16.msra.mxu0 %v635
  %682 = vmatprep.subr.bf16.mxu0 0
  %683 = vmatpush2.bf16.msra.mxu0 %v634
  %684 = vmatprep.subr.bf16.mxu0 0
  %685 = vmatpush2.bf16.msra.mxu0 %v633
  %686 = vmatprep.subr.bf16.mxu0 0
  %687 = vmatpush2.bf16.msra.mxu0 %v632
  %688 = vmatprep.mubr.bf16.mxu0 %v433
  %689 = vmatmul.mubr.bf16.gmra.mxu0 %v432
  %v690 = vpop.f32.mrf.mxu0
  %v691 = vadd.f32 0.0, %v690
  %v692 = vpop.f32.mrf.mxu0
  %v693 = vpop.f32.mrf.mxu0
  %v694 = vadd.f32 0.0, %v693
  %v695 = vpop.f32.mrf.mxu0
  %696 = vmatprep.mubr.bf16.mxu0 %v435
  %697 = vmatmul.mubr.bf16.gmra.mxu0 %v434
  %v698 = vpop.f32.mrf.mxu0
  %v699 = vadd.f32 0.0, %v698
  %v700 = vpop.f32.mrf.mxu0
  %v701 = vpop.f32.mrf.mxu0
  %v702 = vadd.f32 0.0, %v701
  %v703 = vpop.f32.mrf.mxu0
  %704 = vmatprep.mubr.bf16.mxu0 %v437
  %705 = vmatmul.mubr.bf16.gmra.mxu0 %v436
  %v706 = vpop.f32.mrf.mxu0
  %v707 = vadd.f32 0.0, %v706
  %v708 = vpop.f32.mrf.mxu0
  %v709 = vpop.f32.mrf.mxu0
  %v710 = vadd.f32 0.0, %v709
  %v711 = vpop.f32.mrf.mxu0
  %712 = vmatprep.mubr.bf16.mxu0 %v439
  %713 = vmatmul.mubr.bf16.gmra.mxu0 %v438
  %v714 = vpop.f32.mrf.mxu0
  %v715 = vadd.f32 0.0, %v714
  %v716 = vpop.f32.mrf.mxu0
  %v717 = vpop.f32.mrf.mxu0
  %v718 = vadd.f32 0.0, %v717
  %v719 = vpop.f32.mrf.mxu0
  %720 = vmatprep.mubr.bf16.mxu0 %v441
  %721 = vmatmul.mubr.bf16.gmra.mxu0 %v440
  %v722 = vpop.f32.mrf.mxu0
  %v723 = vadd.f32 0.0, %v722
  %v724 = vpop.f32.mrf.mxu0
  %v725 = vpop.f32.mrf.mxu0
  %v726 = vadd.f32 0.0, %v725
  %v727 = vpop.f32.mrf.mxu0
  %728 = vmatprep.mubr.bf16.mxu0 %v443
  %729 = vmatmul.mubr.bf16.gmra.mxu0 %v442
  %v730 = vpop.f32.mrf.mxu0
  %v731 = vadd.f32 0.0, %v730
  %v732 = vpop.f32.mrf.mxu0
  %v733 = vpop.f32.mrf.mxu0
  %v734 = vadd.f32 0.0, %v733
  %v735 = vpop.f32.mrf.mxu0
  %736 = vmatprep.mubr.bf16.mxu0 %v445
  %737 = vmatmul.mubr.bf16.gmra.mxu0 %v444
  %v738 = vpop.f32.mrf.mxu0
  %v739 = vadd.f32 0.0, %v738
  %v740 = vpop.f32.mrf.mxu0
  %v741 = vpop.f32.mrf.mxu0
  %v742 = vadd.f32 0.0, %v741
  %v743 = vpop.f32.mrf.mxu0
  %744 = vmatprep.mubr.bf16.mxu0 %v447
  %745 = vmatmul.mubr.bf16.gmra.mxu0 %v446
  %v746 = vpop.f32.mrf.mxu0
  %v747 = vadd.f32 0.0, %v746
  %v748 = vpop.f32.mrf.mxu0
  %v749 = vpop.f32.mrf.mxu0
  %v750 = vadd.f32 0.0, %v749
  %v751 = vpop.f32.mrf.mxu0
  %752 = vmatprep.mubr.bf16.mxu0 %v449
  %753 = vmatmul.mubr.bf16.gmra.mxu0 %v448
  %v754 = vpop.f32.mrf.mxu0
  %v755 = vadd.f32 0.0, %v754
  %v756 = vpop.f32.mrf.mxu0
  %v757 = vpop.f32.mrf.mxu0
  %v758 = vadd.f32 0.0, %v757
  %v759 = vpop.f32.mrf.mxu0
  %760 = vmatprep.mubr.bf16.mxu0 %v451
  %761 = vmatmul.mubr.bf16.gmra.mxu0 %v450
  %v762 = vpop.f32.mrf.mxu0
  %v763 = vadd.f32 0.0, %v762
  %v764 = vpop.f32.mrf.mxu0
  %v765 = vpop.f32.mrf.mxu0
  %v766 = vadd.f32 0.0, %v765
  %v767 = vpop.f32.mrf.mxu0
  %768 = vmatprep.mubr.bf16.mxu0 %v453
  %769 = vmatmul.mubr.bf16.gmra.mxu0 %v452
  %v770 = vpop.f32.mrf.mxu0
  %v771 = vadd.f32 0.0, %v770
  %v772 = vpop.f32.mrf.mxu0
  %v773 = vpop.f32.mrf.mxu0
  %v774 = vadd.f32 0.0, %v773
  %v775 = vpop.f32.mrf.mxu0
  %776 = vmatprep.mubr.bf16.mxu0 %v455
  %777 = vmatmul.mubr.bf16.gmra.mxu0 %v454
  %v778 = vpop.f32.mrf.mxu0
  %v779 = vadd.f32 0.0, %v778
  %v780 = vpop.f32.mrf.mxu0
  %v781 = vpop.f32.mrf.mxu0
  %v782 = vadd.f32 0.0, %v781
  %v783 = vpop.f32.mrf.mxu0
  %784 = vmatprep.mubr.bf16.mxu0 %v457
  %785 = vmatmul.mubr.bf16.gmra.mxu0 %v456
  %v786 = vpop.f32.mrf.mxu0
  %v787 = vadd.f32 0.0, %v786
  %v788 = vpop.f32.mrf.mxu0
  %v789 = vpop.f32.mrf.mxu0
  %v790 = vadd.f32 0.0, %v789
  %v791 = vpop.f32.mrf.mxu0
  %792 = vmatprep.mubr.bf16.mxu0 %v459
  %793 = vmatmul.mubr.bf16.gmra.mxu0 %v458
  %v794 = vpop.f32.mrf.mxu0
  %v795 = vadd.f32 0.0, %v794
  %v796 = vpop.f32.mrf.mxu0
  %v797 = vpop.f32.mrf.mxu0
  %v798 = vadd.f32 0.0, %v797
  %v799 = vpop.f32.mrf.mxu0
  %800 = vmatprep.mubr.bf16.mxu0 %v461
  %801 = vmatmul.mubr.bf16.gmra.mxu0 %v460
  %v802 = vpop.f32.mrf.mxu0
  %v803 = vadd.f32 0.0, %v802
  %v804 = vpop.f32.mrf.mxu0
  %v805 = vpop.f32.mrf.mxu0
  %v806 = vadd.f32 0.0, %v805
  %v807 = vpop.f32.mrf.mxu0
  %808 = vmatprep.mubr.bf16.mxu0 %v463
  %809 = vmatmul.mubr.bf16.gmra.mxu0 %v462
  %v810 = vpop.f32.mrf.mxu0
  %v811 = vadd.f32 0.0, %v810
  %v812 = vpop.f32.mrf.mxu0
  %v813 = vpop.f32.mrf.mxu0
  %v814 = vadd.f32 0.0, %v813
  %v815 = vpop.f32.mrf.mxu0
  %816 = vmatprep.mubr.bf16.mxu0 %v465
  %817 = vmatmul.mubr.bf16.gmra.mxu0 %v464
  %v818 = vpop.f32.mrf.mxu0
  %v819 = vadd.f32 0.0, %v818
  %v820 = vpop.f32.mrf.mxu0
  %v821 = vpop.f32.mrf.mxu0
  %v822 = vadd.f32 0.0, %v821
  %v823 = vpop.f32.mrf.mxu0
  %824 = vmatprep.mubr.bf16.mxu0 %v467
  %825 = vmatmul.mubr.bf16.gmra.mxu0 %v466
  %v826 = vpop.f32.mrf.mxu0
  %v827 = vadd.f32 0.0, %v826
  %v828 = vpop.f32.mrf.mxu0
  %v829 = vpop.f32.mrf.mxu0
  %v830 = vadd.f32 0.0, %v829
  %v831 = vpop.f32.mrf.mxu0
  %832 = vmatprep.mubr.bf16.mxu0 %v469
  %833 = vmatmul.mubr.bf16.gmra.mxu0 %v468
  %v834 = vpop.f32.mrf.mxu0
  %v835 = vadd.f32 0.0, %v834
  %v836 = vpop.f32.mrf.mxu0
  %v837 = vpop.f32.mrf.mxu0
  %v838 = vadd.f32 0.0, %v837
  %v839 = vpop.f32.mrf.mxu0
  %840 = vmatprep.mubr.bf16.mxu0 %v471
  %841 = vmatmul.mubr.bf16.gmra.mxu0 %v470
  %v842 = vpop.f32.mrf.mxu0
  %v843 = vadd.f32 0.0, %v842
  %v844 = vpop.f32.mrf.mxu0
  %v845 = vpop.f32.mrf.mxu0
  %v846 = vadd.f32 0.0, %v845
  %v847 = vpop.f32.mrf.mxu0
  %848 = vmatprep.mubr.bf16.mxu0 %v473
  %849 = vmatmul.mubr.bf16.gmra.mxu0 %v472
  %v850 = vpop.f32.mrf.mxu0
  %v851 = vadd.f32 0.0, %v850
  %v852 = vpop.f32.mrf.mxu0
  %v853 = vpop.f32.mrf.mxu0
  %v854 = vadd.f32 0.0, %v853
  %v855 = vpop.f32.mrf.mxu0
  %856 = vmatprep.mubr.bf16.mxu0 %v475
  %857 = vmatmul.mubr.bf16.gmra.mxu0 %v474
  %v858 = vpop.f32.mrf.mxu0
  %v859 = vadd.f32 0.0, %v858
  %v860 = vpop.f32.mrf.mxu0
  %v861 = vpop.f32.mrf.mxu0
  %v862 = vadd.f32 0.0, %v861
  %v863 = vpop.f32.mrf.mxu0
  %864 = vmatprep.mubr.bf16.mxu0 %v477
  %865 = vmatmul.mubr.bf16.gmra.mxu0 %v476
  %v866 = vpop.f32.mrf.mxu0
  %v867 = vadd.f32 0.0, %v866
  %v868 = vpop.f32.mrf.mxu0
  %v869 = vpop.f32.mrf.mxu0
  %v870 = vadd.f32 0.0, %v869
  %v871 = vpop.f32.mrf.mxu0
  %872 = vmatprep.mubr.bf16.mxu0 %v479
  %873 = vmatmul.mubr.bf16.gmra.mxu0 %v478
  %v874 = vpop.f32.mrf.mxu0
  %v875 = vadd.f32 0.0, %v874
  %v876 = vpop.f32.mrf.mxu0
  %v877 = vpop.f32.mrf.mxu0
  %v878 = vadd.f32 0.0, %v877
  %v879 = vpop.f32.mrf.mxu0
  %880 = vmatprep.mubr.bf16.mxu0 %v481
  %881 = vmatmul.mubr.bf16.gmra.mxu0 %v480
  %v882 = vpop.f32.mrf.mxu0
  %v883 = vadd.f32 0.0, %v882
  %v884 = vpop.f32.mrf.mxu0
  %v885 = vpop.f32.mrf.mxu0
  %v886 = vadd.f32 0.0, %v885
  %v887 = vpop.f32.mrf.mxu0
  %888 = vmatprep.mubr.bf16.mxu0 %v483
  %889 = vmatmul.mubr.bf16.gmra.mxu0 %v482
  %v890 = vpop.f32.mrf.mxu0
  %v891 = vadd.f32 0.0, %v890
  %v892 = vpop.f32.mrf.mxu0
  %v893 = vpop.f32.mrf.mxu0
  %v894 = vadd.f32 0.0, %v893
  %v895 = vpop.f32.mrf.mxu0
  %896 = vmatprep.mubr.bf16.mxu0 %v485
  %897 = vmatmul.mubr.bf16.gmra.mxu0 %v484
  %v898 = vpop.f32.mrf.mxu0
  %v899 = vadd.f32 0.0, %v898
  %v900 = vpop.f32.mrf.mxu0
  %v901 = vpop.f32.mrf.mxu0
  %v902 = vadd.f32 0.0, %v901
  %v903 = vpop.f32.mrf.mxu0
  %904 = vmatprep.mubr.bf16.mxu0 %v487
  %905 = vmatmul.mubr.bf16.gmra.mxu0 %v486
  %v906 = vpop.f32.mrf.mxu0
  %v907 = vadd.f32 0.0, %v906
  %v908 = vpop.f32.mrf.mxu0
  %v909 = vpop.f32.mrf.mxu0
  %v910 = vadd.f32 0.0, %v909
  %v911 = vpop.f32.mrf.mxu0
  %912 = vmatprep.mubr.bf16.mxu0 %v489
  %913 = vmatmul.mubr.bf16.gmra.mxu0 %v488
  %v914 = vpop.f32.mrf.mxu0
  %v915 = vadd.f32 0.0, %v914
  %v916 = vpop.f32.mrf.mxu0
  %v917 = vpop.f32.mrf.mxu0
  %v918 = vadd.f32 0.0, %v917
  %v919 = vpop.f32.mrf.mxu0
  %920 = vmatprep.mubr.bf16.mxu0 %v491
  %921 = vmatmul.mubr.bf16.gmra.mxu0 %v490
  %v922 = vpop.f32.mrf.mxu0
  %v923 = vadd.f32 0.0, %v922
  %v924 = vpop.f32.mrf.mxu0
  %v925 = vpop.f32.mrf.mxu0
  %v926 = vadd.f32 0.0, %v925
  %v927 = vpop.f32.mrf.mxu0
  %928 = vmatprep.mubr.bf16.mxu0 %v493
  %929 = vmatmul.mubr.bf16.gmra.mxu0 %v492
  %v930 = vpop.f32.mrf.mxu0
  %v931 = vadd.f32 0.0, %v930
  %v932 = vpop.f32.mrf.mxu0
  %v933 = vpop.f32.mrf.mxu0
  %v934 = vadd.f32 0.0, %v933
  %v935 = vpop.f32.mrf.mxu0
  %936 = vmatprep.mubr.bf16.mxu0 %v495
  %937 = vmatmul.mubr.bf16.gmra.mxu0 %v494
  %v938 = vpop.f32.mrf.mxu0
  %v939 = vadd.f32 0.0, %v938
  %v940 = vpop.f32.mrf.mxu0
  %v941 = vpop.f32.mrf.mxu0
  %v942 = vadd.f32 0.0, %v941
  %v943 = vpop.f32.mrf.mxu0
  %944 = vdwg.mxu0
  %v945 = vadd.f32 %v80, %v691
  %v946 = vadd.f32 %v81, %v694
  %v947 = vadd.f32 %v82, %v699
  %v948 = vadd.f32 %v83, %v702
  %v949 = vadd.f32 %v84, %v707
  %v950 = vadd.f32 %v85, %v710
  %v951 = vadd.f32 %v86, %v715
  %v952 = vadd.f32 %v87, %v718
  %v953 = vadd.f32 %v88, %v723
  %v954 = vadd.f32 %v89, %v726
  %v955 = vadd.f32 %v90, %v731
  %v956 = vadd.f32 %v91, %v734
  %v957 = vadd.f32 %v92, %v739
  %v958 = vadd.f32 %v93, %v742
  %v959 = vadd.f32 %v94, %v747
  %v960 = vadd.f32 %v95, %v750
  %v961 = vadd.f32 %v96, %v755
  %v962 = vadd.f32 %v97, %v758
  %v963 = vadd.f32 %v98, %v763
  %v964 = vadd.f32 %v99, %v766
  %v965 = vadd.f32 %v100, %v771
  %v966 = vadd.f32 %v101, %v774
  %v967 = vadd.f32 %v102, %v779
  %v968 = vadd.f32 %v103, %v782
  %v969 = vadd.f32 %v104, %v787
  %v970 = vadd.f32 %v105, %v790
  %v971 = vadd.f32 %v106, %v795
  %v972 = vadd.f32 %v107, %v798
  %v973 = vadd.f32 %v108, %v803
  %v974 = vadd.f32 %v109, %v806
  %v975 = vadd.f32 %v110, %v811
  %v976 = vadd.f32 %v111, %v814
  %v977 = vadd.f32 %v112, %v819
  %v978 = vadd.f32 %v113, %v822
  %v979 = vadd.f32 %v114, %v827
  %v980 = vadd.f32 %v115, %v830
  %v981 = vadd.f32 %v116, %v835
  %v982 = vadd.f32 %v117, %v838
  %v983 = vadd.f32 %v118, %v843
  %v984 = vadd.f32 %v119, %v846
  %v985 = vadd.f32 %v120, %v851
  %v986 = vadd.f32 %v121, %v854
  %v987 = vadd.f32 %v122, %v859
  %v988 = vadd.f32 %v123, %v862
  %v989 = vadd.f32 %v124, %v867
  %v990 = vadd.f32 %v125, %v870
  %v991 = vadd.f32 %v126, %v875
  %v992 = vadd.f32 %v127, %v878
  %v993 = vadd.f32 %v128, %v883
  %v994 = vadd.f32 %v129, %v886
  %v995 = vadd.f32 %v130, %v891
  %v996 = vadd.f32 %v131, %v894
  %v997 = vadd.f32 %v132, %v899
  %v998 = vadd.f32 %v133, %v902
  %v999 = vadd.f32 %v134, %v907
  %v1000 = vadd.f32 %v135, %v910
  %v1001 = vadd.f32 %v136, %v915
  %v1002 = vadd.f32 %v137, %v918
  %v1003 = vadd.f32 %v138, %v923
  %v1004 = vadd.f32 %v139, %v926
  %v1005 = vadd.f32 %v140, %v931
  %v1006 = vadd.f32 %v141, %v934
  %v1007 = vadd.f32 %v142, %v939
  %v1008 = vadd.f32 %v143, %v942
  %1009 = vst [vmem:[#allocation2] sm:$0xff] %v945
  %1010 = vst [vmem:[#allocation2 + $0x8] sm:$0xff] %v946
  %1011 = vst [vmem:[#allocation2 + $0x10] sm:$0xff] %v947
  %1012 = vst [vmem:[#allocation2 + $0x18] sm:$0xff] %v948
  %1013 = vst [vmem:[#allocation2 + $0x20] sm:$0xff] %v949
  %1014 = vst [vmem:[#allocation2 + $0x28] sm:$0xff] %v950
  %1015 = vst [vmem:[#allocation2 + $0x30] sm:$0xff] %v951
  %1016 = vst [vmem:[#allocation2 + $0x38] sm:$0xff] %v952
  %1017 = vst [vmem:[#allocation2 + $0x40] sm:$0xff] %v953
  %1018 = vst [vmem:[#allocation2 + $0x48] sm:$0xff] %v954
  %1019 = vst [vmem:[#allocation2 + $0x50] sm:$0xff] %v955
  %1020 = vst [vmem:[#allocation2 + $0x58] sm:$0xff] %v956
  %1021 = vst [vmem:[#allocation2 + $0x60] sm:$0xff] %v957
  %1022 = vst [vmem:[#allocation2 + $0x68] sm:$0xff] %v958
  %1023 = vst [vmem:[#allocation2 + $0x70] sm:$0xff] %v959
  %1024 = vst [vmem:[#allocation2 + $0x78] sm:$0xff] %v960
  %1025 = vst [vmem:[#allocation2 + $0x80] sm:$0xff] %v961
  %1026 = vst [vmem:[#allocation2 + $0x88] sm:$0xff] %v962
  %1027 = vst [vmem:[#allocation2 + $0x90] sm:$0xff] %v963
  %1028 = vst [vmem:[#allocation2 + $0x98] sm:$0xff] %v964
  %1029 = vst [vmem:[#allocation2 + $0xa0] sm:$0xff] %v965
  %1030 = vst [vmem:[#allocation2 + $0xa8] sm:$0xff] %v966
  %1031 = vst [vmem:[#allocation2 + $0xb0] sm:$0xff] %v967
  %1032 = vst [vmem:[#allocation2 + $0xb8] sm:$0xff] %v968
  %1033 = vst [vmem:[#allocation2 + $0xc0] sm:$0xff] %v969
  %1034 = vst [vmem:[#allocation2 + $0xc8] sm:$0xff] %v970
  %1035 = vst [vmem:[#allocation2 + $0xd0] sm:$0xff] %v971
  %1036 = vst [vmem:[#allocation2 + $0xd8] sm:$0xff] %v972
  %1037 = vst [vmem:[#allocation2 + $0xe0] sm:$0xff] %v973
  %1038 = vst [vmem:[#allocation2 + $0xe8] sm:$0xff] %v974
  %1039 = vst [vmem:[#allocation2 + $0xf0] sm:$0xff] %v975
  %1040 = vst [vmem:[#allocation2 + $0xf8] sm:$0xff] %v976
  %1041 = vst [vmem:[#allocation2 + $0x100] sm:$0xff] %v977
  %1042 = vst [vmem:[#allocation2 + $0x108] sm:$0xff] %v978
  %1043 = vst [vmem:[#allocation2 + $0x110] sm:$0xff] %v979
  %1044 = vst [vmem:[#allocation2 + $0x118] sm:$0xff] %v980
  %1045 = vst [vmem:[#allocation2 + $0x120] sm:$0xff] %v981
  %1046 = vst [vmem:[#allocation2 + $0x128] sm:$0xff] %v982
  %1047 = vst [vmem:[#allocation2 + $0x130] sm:$0xff] %v983
  %1048 = vst [vmem:[#allocation2 + $0x138] sm:$0xff] %v984
  %1049 = vst [vmem:[#allocation2 + $0x140] sm:$0xff] %v985
  %1050 = vst [vmem:[#allocation2 + $0x148] sm:$0xff] %v986
  %1051 = vst [vmem:[#allocation2 + $0x150] sm:$0xff] %v987
  %1052 = vst [vmem:[#allocation2 + $0x158] sm:$0xff] %v988
  %1053 = vst [vmem:[#allocation2 + $0x160] sm:$0xff] %v989
  %1054 = vst [vmem:[#allocation2 + $0x168] sm:$0xff] %v990
  %1055 = vst [vmem:[#allocation2 + $0x170] sm:$0xff] %v991
  %1056 = vst [vmem:[#allocation2 + $0x178] sm:$0xff] %v992
  %1057 = vst [vmem:[#allocation2 + $0x180] sm:$0xff] %v993
  %1058 = vst [vmem:[#allocation2 + $0x188] sm:$0xff] %v994
  %1059 = vst [vmem:[#allocation2 + $0x190] sm:$0xff] %v995
  %1060 = vst [vmem:[#allocation2 + $0x198] sm:$0xff] %v996
  %1061 = vst [vmem:[#allocation2 + $0x1a0] sm:$0xff] %v997
  %1062 = vst [vmem:[#allocation2 + $0x1a8] sm:$0xff] %v998
  %1063 = vst [vmem:[#allocation2 + $0x1b0] sm:$0xff] %v999
  %1064 = vst [vmem:[#allocation2 + $0x1b8] sm:$0xff] %v1000
  %1065 = vst [vmem:[#allocation2 + $0x1c0] sm:$0xff] %v1001
  %1066 = vst [vmem:[#allocation2 + $0x1c8] sm:$0xff] %v1002
  %1067 = vst [vmem:[#allocation2 + $0x1d0] sm:$0xff] %v1003
  %1068 = vst [vmem:[#allocation2 + $0x1d8] sm:$0xff] %v1004
  %1069 = vst [vmem:[#allocation2 + $0x1e0] sm:$0xff] %v1005
  %1070 = vst [vmem:[#allocation2 + $0x1e8] sm:$0xff] %v1006
  %1071 = vst [vmem:[#allocation2 + $0x1f0] sm:$0xff] %v1007
  %1072 = vst [vmem:[#allocation2 + $0x1f8] sm:$0xff] %v1008
  // Predicated region
  $region14: #{gla_forward.3} parent=0 // pred_check
    %p1073 = pneg %p12
  $region15: #{gla_forward.3} parent=0 // pred_check_branch
    %1075 = sbr.rel (%p1073) target = $region17
  $region16: #{gla_forward.3} parent=0 // pred_region
    %v1076 = vld [vmem:[#allocation2] sm:$0xff]
    %v1077 = vld [vmem:[#allocation2 + $0x8] sm:$0xff]
    %v1078 = vld [vmem:[#allocation2 + $0x10] sm:$0xff]
    %v1079 = vld [vmem:[#allocation2 + $0x18] sm:$0xff]
    %v1080 = vld [vmem:[#allocation2 + $0x20] sm:$0xff]
    %v1081 = vld [vmem:[#allocation2 + $0x28] sm:$0xff]
    %v1082 = vld [vmem:[#allocation2 + $0x30] sm:$0xff]
    %v1083 = vld [vmem:[#allocation2 + $0x38] sm:$0xff]
    %v1084 = vld [vmem:[#allocation2 + $0x40] sm:$0xff]
    %v1085 = vld [vmem:[#allocation2 + $0x48] sm:$0xff]
    %v1086 = vld [vmem:[#allocation2 + $0x50] sm:$0xff]
    %v1087 = vld [vmem:[#allocation2 + $0x58] sm:$0xff]
    %v1088 = vld [vmem:[#allocation2 + $0x60] sm:$0xff]
    %v1089 = vld [vmem:[#allocation2 + $0x68] sm:$0xff]
    %v1090 = vld [vmem:[#allocation2 + $0x70] sm:$0xff]
    %v1091 = vld [vmem:[#allocation2 + $0x78] sm:$0xff]
    %v1092 = vld [vmem:[#allocation2 + $0x80] sm:$0xff]
    %v1093 = vld [vmem:[#allocation2 + $0x88] sm:$0xff]
    %v1094 = vld [vmem:[#allocation2 + $0x90] sm:$0xff]
    %v1095 = vld [vmem:[#allocation2 + $0x98] sm:$0xff]
    %v1096 = vld [vmem:[#allocation2 + $0xa0] sm:$0xff]
    %v1097 = vld [vmem:[#allocation2 + $0xa8] sm:$0xff]
    %v1098 = vld [vmem:[#allocation2 + $0xb0] sm:$0xff]
    %v1099 = vld [vmem:[#allocation2 + $0xb8] sm:$0xff]
    %v1100 = vld [vmem:[#allocation2 + $0xc0] sm:$0xff]
    %v1101 = vld [vmem:[#allocation2 + $0xc8] sm:$0xff]
    %v1102 = vld [vmem:[#allocation2 + $0xd0] sm:$0xff]
    %v1103 = vld [vmem:[#allocation2 + $0xd8] sm:$0xff]
    %v1104 = vld [vmem:[#allocation2 + $0xe0] sm:$0xff]
    %v1105 = vld [vmem:[#allocation2 + $0xe8] sm:$0xff]
    %v1106 = vld [vmem:[#allocation2 + $0xf0] sm:$0xff]
    %v1107 = vld [vmem:[#allocation2 + $0xf8] sm:$0xff]
    %v1108 = vld [vmem:[#allocation2 + $0x100] sm:$0xff]
    %v1109 = vld [vmem:[#allocation2 + $0x108] sm:$0xff]
    %v1110 = vld [vmem:[#allocation2 + $0x110] sm:$0xff]
    %v1111 = vld [vmem:[#allocation2 + $0x118] sm:$0xff]
    %v1112 = vld [vmem:[#allocation2 + $0x120] sm:$0xff]
    %v1113 = vld [vmem:[#allocation2 + $0x128] sm:$0xff]
    %v1114 = vld [vmem:[#allocation2 + $0x130] sm:$0xff]
    %v1115 = vld [vmem:[#allocation2 + $0x138] sm:$0xff]
    %v1116 = vld [vmem:[#allocation2 + $0x140] sm:$0xff]
    %v1117 = vld [vmem:[#allocation2 + $0x148] sm:$0xff]
    %v1118 = vld [vmem:[#allocation2 + $0x150] sm:$0xff]
    %v1119 = vld [vmem:[#allocation2 + $0x158] sm:$0xff]
    %v1120 = vld [vmem:[#allocation2 + $0x160] sm:$0xff]
    %v1121 = vld [vmem:[#allocation2 + $0x168] sm:$0xff]
    %v1122 = vld [vmem:[#allocation2 + $0x170] sm:$0xff]
    %v1123 = vld [vmem:[#allocation2 + $0x178] sm:$0xff]
    %v1124 = vld [vmem:[#allocation2 + $0x180] sm:$0xff]
    %v1125 = vld [vmem:[#allocation2 + $0x188] sm:$0xff]
    %v1126 = vld [vmem:[#allocation2 + $0x190] sm:$0xff]
    %v1127 = vld [vmem:[#allocation2 + $0x198] sm:$0xff]
    %v1128 = vld [vmem:[#allocation2 + $0x1a0] sm:$0xff]
    %v1129 = vld [vmem:[#allocation2 + $0x1a8] sm:$0xff]
    %v1130 = vld [vmem:[#allocation2 + $0x1b0] sm:$0xff]
    %v1131 = vld [vmem:[#allocation2 + $0x1b8] sm:$0xff]
    %v1132 = vld [vmem:[#allocation2 + $0x1c0] sm:$0xff]
    %v1133 = vld [vmem:[#allocation2 + $0x1c8] sm:$0xff]
    %v1134 = vld [vmem:[#allocation2 + $0x1d0] sm:$0xff]
    %v1135 = vld [vmem:[#allocation2 + $0x1d8] sm:$0xff]
    %v1136 = vld [vmem:[#allocation2 + $0x1e0] sm:$0xff]
    %v1137 = vld [vmem:[#allocation2 + $0x1e8] sm:$0xff]
    %v1138 = vld [vmem:[#allocation2 + $0x1f0] sm:$0xff]
    %v1139 = vld [vmem:[#allocation2 + $0x1f8] sm:$0xff]
    %v1140 = vpack.c.bf16 %v1077, %v1076
    %v1141 = vpack.c.bf16 %v1079, %v1078
    %v1142 = vpack.c.bf16 %v1081, %v1080
    %v1143 = vpack.c.bf16 %v1083, %v1082
    %v1144 = vpack.c.bf16 %v1085, %v1084
    %v1145 = vpack.c.bf16 %v1087, %v1086
    %v1146 = vpack.c.bf16 %v1089, %v1088
    %v1147 = vpack.c.bf16 %v1091, %v1090
    %v1148 = vpack.c.bf16 %v1093, %v1092
    %v1149 = vpack.c.bf16 %v1095, %v1094
    %v1150 = vpack.c.bf16 %v1097, %v1096
    %v1151 = vpack.c.bf16 %v1099, %v1098
    %v1152 = vpack.c.bf16 %v1101, %v1100
    %v1153 = vpack.c.bf16 %v1103, %v1102
    %v1154 = vpack.c.bf16 %v1105, %v1104
    %v1155 = vpack.c.bf16 %v1107, %v1106
    %v1156 = vpack.c.bf16 %v1109, %v1108
    %v1157 = vpack.c.bf16 %v1111, %v1110
    %v1158 = vpack.c.bf16 %v1113, %v1112
    %v1159 = vpack.c.bf16 %v1115, %v1114
    %v1160 = vpack.c.bf16 %v1117, %v1116
    %v1161 = vpack.c.bf16 %v1119, %v1118
    %v1162 = vpack.c.bf16 %v1121, %v1120
    %v1163 = vpack.c.bf16 %v1123, %v1122
    %v1164 = vpack.c.bf16 %v1125, %v1124
    %v1165 = vpack.c.bf16 %v1127, %v1126
    %v1166 = vpack.c.bf16 %v1129, %v1128
    %v1167 = vpack.c.bf16 %v1131, %v1130
    %v1168 = vpack.c.bf16 %v1133, %v1132
    %v1169 = vpack.c.bf16 %v1135, %v1134
    %v1170 = vpack.c.bf16 %v1137, %v1136
    %v1171 = vpack.c.bf16 %v1139, %v1138
    %v1204 = vunpack.c.l.b16 %v1140
    %v1205 = vunpack.c.h.b16 %v1140
    %v1206 = vunpack.c.l.b16 %v1141
    %v1207 = vunpack.c.h.b16 %v1141
    %v1208 = vunpack.c.l.b16 %v1142
    %v1209 = vunpack.c.h.b16 %v1142
    %v1210 = vunpack.c.l.b16 %v1143
    %v1211 = vunpack.c.h.b16 %v1143
    %v1212 = vunpack.c.l.b16 %v1144
    %v1213 = vunpack.c.h.b16 %v1144
    %v1214 = vunpack.c.l.b16 %v1145
    %v1215 = vunpack.c.h.b16 %v1145
    %v1216 = vunpack.c.l.b16 %v1146
    %v1217 = vunpack.c.h.b16 %v1146
    %v1218 = vunpack.c.l.b16 %v1147
    %v1219 = vunpack.c.h.b16 %v1147
    %v1220 = vunpack.c.l.b16 %v1148
    %v1221 = vunpack.c.h.b16 %v1148
    %v1222 = vunpack.c.l.b16 %v1149
    %v1223 = vunpack.c.h.b16 %v1149
    %v1224 = vunpack.c.l.b16 %v1150
    %v1225 = vunpack.c.h.b16 %v1150
    %v1226 = vunpack.c.l.b16 %v1151
    %v1227 = vunpack.c.h.b16 %v1151
    %v1228 = vunpack.c.l.b16 %v1152
    %v1229 = vunpack.c.h.b16 %v1152
    %v1230 = vunpack.c.l.b16 %v1153
    %v1231 = vunpack.c.h.b16 %v1153
    %v1232 = vunpack.c.l.b16 %v1154
    %v1233 = vunpack.c.h.b16 %v1154
    %v1234 = vunpack.c.l.b16 %v1155
    %v1235 = vunpack.c.h.b16 %v1155
    %v1236 = vunpack.c.l.b16 %v1156
    %v1237 = vunpack.c.h.b16 %v1156
    %v1238 = vunpack.c.l.b16 %v1157
    %v1239 = vunpack.c.h.b16 %v1157
    %v1240 = vunpack.c.l.b16 %v1158
    %v1241 = vunpack.c.h.b16 %v1158
    %v1242 = vunpack.c.l.b16 %v1159
    %v1243 = vunpack.c.h.b16 %v1159
    %v1244 = vunpack.c.l.b16 %v1160
    %v1245 = vunpack.c.h.b16 %v1160
    %v1246 = vunpack.c.l.b16 %v1161
    %v1247 = vunpack.c.h.b16 %v1161
    %v1248 = vunpack.c.l.b16 %v1162
    %v1249 = vunpack.c.h.b16 %v1162
    %v1250 = vunpack.c.l.b16 %v1163
    %v1251 = vunpack.c.h.b16 %v1163
    %v1252 = vunpack.c.l.b16 %v1164
    %v1253 = vunpack.c.h.b16 %v1164
    %v1254 = vunpack.c.l.b16 %v1165
    %v1255 = vunpack.c.h.b16 %v1165
    %v1256 = vunpack.c.l.b16 %v1166
    %v1257 = vunpack.c.h.b16 %v1166
    %v1258 = vunpack.c.l.b16 %v1167
    %v1259 = vunpack.c.h.b16 %v1167
    %v1260 = vunpack.c.l.b16 %v1168
    %v1261 = vunpack.c.h.b16 %v1168
    %v1262 = vunpack.c.l.b16 %v1169
    %v1263 = vunpack.c.h.b16 %v1169
    %v1264 = vunpack.c.l.b16 %v1170
    %v1265 = vunpack.c.h.b16 %v1170
    %v1266 = vunpack.c.l.b16 %v1171
    %v1267 = vunpack.c.h.b16 %v1171
    %v1268 = vpack.c.b16 %v1204, %v1204
    %v1269 = vpack.c.b16 %v1205, %v1205
    %v1270 = vpack.c.b16 %v1206, %v1206
    %v1271 = vpack.c.b16 %v1207, %v1207
    %v1272 = vpack.c.b16 %v1208, %v1208
    %v1273 = vpack.c.b16 %v1209, %v1209
    %v1274 = vpack.c.b16 %v1210, %v1210
    %v1275 = vpack.c.b16 %v1211, %v1211
    %v1276 = vpack.c.b16 %v1212, %v1212
    %v1277 = vpack.c.b16 %v1213, %v1213
    %v1278 = vpack.c.b16 %v1214, %v1214
    %v1279 = vpack.c.b16 %v1215, %v1215
    %v1280 = vpack.c.b16 %v1216, %v1216
    %v1281 = vpack.c.b16 %v1217, %v1217
    %v1282 = vpack.c.b16 %v1218, %v1218
    %v1283 = vpack.c.b16 %v1219, %v1219
    %v1284 = vpack.c.b16 %v1220, %v1220
    %v1285 = vpack.c.b16 %v1221, %v1221
    %v1286 = vpack.c.b16 %v1222, %v1222
    %v1287 = vpack.c.b16 %v1223, %v1223
    %v1288 = vpack.c.b16 %v1224, %v1224
    %v1289 = vpack.c.b16 %v1225, %v1225
    %v1290 = vpack.c.b16 %v1226, %v1226
    %v1291 = vpack.c.b16 %v1227, %v1227
    %v1292 = vpack.c.b16 %v1228, %v1228
    %v1293 = vpack.c.b16 %v1229, %v1229
    %v1294 = vpack.c.b16 %v1230, %v1230
    %v1295 = vpack.c.b16 %v1231, %v1231
    %v1296 = vpack.c.b16 %v1232, %v1232
    %v1297 = vpack.c.b16 %v1233, %v1233
    %v1298 = vpack.c.b16 %v1234, %v1234
    %v1299 = vpack.c.b16 %v1235, %v1235
    %v1300 = vpack.c.b16 %v1236, %v1236
    %v1301 = vpack.c.b16 %v1237, %v1237
    %v1302 = vpack.c.b16 %v1238, %v1238
    %v1303 = vpack.c.b16 %v1239, %v1239
    %v1304 = vpack.c.b16 %v1240, %v1240
    %v1305 = vpack.c.b16 %v1241, %v1241
    %v1306 = vpack.c.b16 %v1242, %v1242
    %v1307 = vpack.c.b16 %v1243, %v1243
    %v1308 = vpack.c.b16 %v1244, %v1244
    %v1309 = vpack.c.b16 %v1245, %v1245
    %v1310 = vpack.c.b16 %v1246, %v1246
    %v1311 = vpack.c.b16 %v1247, %v1247
    %v1312 = vpack.c.b16 %v1248, %v1248
    %v1313 = vpack.c.b16 %v1249, %v1249
    %v1314 = vpack.c.b16 %v1250, %v1250
    %v1315 = vpack.c.b16 %v1251, %v1251
    %v1316 = vpack.c.b16 %v1252, %v1252
    %v1317 = vpack.c.b16 %v1253, %v1253
    %v1318 = vpack.c.b16 %v1254, %v1254
    %v1319 = vpack.c.b16 %v1255, %v1255
    %v1320 = vpack.c.b16 %v1256, %v1256
    %v1321 = vpack.c.b16 %v1257, %v1257
    %v1322 = vpack.c.b16 %v1258, %v1258
    %v1323 = vpack.c.b16 %v1259, %v1259
    %v1324 = vpack.c.b16 %v1260, %v1260
    %v1325 = vpack.c.b16 %v1261, %v1261
    %v1326 = vpack.c.b16 %v1262, %v1262
    %v1327 = vpack.c.b16 %v1263, %v1263
    %v1328 = vpack.c.b16 %v1264, %v1264
    %v1329 = vpack.c.b16 %v1265, %v1265
    %v1330 = vpack.c.b16 %v1266, %v1266
    %v1331 = vpack.c.b16 %v1267, %v1267
    %1396 = vst [vmem:[%s2] sm:$0xf] %v1268
    %1397 = vst [vmem:[%s2 + $0x4] sm:$0xf] %v1269
    %1398 = vst [vmem:[%s2 + $0x8] sm:$0xf] %v1270
    %1399 = vst [vmem:[%s2 + $0xc] sm:$0xf] %v1271
    %1400 = vst [vmem:[%s2 + $0x10] sm:$0xf] %v1272
    %1401 = vst [vmem:[%s2 + $0x14] sm:$0xf] %v1273
    %1402 = vst [vmem:[%s2 + $0x18] sm:$0xf] %v1274
    %1403 = vst [vmem:[%s2 + $0x1c] sm:$0xf] %v1275
    %1404 = vst [vmem:[%s2 + $0x20] sm:$0xf] %v1276
    %1405 = vst [vmem:[%s2 + $0x24] sm:$0xf] %v1277
    %1406 = vst [vmem:[%s2 + $0x28] sm:$0xf] %v1278
    %1407 = vst [vmem:[%s2 + $0x2c] sm:$0xf] %v1279
    %1408 = vst [vmem:[%s2 + $0x30] sm:$0xf] %v1280
    %1409 = vst [vmem:[%s2 + $0x34] sm:$0xf] %v1281
    %1410 = vst [vmem:[%s2 + $0x38] sm:$0xf] %v1282
    %1411 = vst [vmem:[%s2 + $0x3c] sm:$0xf] %v1283
    %1412 = vst [vmem:[%s2 + $0x40] sm:$0xf] %v1284
    %1413 = vst [vmem:[%s2 + $0x44] sm:$0xf] %v1285
    %1414 = vst [vmem:[%s2 + $0x48] sm:$0xf] %v1286
    %1415 = vst [vmem:[%s2 + $0x4c] sm:$0xf] %v1287
    %1416 = vst [vmem:[%s2 + $0x50] sm:$0xf] %v1288
    %1417 = vst [vmem:[%s2 + $0x54] sm:$0xf] %v1289
    %1418 = vst [vmem:[%s2 + $0x58] sm:$0xf] %v1290
    %1419 = vst [vmem:[%s2 + $0x5c] sm:$0xf] %v1291
    %1420 = vst [vmem:[%s2 + $0x60] sm:$0xf] %v1292
    %1421 = vst [vmem:[%s2 + $0x64] sm:$0xf] %v1293
    %1422 = vst [vmem:[%s2 + $0x68] sm:$0xf] %v1294
    %1423 = vst [vmem:[%s2 + $0x6c] sm:$0xf] %v1295
    %1424 = vst [vmem:[%s2 + $0x70] sm:$0xf] %v1296
    %1425 = vst [vmem:[%s2 + $0x74] sm:$0xf] %v1297
    %1426 = vst [vmem:[%s2 + $0x78] sm:$0xf] %v1298
    %1427 = vst [vmem:[%s2 + $0x7c] sm:$0xf] %v1299
    %1428 = vst [vmem:[%s2 + $0x80] sm:$0xf] %v1300
    %1429 = vst [vmem:[%s2 + $0x84] sm:$0xf] %v1301
    %1430 = vst [vmem:[%s2 + $0x88] sm:$0xf] %v1302
    %1431 = vst [vmem:[%s2 + $0x8c] sm:$0xf] %v1303
    %1432 = vst [vmem:[%s2 + $0x90] sm:$0xf] %v1304
    %1433 = vst [vmem:[%s2 + $0x94] sm:$0xf] %v1305
    %1434 = vst [vmem:[%s2 + $0x98] sm:$0xf] %v1306
    %1435 = vst [vmem:[%s2 + $0x9c] sm:$0xf] %v1307
    %1436 = vst [vmem:[%s2 + $0xa0] sm:$0xf] %v1308
    %1437 = vst [vmem:[%s2 + $0xa4] sm:$0xf] %v1309
    %1438 = vst [vmem:[%s2 + $0xa8] sm:$0xf] %v1310
    %1439 = vst [vmem:[%s2 + $0xac] sm:$0xf] %v1311
    %1440 = vst [vmem:[%s2 + $0xb0] sm:$0xf] %v1312
    %1441 = vst [vmem:[%s2 + $0xb4] sm:$0xf] %v1313
    %1442 = vst [vmem:[%s2 + $0xb8] sm:$0xf] %v1314
    %1443 = vst [vmem:[%s2 + $0xbc] sm:$0xf] %v1315
    %1444 = vst [vmem:[%s2 + $0xc0] sm:$0xf] %v1316
    %1445 = vst [vmem:[%s2 + $0xc4] sm:$0xf] %v1317
    %1446 = vst [vmem:[%s2 + $0xc8] sm:$0xf] %v1318
    %1447 = vst [vmem:[%s2 + $0xcc] sm:$0xf] %v1319
    %1448 = vst [vmem:[%s2 + $0xd0] sm:$0xf] %v1320
    %1449 = vst [vmem:[%s2 + $0xd4] sm:$0xf] %v1321
    %1450 = vst [vmem:[%s2 + $0xd8] sm:$0xf] %v1322
    %1451 = vst [vmem:[%s2 + $0xdc] sm:$0xf] %v1323
    %1452 = vst [vmem:[%s2 + $0xe0] sm:$0xf] %v1324
    %1453 = vst [vmem:[%s2 + $0xe4] sm:$0xf] %v1325
    %1454 = vst [vmem:[%s2 + $0xe8] sm:$0xf] %v1326
    %1455 = vst [vmem:[%s2 + $0xec] sm:$0xf] %v1327
    %1456 = vst [vmem:[%s2 + $0xf0] sm:$0xf] %v1328
    %1457 = vst [vmem:[%s2 + $0xf4] sm:$0xf] %v1329
    %1458 = vst [vmem:[%s2 + $0xf8] sm:$0xf] %v1330
    %1459 = vst [vmem:[%s2 + $0xfc] sm:$0xf] %v1331
  $region17: #{gla_forward.3} parent=0 // pred_fallthru
    _
  // Predicated region
  $region18: #{gla_forward.3} parent=0 // pred_check
    _
  $region19: #{gla_forward.3} parent=0 // pred_check_branch
    %1461 = sbr.rel (0) target = $region21
  $region20: #{gla_forward.3} parent=0 // pred_region
    _
  $region21: #{gla_forward.3} parent=0 // pred_fallthru
    _
  // Predicated region
  $region22: #{gla_forward.3} parent=0 // pred_check
    _
  $region23: #{gla_forward.3} parent=0 // pred_check_branch
    %1463 = sbr.rel (0) target = $region25
  $region24: #{gla_forward.3} parent=0 // pred_region
    _
  $region25: #{gla_forward.3} parent=0 // pred_fallthru
    _

// kernel: gla_forward.4
$region0: #{gla_forward.4}
  #allocation0 [shape = 'u32[]', space=smem, size = 0x4, offset = 0x4, fixed_abs, tag = 'smem constant byte address 0x4 - core index']
  #allocation1 [shape = 'u32[144,128]{1,0:T(1,128)}', space=vmem, size = 0x12000, scoped, tag = 'internal scratch']
  #allocation2 [shape = 'bf16[256,4]{1,0:T(8,128)(2,1)}', space=vmem, size = 0x10000, scoped, tag = 'scratch operand']
  %s0 = inlined_call_operand.vmem [shape: bf16[8,256,4], index: 0, kind: input, shape index: {}]
  %s1 = inlined_call_operand.vmem [shape: bf16[8,256,16], index: 1, kind: input, shape index: {}]
  %s2 = inlined_call_operand.vmem [shape: bf16[8,256,32], index: 2, kind: input, shape index: {}]
  %s3 = inlined_call_operand.vmem [shape: f32[8,256,16], index: 3, kind: output, shape index: {0}]
  %s4 = inlined_call_operand.vmem [shape: f32[8,256,1], index: 4, kind: output, shape index: {1}]
  %5 = xla_tuple %s3, %s4
  %s6 = sld [smem:[#allocation0]]
  $region60: #{gla_forward.4} parent=0
    _
  %s8 = ssub.s32 1, %s6
  %s9 = scalar_select 0, %s8, %s6
  loop: start=0, step=1, limit=10
  $region2: #{gla_forward.4} parent=0 // loop_pre_header
    _
  $region3: #{gla_forward.4} parent=0 // loop_header
    %s11 = sphi 0, %s15
    %p12 = scmp.ge.s32.totalorder %s11, 10
    %s21 = sphi 0, %s23
    %s24 = sphi 0, %s21
    %s25 = sphi 0, %s24
    %s41 = sphi 0, %s25
    %s47 = sphi 0, %s49
    %s50 = sphi 0, %s47
    %s51 = sphi 0, %s50
    %s67 = sphi 0, %s51
    %s73 = sphi 0, %s75
    %s76 = sphi 0, %s73
    %s77 = sphi 0, %s76
    %s93 = sphi 0, %s77
    %s99 = sphi 0, %s101
    %s102 = sphi 0, %s99
    %s103 = sphi 0, %s102
    %s119 = sphi 0, %s103
    %s125 = sphi 0, %s127
    %s128 = sphi 0, %s125
    %s129 = sphi 0, %s128
    %s145 = sphi 0, %s129
  $region4: #{gla_forward.4} parent=0 // loop_header_branch
    %14 = sbr.rel (%p12) target = $region8
  $region5: #{gla_forward.4} parent=0 // loop_body
    %s16 = ssub.s32 %s11, 1
    %s17 = ssub.s32 %s11, 2
    %s18 = sadd.s32 %s11, 1
    %s19 = ssub.s32 %s11, %s18
    %p20 = scmp.eq.s32.totalorder %s19, 0
    %s22 = sadd.s32 %s21, 1
    %s23 = scalar_select %p20, %s21, %s22
    %p26 = pneg %p20
    %p27 = scmp.eq.s32.totalorder %s11, 7
    %p28 = por %p26, %p27
    %p29 = scmp.ne.s32.totalorder %s21, %s24
    %p30 = scmp.eq.s32.totalorder %s11, 0
    %p31 = por %p29, %p30
    %p32 = scmp.ne.s32.totalorder %s21, %s24
    %p33 = scmp.eq.s32.totalorder %s16, 7
    %p34 = por %p32, %p33
    %p35 = scmp.ne.s32.totalorder %s24, %s25
    %p36 = scmp.eq.s32.totalorder %s16, 0
    %p37 = por %p35, %p36
    %p38 = scmp.ne.s32.totalorder %s24, %s25
    %p39 = scmp.eq.s32.totalorder %s17, 7
    %p40 = por %p38, %p39
    %p42 = scmp.ne.s32.totalorder %s25, %s41
    %p43 = scmp.eq.s32.totalorder %s17, 0
    %p44 = por %p42, %p43
    %s45 = ssub.s32 %s11, %s18
    %p46 = scmp.eq.s32.totalorder %s45, 0
    %s48 = sadd.s32 %s47, 1
    %s49 = scalar_select %p46, %s47, %s48
    %p52 = pneg %p46
    %p53 = scmp.eq.s32.totalorder %s11, 7
    %p54 = por %p52, %p53
    %p55 = scmp.ne.s32.totalorder %s47, %s50
    %p56 = scmp.eq.s32.totalorder %s11, 0
    %p57 = por %p55, %p56
    %p58 = scmp.ne.s32.totalorder %s47, %s50
    %p59 = scmp.eq.s32.totalorder %s16, 7
    %p60 = por %p58, %p59
    %p61 = scmp.ne.s32.totalorder %s50, %s51
    %p62 = scmp.eq.s32.totalorder %s16, 0
    %p63 = por %p61, %p62
    %p64 = scmp.ne.s32.totalorder %s50, %s51
    %p65 = scmp.eq.s32.totalorder %s17, 7
    %p66 = por %p64, %p65
    %p68 = scmp.ne.s32.totalorder %s51, %s67
    %p69 = scmp.eq.s32.totalorder %s17, 0
    %p70 = por %p68, %p69
    %s71 = ssub.s32 %s11, %s18
    %p72 = scmp.eq.s32.totalorder %s71, 0
    %s74 = sadd.s32 %s73, 1
    %s75 = scalar_select %p72, %s73, %s74
    %p78 = pneg %p72
    %p79 = scmp.eq.s32.totalorder %s11, 7
    %p80 = por %p78, %p79
    %p81 = scmp.ne.s32.totalorder %s73, %s76
    %p82 = scmp.eq.s32.totalorder %s11, 0
    %p83 = por %p81, %p82
    %p84 = scmp.ne.s32.totalorder %s73, %s76
    %p85 = scmp.eq.s32.totalorder %s16, 7
    %p86 = por %p84, %p85
    %p87 = scmp.ne.s32.totalorder %s76, %s77
    %p88 = scmp.eq.s32.totalorder %s16, 0
    %p89 = por %p87, %p88
    %p90 = scmp.ne.s32.totalorder %s76, %s77
    %p91 = scmp.eq.s32.totalorder %s17, 7
    %p92 = por %p90, %p91
    %p94 = scmp.ne.s32.totalorder %s77, %s93
    %p95 = scmp.eq.s32.totalorder %s17, 0
    %p96 = por %p94, %p95
    %s97 = ssub.s32 %s11, %s18
    %p98 = scmp.eq.s32.totalorder %s97, 0
    %s100 = sadd.s32 %s99, 1
    %s101 = scalar_select %p98, %s99, %s100
    %p104 = pneg %p98
    %p105 = scmp.eq.s32.totalorder %s11, 7
    %p106 = por %p104, %p105
    %p107 = scmp.ne.s32.totalorder %s99, %s102
    %p108 = scmp.eq.s32.totalorder %s11, 0
    %p109 = por %p107, %p108
    %p110 = scmp.ne.s32.totalorder %s99, %s102
    %p111 = scmp.eq.s32.totalorder %s16, 7
    %p112 = por %p110, %p111
    %p113 = scmp.ne.s32.totalorder %s102, %s103
    %p114 = scmp.eq.s32.totalorder %s16, 0
    %p115 = por %p113, %p114
    %p116 = scmp.ne.s32.totalorder %s102, %s103
    %p117 = scmp.eq.s32.totalorder %s17, 7
    %p118 = por %p116, %p117
    %p120 = scmp.ne.s32.totalorder %s103, %s119
    %p121 = scmp.eq.s32.totalorder %s17, 0
    %p122 = por %p120, %p121
    %s123 = ssub.s32 %s11, %s18
    %p124 = scmp.eq.s32.totalorder %s123, 0
    %s126 = sadd.s32 %s125, 1
    %s127 = scalar_select %p124, %s125, %s126
    %p130 = pneg %p124
    %p131 = scmp.eq.s32.totalorder %s11, 7
    %p132 = por %p130, %p131
    %p133 = scmp.ne.s32.totalorder %s125, %s128
    %p134 = scmp.eq.s32.totalorder %s11, 0
    %p135 = por %p133, %p134
    %p136 = scmp.ne.s32.totalorder %s125, %s128
    %p137 = scmp.eq.s32.totalorder %s16, 7
    %p138 = por %p136, %p137
    %p139 = scmp.ne.s32.totalorder %s128, %s129
    %p140 = scmp.eq.s32.totalorder %s16, 0
    %p141 = por %p139, %p140
    %p142 = scmp.ne.s32.totalorder %s128, %s129
    %p143 = scmp.eq.s32.totalorder %s17, 7
    %p144 = por %p142, %p143
    %p146 = scmp.ne.s32.totalorder %s129, %s145
    %p147 = scmp.eq.s32.totalorder %s17, 0
    %p148 = por %p146, %p147
    %p149 = scmp.le.s32.totalorder 1, %s11
    %p150 = scmp.lt.s32.totalorder %s11, 9
    %p151 = pnand %p149, %p150
    %p152 = pneg %p151
    // Predicated region
    $region9: #{gla_forward.4} parent=5 // pred_check
      _
    $region10: #{gla_forward.4} parent=5 // pred_check_branch
      %154 = sbr.rel (%p151) target = $region12
    $region11: #{gla_forward.4} parent=5 // pred_region
      %s155 = ssub.s32 %s11, 1
    $region12: #{gla_forward.4} parent=5 // pred_fallthru
      _
    %p156 = scmp.lt.s32.totalorder %s11, 8
    // Predicated region
    $region13: #{gla_forward.4} parent=5 // pred_check
      %p157 = pneg %p156
    $region14: #{gla_forward.4} parent=5 // pred_check_branch
      %159 = sbr.rel (%p157) target = $region16
    $region15: #{gla_forward.4} parent=5 // pred_region
      // Predicated region
      $region17: #{gla_forward.4} parent=15 // pred_check
        %p160 = pneg %p31
      $region18: #{gla_forward.4} parent=15 // pred_check_branch
        %162 = sbr.rel (%p160) target = $region20
      $region19: #{gla_forward.4} parent=15 // pred_region
        %p163 = scmp.lt.s32.totalorder %s11, 7
        %s164 = scalar_select %p163, %s11, 7
        %s165 = smul.addr %s164, 32
        %s166 = smul.addr %s165, 4
        %s167 = scalar_lea.vmem %s0, %s166
      $region20: #{gla_forward.4} parent=15 // pred_fallthru
        _
      // Predicated region
      $region21: #{gla_forward.4} parent=15 // pred_check
        %p168 = pneg %p57
      $region22: #{gla_forward.4} parent=15 // pred_check_branch
        %170 = sbr.rel (%p168) target = $region24
      $region23: #{gla_forward.4} parent=15 // pred_region
        %p171 = scmp.lt.s32.totalorder %s11, 7
        %s172 = scalar_select %p171, %s11, 7
        %s173 = smul.addr %s172, 32
        %s174 = smul.addr %s173, 4
        %s175 = scalar_lea.vmem %s1, %s174
      $region24: #{gla_forward.4} parent=15 // pred_fallthru
        _
      // Predicated region
      $region25: #{gla_forward.4} parent=15 // pred_check
        %p176 = pneg %p83
      $region26: #{gla_forward.4} parent=15 // pred_check_branch
        %178 = sbr.rel (%p176) target = $region28
      $region27: #{gla_forward.4} parent=15 // pred_region
        %p179 = scmp.lt.s32.totalorder %s11, 7
        %s180 = scalar_select %p179, %s11, 7
        %s181 = smul.addr %s180, 32
        %s182 = smul.addr %s181, 4
        %s183 = scalar_lea.vmem %s2, %s182
      $region28: #{gla_forward.4} parent=15 // pred_fallthru
        _
    $region16: #{gla_forward.4} parent=5 // pred_fallthru
      _
    %p184 = scmp.le.s32.totalorder 1, %s11
    %p185 = scmp.lt.s32.totalorder %s11, 9
    %p186 = pnand %p184, %p185
    %p187 = pneg %p186
    // Predicated region
    $region29: #{gla_forward.4} parent=5 // pred_check
      _
    $region30: #{gla_forward.4} parent=5 // pred_check_branch
      %189 = sbr.rel (%p186) target = $region32
    $region31: #{gla_forward.4} parent=5 // pred_region
      %s190 = ssub.s32 %s11, 1
      %p191 = scmp.lt.s32.totalorder %s16, 7
      %s192 = scalar_select %p191, %s16, 7
      %s193 = smul.addr %s192, 32
      %s194 = smul.addr %s193, 4
      %s195 = scalar_lea.vmem %s0, %s194
      %p196 = pneg %p37
      %p197 = pneg %p34
      %p198 = scmp.lt.s32.totalorder %s16, 7
      %s199 = scalar_select %p198, %s16, 7
      %s200 = smul.addr %s199, 32
      %s201 = smul.addr %s200, 4
      %s202 = scalar_lea.vmem %s1, %s201
      %p203 = pneg %p63
      %p204 = pneg %p60
      %p205 = scmp.lt.s32.totalorder %s16, 7
      %s206 = scalar_select %p205, %s16, 7
      %s207 = smul.addr %s206, 32
      %s208 = smul.addr %s207, 4
      %s209 = scalar_lea.vmem %s2, %s208
      %p210 = pneg %p89
      %p211 = pneg %p86
      %p212 = pneg %p115
      %p213 = pneg %p112
      %p214 = scmp.lt.s32.totalorder %s16, 7
      %s215 = scalar_select %p214, %s16, 7
      %s216 = smul.addr %s215, 32
      %s217 = smul.addr %s216, 8
      %s218 = scalar_lea.vmem %s3, %s217
      %p219 = pneg %p141
      %p220 = pneg %p138
      %p221 = scmp.lt.s32.totalorder %s16, 7
      %s222 = scalar_select %p221, %s16, 7
      %s223 = smul.addr %s222, 32
      %s224 = smul.addr %s223, 8
      %s225 = scalar_lea.vmem %s4, %s224
      %p226 = scmp.lt.s32.totalorder %s16, 7
      %s227 = scalar_select %p226, %s16, 7
      %s228 = smul.addr %s227, 32
      %s229 = smul.addr %s228, 4
      %s230 = scalar_lea.vmem %s0, %s229
      %p231 = scmp.lt.s32.totalorder %s16, 7
      %s232 = scalar_select %p231, %s16, 7
      %s233 = smul.addr %s232, 32
      %s234 = smul.addr %s233, 4
      %s235 = scalar_lea.vmem %s1, %s234
      %p236 = scmp.lt.s32.totalorder %s16, 7
      %s237 = scalar_select %p236, %s16, 7
      %s238 = smul.addr %s237, 32
      %s239 = smul.addr %s238, 4
      %s240 = scalar_lea.vmem %s2, %s239
      %p241 = scmp.lt.s32.totalorder %s16, 7
      %s242 = scalar_select %p241, %s16, 7
      %s243 = smul.addr %s242, 32
      %s244 = smul.addr %s243, 8
      %s245 = scalar_lea.vmem %s3, %s244
      %p246 = scmp.lt.s32.totalorder %s16, 7
      %s247 = scalar_select %p246, %s16, 7
      %s248 = smul.addr %s247, 32
      %s249 = smul.addr %s248, 8
      %s250 = scalar_lea.vmem %s4, %s249
      %v252 = vld [vmem:[%s230] sm:$0xf]
      %v253 = vld [vmem:[%s230 + $0x4] sm:$0xf]
      %v254 = vld [vmem:[%s230 + $0x8] sm:$0xf]
      %v255 = vld [vmem:[%s230 + $0xc] sm:$0xf]
      %v256 = vld [vmem:[%s230 + $0x10] sm:$0xf]
      %v257 = vld [vmem:[%s230 + $0x14] sm:$0xf]
      %v258 = vld [vmem:[%s230 + $0x18] sm:$0xf]
      %v259 = vld [vmem:[%s230 + $0x1c] sm:$0xf]
      %v260 = vld [vmem:[%s230 + $0x20] sm:$0xf]
      %v261 = vld [vmem:[%s230 + $0x24] sm:$0xf]
      %v262 = vld [vmem:[%s230 + $0x28] sm:$0xf]
      %v263 = vld [vmem:[%s230 + $0x2c] sm:$0xf]
      %v264 = vld [vmem:[%s230 + $0x30] sm:$0xf]
      %v265 = vld [vmem:[%s230 + $0x34] sm:$0xf]
      %v266 = vld [vmem:[%s230 + $0x38] sm:$0xf]
      %v267 = vld [vmem:[%s230 + $0x3c] sm:$0xf]
      %v268 = vld [vmem:[%s230 + $0x40] sm:$0xf]
      %v269 = vld [vmem:[%s230 + $0x44] sm:$0xf]
      %v270 = vld [vmem:[%s230 + $0x48] sm:$0xf]
      %v271 = vld [vmem:[%s230 + $0x4c] sm:$0xf]
      %v272 = vld [vmem:[%s230 + $0x50] sm:$0xf]
      %v273 = vld [vmem:[%s230 + $0x54] sm:$0xf]
      %v274 = vld [vmem:[%s230 + $0x58] sm:$0xf]
      %v275 = vld [vmem:[%s230 + $0x5c] sm:$0xf]
      %v276 = vld [vmem:[%s230 + $0x60] sm:$0xf]
      %v277 = vld [vmem:[%s230 + $0x64] sm:$0xf]
      %v278 = vld [vmem:[%s230 + $0x68] sm:$0xf]
      %v279 = vld [vmem:[%s230 + $0x6c] sm:$0xf]
      %v280 = vld [vmem:[%s230 + $0x70] sm:$0xf]
      %v281 = vld [vmem:[%s230 + $0x74] sm:$0xf]
      %v282 = vld [vmem:[%s230 + $0x78] sm:$0xf]
      %v283 = vld [vmem:[%s230 + $0x7c] sm:$0xf]
      %v284 = vunpack.c.l.bf16 %v252
      %v285 = vunpack.c.l.bf16 %v253
      %v286 = vunpack.c.l.bf16 %v254
      %v287 = vunpack.c.l.bf16 %v255
      %v288 = vunpack.c.l.bf16 %v256
      %v289 = vunpack.c.l.bf16 %v257
      %v290 = vunpack.c.l.bf16 %v258
      %v291 = vunpack.c.l.bf16 %v259
      %v292 = vunpack.c.l.bf16 %v260
      %v293 = vunpack.c.l.bf16 %v261
      %v294 = vunpack.c.l.bf16 %v262
      %v295 = vunpack.c.l.bf16 %v263
      %v296 = vunpack.c.l.bf16 %v264
      %v297 = vunpack.c.l.bf16 %v265
      %v298 = vunpack.c.l.bf16 %v266
      %v299 = vunpack.c.l.bf16 %v267
      %v300 = vunpack.c.l.bf16 %v268
      %v301 = vunpack.c.l.bf16 %v269
      %v302 = vunpack.c.l.bf16 %v270
      %v303 = vunpack.c.l.bf16 %v271
      %v304 = vunpack.c.l.bf16 %v272
      %v305 = vunpack.c.l.bf16 %v273
      %v306 = vunpack.c.l.bf16 %v274
      %v307 = vunpack.c.l.bf16 %v275
      %v308 = vunpack.c.l.bf16 %v276
      %v309 = vunpack.c.l.bf16 %v277
      %v310 = vunpack.c.l.bf16 %v278
      %v311 = vunpack.c.l.bf16 %v279
      %v312 = vunpack.c.l.bf16 %v280
      %v313 = vunpack.c.l.bf16 %v281
      %v314 = vunpack.c.l.bf16 %v282
      %v315 = vunpack.c.l.bf16 %v283
      %v316 = vmul.f32 %v284, %v284
      %v317 = vmul.f32 %v285, %v285
      %v318 = vmul.f32 %v286, %v286
      %v319 = vmul.f32 %v287, %v287
      %v320 = vmul.f32 %v288, %v288
      %v321 = vmul.f32 %v289, %v289
      %v322 = vmul.f32 %v290, %v290
      %v323 = vmul.f32 %v291, %v291
      %v324 = vmul.f32 %v292, %v292
      %v325 = vmul.f32 %v293, %v293
      %v326 = vmul.f32 %v294, %v294
      %v327 = vmul.f32 %v295, %v295
      %v328 = vmul.f32 %v296, %v296
      %v329 = vmul.f32 %v297, %v297
      %v330 = vmul.f32 %v298, %v298
      %v331 = vmul.f32 %v299, %v299
      %v332 = vmul.f32 %v300, %v300
      %v333 = vmul.f32 %v301, %v301
      %v334 = vmul.f32 %v302, %v302
      %v335 = vmul.f32 %v303, %v303
      %v336 = vmul.f32 %v304, %v304
      %v337 = vmul.f32 %v305, %v305
      %v338 = vmul.f32 %v306, %v306
      %v339 = vmul.f32 %v307, %v307
      %v340 = vmul.f32 %v308, %v308
      %v341 = vmul.f32 %v309, %v309
      %v342 = vmul.f32 %v310, %v310
      %v343 = vmul.f32 %v311, %v311
      %v344 = vmul.f32 %v312, %v312
      %v345 = vmul.f32 %v313, %v313
      %v346 = vmul.f32 %v314, %v314
      %v347 = vmul.f32 %v315, %v315
      %vm348 = vcmask 31744
      %v349 = vsel %vm348, %v316, 0.0
      %350 = vadd.xlane.f32.xlu0 %v349
      %v351 = vpop.xlane.xlu0 %350
      %v352 = vsel %vm348, %v317, 0.0
      %353 = vadd.xlane.f32.xlu0 %v352
      %v354 = vpop.xlane.xlu0 %353
      %v355 = vsel %vm348, %v318, 0.0
      %356 = vadd.xlane.f32.xlu0 %v355
      %v357 = vpop.xlane.xlu0 %356
      %v358 = vsel %vm348, %v319, 0.0
      %359 = vadd.xlane.f32.xlu0 %v358
      %v360 = vpop.xlane.xlu0 %359
      %v361 = vsel %vm348, %v320, 0.0
      %362 = vadd.xlane.f32.xlu0 %v361
      %v363 = vpop.xlane.xlu0 %362
      %v364 = vsel %vm348, %v321, 0.0
      %365 = vadd.xlane.f32.xlu0 %v364
      %v366 = vpop.xlane.xlu0 %365
      %v367 = vsel %vm348, %v322, 0.0
      %368 = vadd.xlane.f32.xlu0 %v367
      %v369 = vpop.xlane.xlu0 %368
      %v370 = vsel %vm348, %v323, 0.0
      %371 = vadd.xlane.f32.xlu0 %v370
      %v372 = vpop.xlane.xlu0 %371
      %v373 = vsel %vm348, %v324, 0.0
      %374 = vadd.xlane.f32.xlu0 %v373
      %v375 = vpop.xlane.xlu0 %374
      %v376 = vsel %vm348, %v325, 0.0
      %377 = vadd.xlane.f32.xlu0 %v376
      %v378 = vpop.xlane.xlu0 %377
      %v379 = vsel %vm348, %v326, 0.0
      %380 = vadd.xlane.f32.xlu0 %v379
      %v381 = vpop.xlane.xlu0 %380
      %v382 = vsel %vm348, %v327, 0.0
      %383 = vadd.xlane.f32.xlu0 %v382
      %v384 = vpop.xlane.xlu0 %383
      %v385 = vsel %vm348, %v328, 0.0
      %386 = vadd.xlane.f32.xlu0 %v385
      %v387 = vpop.xlane.xlu0 %386
      %v388 = vsel %vm348, %v329, 0.0
      %389 = vadd.xlane.f32.xlu0 %v388
      %v390 = vpop.xlane.xlu0 %389
      %v391 = vsel %vm348, %v330, 0.0
      %392 = vadd.xlane.f32.xlu0 %v391
      %v393 = vpop.xlane.xlu0 %392
      %v394 = vsel %vm348, %v331, 0.0
      %395 = vadd.xlane.f32.xlu0 %v394
      %v396 = vpop.xlane.xlu0 %395
      %v397 = vsel %vm348, %v332, 0.0
      %398 = vadd.xlane.f32.xlu0 %v397
      %v399 = vpop.xlane.xlu0 %398
      %v400 = vsel %vm348, %v333, 0.0
      %401 = vadd.xlane.f32.xlu0 %v400
      %v402 = vpop.xlane.xlu0 %401
      %v403 = vsel %vm348, %v334, 0.0
      %404 = vadd.xlane.f32.xlu0 %v403
      %v405 = vpop.xlane.xlu0 %404
      %v406 = vsel %vm348, %v335, 0.0
      %407 = vadd.xlane.f32.xlu0 %v406
      %v408 = vpop.xlane.xlu0 %407
      %v409 = vsel %vm348, %v336, 0.0
      %410 = vadd.xlane.f32.xlu0 %v409
      %v411 = vpop.xlane.xlu0 %410
      %v412 = vsel %vm348, %v337, 0.0
      %413 = vadd.xlane.f32.xlu0 %v412
      %v414 = vpop.xlane.xlu0 %413
      %v415 = vsel %vm348, %v338, 0.0
      %416 = vadd.xlane.f32.xlu0 %v415
      %v417 = vpop.xlane.xlu0 %416
      %v418 = vsel %vm348, %v339, 0.0
      %419 = vadd.xlane.f32.xlu0 %v418
      %v420 = vpop.xlane.xlu0 %419
      %v421 = vsel %vm348, %v340, 0.0
      %422 = vadd.xlane.f32.xlu0 %v421
      %v423 = vpop.xlane.xlu0 %422
      %v424 = vsel %vm348, %v341, 0.0
      %425 = vadd.xlane.f32.xlu0 %v424
      %v426 = vpop.xlane.xlu0 %425
      %v427 = vsel %vm348, %v342, 0.0
      %428 = vadd.xlane.f32.xlu0 %v427
      %v429 = vpop.xlane.xlu0 %428
      %v430 = vsel %vm348, %v343, 0.0
      %431 = vadd.xlane.f32.xlu0 %v430
      %v432 = vpop.xlane.xlu0 %431
      %v433 = vsel %vm348, %v344, 0.0
      %434 = vadd.xlane.f32.xlu0 %v433
      %v435 = vpop.xlane.xlu0 %434
      %v436 = vsel %vm348, %v345, 0.0
      %437 = vadd.xlane.f32.xlu0 %v436
      %v438 = vpop.xlane.xlu0 %437
      %v439 = vsel %vm348, %v346, 0.0
      %440 = vadd.xlane.f32.xlu0 %v439
      %v441 = vpop.xlane.xlu0 %440
      %v442 = vsel %vm348, %v347, 0.0
      %443 = vadd.xlane.f32.xlu0 %v442
      %v444 = vpop.xlane.xlu0 %443
      %v445 = vmax.f32 %v351, 2.5e-09
      %v446 = vmax.f32 %v354, 2.5e-09
      %v447 = vmax.f32 %v357, 2.5e-09
      %v448 = vmax.f32 %v360, 2.5e-09
      %v449 = vmax.f32 %v363, 2.5e-09
      %v450 = vmax.f32 %v366, 2.5e-09
      %v451 = vmax.f32 %v369, 2.5e-09
      %v452 = vmax.f32 %v372, 2.5e-09
      %v453 = vmax.f32 %v375, 2.5e-09
      %v454 = vmax.f32 %v378, 2.5e-09
      %v455 = vmax.f32 %v381, 2.5e-09
      %v456 = vmax.f32 %v384, 2.5e-09
      %v457 = vmax.f32 %v387, 2.5e-09
      %v458 = vmax.f32 %v390, 2.5e-09
      %v459 = vmax.f32 %v393, 2.5e-09
      %v460 = vmax.f32 %v396, 2.5e-09
      %v461 = vmax.f32 %v399, 2.5e-09
      %v462 = vmax.f32 %v402, 2.5e-09
      %v463 = vmax.f32 %v405, 2.5e-09
      %v464 = vmax.f32 %v408, 2.5e-09
      %v465 = vmax.f32 %v411, 2.5e-09
      %v466 = vmax.f32 %v414, 2.5e-09
      %v467 = vmax.f32 %v417, 2.5e-09
      %v468 = vmax.f32 %v420, 2.5e-09
      %v469 = vmax.f32 %v423, 2.5e-09
      %v470 = vmax.f32 %v426, 2.5e-09
      %v471 = vmax.f32 %v429, 2.5e-09
      %v472 = vmax.f32 %v432, 2.5e-09
      %v473 = vmax.f32 %v435, 2.5e-09
      %v474 = vmax.f32 %v438, 2.5e-09
      %v475 = vmax.f32 %v441, 2.5e-09
      %v476 = vmax.f32 %v444, 2.5e-09
      %v477 = vrsqrt.pop %v445
      %v478 = vrsqrt.pop %v446
      %v479 = vrsqrt.pop %v447
      %v480 = vrsqrt.pop %v448
      %v481 = vrsqrt.pop %v449
      %v482 = vrsqrt.pop %v450
      %v483 = vrsqrt.pop %v451
      %v484 = vrsqrt.pop %v452
      %v485 = vrsqrt.pop %v453
      %v486 = vrsqrt.pop %v454
      %v487 = vrsqrt.pop %v455
      %v488 = vrsqrt.pop %v456
      %v489 = vrsqrt.pop %v457
      %v490 = vrsqrt.pop %v458
      %v491 = vrsqrt.pop %v459
      %v492 = vrsqrt.pop %v460
      %v493 = vrsqrt.pop %v461
      %v494 = vrsqrt.pop %v462
      %v495 = vrsqrt.pop %v463
      %v496 = vrsqrt.pop %v464
      %v497 = vrsqrt.pop %v465
      %v498 = vrsqrt.pop %v466
      %v499 = vrsqrt.pop %v467
      %v500 = vrsqrt.pop %v468
      %v501 = vrsqrt.pop %v469
      %v502 = vrsqrt.pop %v470
      %v503 = vrsqrt.pop %v471
      %v504 = vrsqrt.pop %v472
      %v505 = vrsqrt.pop %v473
      %v506 = vrsqrt.pop %v474
      %v507 = vrsqrt.pop %v475
      %v508 = vrsqrt.pop %v476
      %v509 = vmul.f32 %v284, %v477
      %v510 = vmul.f32 %v285, %v478
      %v511 = vmul.f32 %v286, %v479
      %v512 = vmul.f32 %v287, %v480
      %v513 = vmul.f32 %v288, %v481
      %v514 = vmul.f32 %v289, %v482
      %v515 = vmul.f32 %v290, %v483
      %v516 = vmul.f32 %v291, %v484
      %v517 = vmul.f32 %v292, %v485
      %v518 = vmul.f32 %v293, %v486
      %v519 = vmul.f32 %v294, %v487
      %v520 = vmul.f32 %v295, %v488
      %v521 = vmul.f32 %v296, %v489
      %v522 = vmul.f32 %v297, %v490
      %v523 = vmul.f32 %v298, %v491
      %v524 = vmul.f32 %v299, %v492
      %v525 = vmul.f32 %v300, %v493
      %v526 = vmul.f32 %v301, %v494
      %v527 = vmul.f32 %v302, %v495
      %v528 = vmul.f32 %v303, %v496
      %v529 = vmul.f32 %v304, %v497
      %v530 = vmul.f32 %v305, %v498
      %v531 = vmul.f32 %v306, %v499
      %v532 = vmul.f32 %v307, %v500
      %v533 = vmul.f32 %v308, %v501
      %v534 = vmul.f32 %v309, %v502
      %v535 = vmul.f32 %v310, %v503
      %v536 = vmul.f32 %v311, %v504
      %v537 = vmul.f32 %v312, %v505
      %v538 = vmul.f32 %v313, %v506
      %v539 = vmul.f32 %v314, %v507
      %v540 = vmul.f32 %v315, %v508
      %v541 = vpack.c.bf16 %v510, %v509
      %v542 = vpack.c.bf16 %v512, %v511
      %v543 = vpack.c.bf16 %v514, %v513
      %v544 = vpack.c.bf16 %v516, %v515
      %v545 = vpack.c.bf16 %v518, %v517
      %v546 = vpack.c.bf16 %v520, %v519
      %v547 = vpack.c.bf16 %v522, %v521
      %v548 = vpack.c.bf16 %v524, %v523
      %v549 = vpack.c.bf16 %v526, %v525
      %v550 = vpack.c.bf16 %v528, %v527
      %v551 = vpack.c.bf16 %v530, %v529
      %v552 = vpack.c.bf16 %v532, %v531
      %v553 = vpack.c.bf16 %v534, %v533
      %v554 = vpack.c.bf16 %v536, %v535
      %v555 = vpack.c.bf16 %v538, %v537
      %v556 = vpack.c.bf16 %v540, %v539
      %v573 = vunpack.c.l.b16 %v541
      %v574 = vunpack.c.h.b16 %v541
      %v575 = vunpack.c.l.b16 %v542
      %v576 = vunpack.c.h.b16 %v542
      %v577 = vunpack.c.l.b16 %v543
      %v578 = vunpack.c.h.b16 %v543
      %v579 = vunpack.c.l.b16 %v544
      %v580 = vunpack.c.h.b16 %v544
      %v581 = vunpack.c.l.b16 %v545
      %v582 = vunpack.c.h.b16 %v545
      %v583 = vunpack.c.l.b16 %v546
      %v584 = vunpack.c.h.b16 %v546
      %v585 = vunpack.c.l.b16 %v547
      %v586 = vunpack.c.h.b16 %v547
      %v587 = vunpack.c.l.b16 %v548
      %v588 = vunpack.c.h.b16 %v548
      %v589 = vunpack.c.l.b16 %v549
      %v590 = vunpack.c.h.b16 %v549
      %v591 = vunpack.c.l.b16 %v550
      %v592 = vunpack.c.h.b16 %v550
      %v593 = vunpack.c.l.b16 %v551
      %v594 = vunpack.c.h.b16 %v551
      %v595 = vunpack.c.l.b16 %v552
      %v596 = vunpack.c.h.b16 %v552
      %v597 = vunpack.c.l.b16 %v553
      %v598 = vunpack.c.h.b16 %v553
      %v599 = vunpack.c.l.b16 %v554
      %v600 = vunpack.c.h.b16 %v554
      %v601 = vunpack.c.l.b16 %v555
      %v602 = vunpack.c.h.b16 %v555
      %v603 = vunpack.c.l.b16 %v556
      %v604 = vunpack.c.h.b16 %v556
      %v605 = vpack.c.b16 %v573, %v573
      %v606 = vpack.c.b16 %v574, %v574
      %v607 = vpack.c.b16 %v575, %v575
      %v608 = vpack.c.b16 %v576, %v576
      %v609 = vpack.c.b16 %v577, %v577
      %v610 = vpack.c.b16 %v578, %v578
      %v611 = vpack.c.b16 %v579, %v579
      %v612 = vpack.c.b16 %v580, %v580
      %v613 = vpack.c.b16 %v581, %v581
      %v614 = vpack.c.b16 %v582, %v582
      %v615 = vpack.c.b16 %v583, %v583
      %v616 = vpack.c.b16 %v584, %v584
      %v617 = vpack.c.b16 %v585, %v585
      %v618 = vpack.c.b16 %v586, %v586
      %v619 = vpack.c.b16 %v587, %v587
      %v620 = vpack.c.b16 %v588, %v588
      %v621 = vpack.c.b16 %v589, %v589
      %v622 = vpack.c.b16 %v590, %v590
      %v623 = vpack.c.b16 %v591, %v591
      %v624 = vpack.c.b16 %v592, %v592
      %v625 = vpack.c.b16 %v593, %v593
      %v626 = vpack.c.b16 %v594, %v594
      %v627 = vpack.c.b16 %v595, %v595
      %v628 = vpack.c.b16 %v596, %v596
      %v629 = vpack.c.b16 %v597, %v597
      %v630 = vpack.c.b16 %v598, %v598
      %v631 = vpack.c.b16 %v599, %v599
      %v632 = vpack.c.b16 %v600, %v600
      %v633 = vpack.c.b16 %v601, %v601
      %v634 = vpack.c.b16 %v602, %v602
      %v635 = vpack.c.b16 %v603, %v603
      %v636 = vpack.c.b16 %v604, %v604
      %vm669 = vcmask 27648
      %670 = vst.msk [vmem:[#allocation2] sm:$0xf] %vm669, %v605
      %671 = vst.msk [vmem:[#allocation2 + $0x4] sm:$0xf] %vm669, %v606
      %672 = vst.msk [vmem:[#allocation2 + $0x8] sm:$0xf] %vm669, %v607
      %673 = vst.msk [vmem:[#allocation2 + $0xc] sm:$0xf] %vm669, %v608
      %674 = vst.msk [vmem:[#allocation2 + $0x10] sm:$0xf] %vm669, %v609
      %675 = vst.msk [vmem:[#allocation2 + $0x14] sm:$0xf] %vm669, %v610
      %676 = vst.msk [vmem:[#allocation2 + $0x18] sm:$0xf] %vm669, %v611
      %677 = vst.msk [vmem:[#allocation2 + $0x1c] sm:$0xf] %vm669, %v612
      %678 = vst.msk [vmem:[#allocation2 + $0x20] sm:$0xf] %vm669, %v613
      %679 = vst.msk [vmem:[#allocation2 + $0x24] sm:$0xf] %vm669, %v614
      %680 = vst.msk [vmem:[#allocation2 + $0x28] sm:$0xf] %vm669, %v615
      %681 = vst.msk [vmem:[#allocation2 + $0x2c] sm:$0xf] %vm669, %v616
      %682 = vst.msk [vmem:[#allocation2 + $0x30] sm:$0xf] %vm669, %v617
      %683 = vst.msk [vmem:[#allocation2 + $0x34] sm:$0xf] %vm669, %v618
      %684 = vst.msk [vmem:[#allocation2 + $0x38] sm:$0xf] %vm669, %v619
      %685 = vst.msk [vmem:[#allocation2 + $0x3c] sm:$0xf] %vm669, %v620
      %686 = vst.msk [vmem:[#allocation2 + $0x40] sm:$0xf] %vm669, %v621
      %687 = vst.msk [vmem:[#allocation2 + $0x44] sm:$0xf] %vm669, %v622
      %688 = vst.msk [vmem:[#allocation2 + $0x48] sm:$0xf] %vm669, %v623
      %689 = vst.msk [vmem:[#allocation2 + $0x4c] sm:$0xf] %vm669, %v624
      %690 = vst.msk [vmem:[#allocation2 + $0x50] sm:$0xf] %vm669, %v625
      %691 = vst.msk [vmem:[#allocation2 + $0x54] sm:$0xf] %vm669, %v626
      %692 = vst.msk [vmem:[#allocation2 + $0x58] sm:$0xf] %vm669, %v627
      %693 = vst.msk [vmem:[#allocation2 + $0x5c] sm:$0xf] %vm669, %v628
      %694 = vst.msk [vmem:[#allocation2 + $0x60] sm:$0xf] %vm669, %v629
      %695 = vst.msk [vmem:[#allocation2 + $0x64] sm:$0xf] %vm669, %v630
      %696 = vst.msk [vmem:[#allocation2 + $0x68] sm:$0xf] %vm669, %v631
      %697 = vst.msk [vmem:[#allocation2 + $0x6c] sm:$0xf] %vm669, %v632
      %698 = vst.msk [vmem:[#allocation2 + $0x70] sm:$0xf] %vm669, %v633
      %699 = vst.msk [vmem:[#allocation2 + $0x74] sm:$0xf] %vm669, %v634
      %700 = vst.msk [vmem:[#allocation2 + $0x78] sm:$0xf] %vm669, %v635
      %701 = vst.msk [vmem:[#allocation2 + $0x7c] sm:$0xf] %vm669, %v636
      loop: start=0, step=1, limit=8
      $region33: #{gla_forward.4} parent=31 // loop_pre_header
        _
      $region34: #{gla_forward.4} parent=31 // loop_header
        %s703 = sphi 0, %s707
        %p704 = scmp.ge.s32.totalorder %s703, 8
      $region35: #{gla_forward.4} parent=31 // loop_header_branch
        %706 = sbr.rel (%p704) target = $region39
      $region36: #{gla_forward.4} parent=31 // loop_body
        %s708 = sadd.s32 %s703, 7
        %p709 = scmp.lt.s32.totalorder %s708, 0
        %s710 = ssub.s32 0, %s708
        %s711 = scalar_select %p709, %s710, %s708
        %s712 = sand.u32 %s711, 7
        %s713 = ssub.s32 0, %s712
        %s714 = scalar_select %p709, %s713, %s712
        %p715 = scmp.ne.s32.totalorder %s714, 0
        %p716 = scmp.lt.s32.totalorder %s714, 0
        %p717 = pnand %p716, %p715
        %p718 = pneg %p717
        %s719 = sadd.s32 %s714, 8
        %s720 = scalar_select %p718, %s719, %s714
        %s721 = sadd.s32 %s703, 1
        %p722 = scmp.lt.s32.totalorder %s721, 0
        %s723 = ssub.s32 0, %s721
        %s724 = scalar_select %p722, %s723, %s721
        %s725 = sand.u32 %s724, 7
        %s726 = ssub.s32 0, %s725
        %s727 = scalar_select %p722, %s726, %s725
        %p728 = scmp.ne.s32.totalorder %s727, 0
        %p729 = scmp.lt.s32.totalorder %s727, 0
        %p730 = pnand %p729, %p728
        %p731 = pneg %p730
        %s732 = sadd.s32 %s727, 8
        %s733 = scalar_select %p731, %s732, %s727
        %s734 = smul.u32 %s703, 32
        %s735 = sshra.s32 %s734, 3
        %s736 = sand.u32 %s734, 7
        %s737 = smul.addr %s735, 4
        %s738 = scalar_lea.vmem %s230, %s737
        %v739 = vld [vmem:[%s738] sm:$0xf]
        %v740 = vld [vmem:[%s738 + $0x4] sm:$0xf]
        %v741 = vld [vmem:[%s738 + $0x8] sm:$0xf]
        %v742 = vld [vmem:[%s738 + $0xc] sm:$0xf]
        %s743 = smul.addr %s735, 4
        %s744 = scalar_lea.vmem [#allocation2], %s743
        %v745 = vld [vmem:[%s744] sm:$0xf]
        %v746 = vld [vmem:[%s744 + $0x4] sm:$0xf]
        %v747 = vld [vmem:[%s744 + $0x8] sm:$0xf]
        %v748 = vld [vmem:[%s744 + $0xc] sm:$0xf]
        %s749 = smul.u32 %s720, 32
        %s750 = sshra.s32 %s749, 3
        %s751 = sand.u32 %s749, 7
        %s752 = smul.addr %s750, 4
        %s753 = scalar_lea.vmem [#allocation2], %s752
        %v754 = vld [vmem:[%s753] sm:$0xf]
        %v755 = vld [vmem:[%s753 + $0x4] sm:$0xf]
        %v756 = vld [vmem:[%s753 + $0x8] sm:$0xf]
        %v757 = vld [vmem:[%s753 + $0xc] sm:$0xf]
        %s758 = smul.u32 %s733, 32
        %s759 = sshra.s32 %s758, 3
        %s760 = sand.u32 %s758, 7
        %s761 = smul.addr %s759, 4
        %s762 = scalar_lea.vmem [#allocation2], %s761
        %v763 = vld [vmem:[%s762] sm:$0xf]
        %v764 = vld [vmem:[%s762 + $0x4] sm:$0xf]
        %v765 = vld [vmem:[%s762 + $0x8] sm:$0xf]
        %v766 = vld [vmem:[%s762 + $0xc] sm:$0xf]
        %v771 = vunpack.c.l.b16 %v745
        %v772 = vunpack.c.l.b16 %v746
        %v773 = vunpack.c.l.b16 %v747
        %v774 = vunpack.c.l.b16 %v748
        %v775 = vpack.c.b16 %v772, %v771
        %v776 = vpack.c.b16 %v774, %v773
        %v781 = vunpack.c.l.b16 %v754
        %v782 = vunpack.c.l.b16 %v755
        %v783 = vunpack.c.l.b16 %v756
        %v784 = vunpack.c.l.b16 %v757
        %v785 = vpack.c.b16 %v782, %v781
        %v786 = vpack.c.b16 %v784, %v783
        %v791 = vunpack.c.l.b16 %v763
        %v792 = vunpack.c.l.b16 %v764
        %v793 = vunpack.c.l.b16 %v765
        %v794 = vunpack.c.l.b16 %v766
        %v795 = vpack.c.b16 %v792, %v791
        %v796 = vpack.c.b16 %v794, %v793
        %s797 = smul.addr %s735, 4
        %s798 = scalar_lea.vmem %s235, %s797
        %v799 = vld [vmem:[%s798] sm:$0xf]
        %v800 = vld [vmem:[%s798 + $0x4] sm:$0xf]
        %v801 = vld [vmem:[%s798 + $0x8] sm:$0xf]
        %v802 = vld [vmem:[%s798 + $0xc] sm:$0xf]
        %s803 = smul.addr %s750, 4
        %s804 = scalar_lea.vmem %s235, %s803
        %v805 = vld [vmem:[%s804] sm:$0xf]
        %v806 = vld [vmem:[%s804 + $0x4] sm:$0xf]
        %v807 = vld [vmem:[%s804 + $0x8] sm:$0xf]
        %v808 = vld [vmem:[%s804 + $0xc] sm:$0xf]
        %s809 = smul.addr %s759, 4
        %s810 = scalar_lea.vmem %s235, %s809
        %v811 = vld [vmem:[%s810] sm:$0xf]
        %v812 = vld [vmem:[%s810 + $0x4] sm:$0xf]
        %v813 = vld [vmem:[%s810 + $0x8] sm:$0xf]
        %v814 = vld [vmem:[%s810 + $0xc] sm:$0xf]
        %v819 = vunpack.c.l.b16 %v799
        %v820 = vunpack.c.l.b16 %v800
        %v821 = vunpack.c.l.b16 %v801
        %v822 = vunpack.c.l.b16 %v802
        %v823 = vpack.c.b16 %v820, %v819
        %v824 = vpack.c.b16 %v822, %v821
        %v831 = vunpack.c.l.b16 %v805
        %v832 = vunpack.c.l.b16 %v806
        %v833 = vunpack.c.l.b16 %v807
        %v834 = vunpack.c.l.b16 %v808
        %v835 = vpack.c.b16 %v832, %v831
        %v836 = vpack.c.b16 %v834, %v833
        %v843 = vunpack.c.l.b16 %v811
        %v844 = vunpack.c.l.b16 %v812
        %v845 = vunpack.c.l.b16 %v813
        %v846 = vunpack.c.l.b16 %v814
        %v847 = vpack.c.b16 %v844, %v843
        %v848 = vpack.c.b16 %v846, %v845
        %s851 = smul.addr %s735, 4
        %s852 = scalar_lea.vmem %s240, %s851
        %v853 = vld [vmem:[%s852] sm:$0xf]
        %v854 = vld [vmem:[%s852 + $0x4] sm:$0xf]
        %v855 = vld [vmem:[%s852 + $0x8] sm:$0xf]
        %v856 = vld [vmem:[%s852 + $0xc] sm:$0xf]
        %s857 = smul.addr %s750, 4
        %s858 = scalar_lea.vmem %s240, %s857
        %v859 = vld [vmem:[%s858] sm:$0xf]
        %v860 = vld [vmem:[%s858 + $0x4] sm:$0xf]
        %v861 = vld [vmem:[%s858 + $0x8] sm:$0xf]
        %v862 = vld [vmem:[%s858 + $0xc] sm:$0xf]
        %s863 = smul.addr %s759, 4
        %s864 = scalar_lea.vmem %s240, %s863
        %v865 = vld [vmem:[%s864] sm:$0xf]
        %v866 = vld [vmem:[%s864 + $0x4] sm:$0xf]
        %v867 = vld [vmem:[%s864 + $0x8] sm:$0xf]
        %v868 = vld [vmem:[%s864 + $0xc] sm:$0xf]
        %v873 = vunpack.c.l.b16 %v853
        %v874 = vunpack.c.l.b16 %v854
        %v875 = vunpack.c.l.b16 %v855
        %v876 = vunpack.c.l.b16 %v856
        %v877 = vpack.c.b16 %v874, %v873
        %v878 = vpack.c.b16 %v876, %v875
        %v885 = vunpack.c.l.b16 %v859
        %v886 = vunpack.c.l.b16 %v860
        %v887 = vunpack.c.l.b16 %v861
        %v888 = vunpack.c.l.b16 %v862
        %v889 = vpack.c.b16 %v886, %v885
        %v890 = vpack.c.b16 %v888, %v887
        %v897 = vunpack.c.l.b16 %v865
        %v898 = vunpack.c.l.b16 %v866
        %v899 = vunpack.c.l.b16 %v867
        %v900 = vunpack.c.l.b16 %v868
        %v901 = vpack.c.b16 %v898, %v897
        %v902 = vpack.c.b16 %v900, %v899
        %v905 = vunpack.c.l.bf16 %v877
        %v906 = vunpack.c.h.bf16 %v877
        %v907 = vunpack.c.l.bf16 %v878
        %v908 = vunpack.c.h.bf16 %v878
        %v909 = vunpack.c.l.bf16 %v889
        %v910 = vunpack.c.h.bf16 %v889
        %v911 = vunpack.c.l.bf16 %v890
        %v912 = vunpack.c.h.bf16 %v890
        %v913 = vunpack.c.l.bf16 %v901
        %v914 = vunpack.c.h.bf16 %v901
        %v915 = vunpack.c.l.bf16 %v902
        %v916 = vunpack.c.h.bf16 %v902
        %917 = vxpose.xlu0.b32.start [1/16] %v905, 128
        %918 = vxpose.xlu0.b32.cont [2/16] %v906, 128
        %919 = vxpose.xlu0.b32.cont [3/16] %v907, 128
        %920 = vxpose.xlu0.b32.cont [4/16] %v908, 128
        %921 = vxpose.xlu0.b32.cont [5/16] %v909, 128
        %922 = vxpose.xlu0.b32.cont [6/16] %v910, 128
        %923 = vxpose.xlu0.b32.cont [7/16] %v911, 128
        %924 = vxpose.xlu0.b32.cont [8/16] %v912, 128
        %925 = vxpose.xlu0.b32.cont [9/16] %v913, 128
        %926 = vxpose.xlu0.b32.cont [10/16] %v914, 128
        %927 = vxpose.xlu0.b32.cont [11/16] %v915, 128
        %928 = vxpose.xlu0.b32.cont [12/16] %v916, 128
        %929 = vxpose.xlu0.b32.cont [13/16] 0.0, 128
        %930 = vxpose.xlu0.b32.cont [14/16] 0.0, 128
        %931 = vxpose.xlu0.b32.cont [15/16] 0.0, 128
        %932 = vxpose.xlu0.b32.end [16/16] 0.0, 128
        %v933 = vpop.trf.xlu0
        %v934 = vpop.trf.xlu0
        %v935 = vpop.trf.xlu0
        %v936 = vpop.trf.xlu0
        %v937 = vpop.trf.xlu0
        %v938 = vpop.trf.xlu0
        %v939 = vpop.trf.xlu0
        %v940 = vpop.trf.xlu0
        %v941 = vpop.trf.xlu0
        %v942 = vpop.trf.xlu0
        %v943 = vpop.trf.xlu0
        %v944 = vpop.trf.xlu0
        %v945 = vpop.trf.xlu0
        %v946 = vpop.trf.xlu0
        %v947 = vpop.trf.xlu0
        %v948 = vpop.trf.xlu0
        %v953 = vunpack.c.l.b16 %v739
        %v954 = vunpack.c.l.b16 %v740
        %v955 = vunpack.c.l.b16 %v741
        %v956 = vunpack.c.l.b16 %v742
        %v957 = vpack.c.b16 %v954, %v953
        %v958 = vpack.c.b16 %v956, %v955
        %v960 = vsel %vm348, %v957, 0
        %v963 = vsel %vm348, %v958, 0
        %v966 = vsel %vm348, %v775, 0
        %v969 = vsel %vm348, %v776, 0
        %v972 = vsel %vm348, %v785, 0
        %v975 = vsel %vm348, %v786, 0
        %v978 = vsel %vm348, %v795, 0
        %v981 = vsel %vm348, %v796, 0
        %983 = vmatprep.subr.bf16.mxu0 0
        %984 = vmatpush1.bf16.xpose.msra.mxu0 0
        %985 = vmatprep.subr.bf16.mxu0 0
        %986 = vmatpush1.bf16.xpose.msra.mxu0 0
        %987 = vmatprep.subr.bf16.mxu0 0
        %988 = vmatpush1.bf16.xpose.msra.mxu0 %v981
        %989 = vmatprep.subr.bf16.mxu0 0
        %990 = vmatpush1.bf16.xpose.msra.mxu0 %v978
        %991 = vmatprep.subr.bf16.mxu0 0
        %992 = vmatpush1.bf16.xpose.msra.mxu0 %v975
        %993 = vmatprep.subr.bf16.mxu0 0
        %994 = vmatpush1.bf16.xpose.msra.mxu0 %v972
        %995 = vmatprep.subr.bf16.mxu0 0
        %996 = vmatpush1.bf16.xpose.msra.mxu0 %v969
        %997 = vmatprep.subr.bf16.mxu0 0
        %998 = vmatpush1.bf16.xpose.msra.mxu0 %v966
        %999 = vmatprep.subr.bf16.mxu0 0
        %1000 = vmatpush2.bf16.xpose.msra.mxu0 0
        %1001 = vmatprep.subr.bf16.mxu0 0
        %1002 = vmatpush2.bf16.xpose.msra.mxu0 0
        %1003 = vmatprep.subr.bf16.mxu0 0
        %1004 = vmatpush2.bf16.xpose.msra.mxu0 0
        %1005 = vmatprep.subr.bf16.mxu0 0
        %1006 = vmatpush2.bf16.xpose.msra.mxu0 0
        %1007 = vmatprep.subr.bf16.mxu0 0
        %1008 = vmatpush2.bf16.xpose.msra.mxu0 0
        %1009 = vmatprep.subr.bf16.mxu0 0
        %1010 = vmatpush2.bf16.xpose.msra.mxu0 0
        %1011 = vmatprep.subr.bf16.mxu0 0
        %1012 = vmatpush2.bf16.xpose.msra.mxu0 0
        %1013 = vmatprep.subr.bf16.mxu0 0
        %1014 = vmatpush2.bf16.xpose.msra.mxu0 0
        %1015 = vmatprep.mubr.bf16.mxu0 0
        %1016 = vmatmul.mubr.bf16.gmra.mxu0 %v960
        %v1017 = vpop.f32.mrf.mxu0
        %v1018 = vadd.f32 %v933, %v1017
        %v1019 = vpop.f32.mrf.mxu0
        %v1020 = vpop.f32.mrf.mxu0
        %v1021 = vadd.f32 %v934, %v1020
        %v1022 = vpop.f32.mrf.mxu0
        %1023 = vmatprep.mubr.bf16.mxu0 0
        %1024 = vmatmul.mubr.bf16.gmra.mxu0 %v963
        %v1025 = vpop.f32.mrf.mxu0
        %v1026 = vadd.f32 %v935, %v1025
        %v1027 = vpop.f32.mrf.mxu0
        %v1028 = vpop.f32.mrf.mxu0
        %v1029 = vadd.f32 %v936, %v1028
        %v1030 = vpop.f32.mrf.mxu0
        %1031 = vdwg.mxu0
        %vm1032 = vcmask 785408
        %v1033 = vsel %vm1032, %v1018, -inf
        %1034 = vmax.xlane.f32.xlu0 %v1033
        %v1035 = vpop.xlane.xlu0 %1034
        %v1036 = vsel %vm1032, %v1021, -inf
        %1037 = vmax.xlane.f32.xlu0 %v1036
        %v1038 = vpop.xlane.xlu0 %1037
        %v1039 = vsel %vm1032, %v1026, -inf
        %1040 = vmax.xlane.f32.xlu0 %v1039
        %v1041 = vpop.xlane.xlu0 %1040
        %v1042 = vsel %vm1032, %v1029, -inf
        %1043 = vmax.xlane.f32.xlu0 %v1042
        %v1044 = vpop.xlane.xlu0 %1043
        %v1045 = vsub.f32 %v1018, %v1035
        %v1046 = vsub.f32 %v1021, %v1038
        %v1047 = vsub.f32 %v1026, %v1041
        %v1048 = vsub.f32 %v1029, %v1044
        %v1049 = vmul.f32 %v1045, 1.442695
        %v1050 = vpow.pop %v1049
        %v1051 = vmul.f32 %v1046, 1.442695
        %v1052 = vpow.pop %v1051
        %v1053 = vmul.f32 %v1047, 1.442695
        %v1054 = vpow.pop %v1053
        %v1055 = vmul.f32 %v1048, 1.442695
        %v1056 = vpow.pop %v1055
        %v1057 = vsel %vm1032, %v1050, 0.0
        %1058 = vadd.xlane.f32.xlu0 %v1057
        %v1059 = vpop.xlane.xlu0 %1058
        %v1060 = vsel %vm1032, %v1052, 0.0
        %1061 = vadd.xlane.f32.xlu0 %v1060
        %v1062 = vpop.xlane.xlu0 %1061
        %v1063 = vsel %vm1032, %v1054, 0.0
        %1064 = vadd.xlane.f32.xlu0 %v1063
        %v1065 = vpop.xlane.xlu0 %1064
        %v1066 = vsel %vm1032, %v1056, 0.0
        %1067 = vadd.xlane.f32.xlu0 %v1066
        %v1068 = vpop.xlane.xlu0 %1067
        %v1069 = vpack.c.bf16 %v1052, %v1050
        %v1070 = vpack.c.bf16 %v1056, %v1054
        %v1072 = vsel %vm1032, %v1069, 0
        %v1075 = vsel %vm1032, %v1070, 0
        %1077 = vmatprep.subr.bf16.mxu0 0
        %1078 = vmatpush1.bf16.msra.mxu0 0
        %1079 = vmatprep.subr.bf16.mxu0 0
        %1080 = vmatpush1.bf16.msra.mxu0 0
        %1081 = vmatprep.subr.bf16.mxu0 0
        %1082 = vmatpush1.bf16.msra.mxu0 %v848
        %1083 = vmatprep.subr.bf16.mxu0 0
        %1084 = vmatpush1.bf16.msra.mxu0 %v847
        %1085 = vmatprep.subr.bf16.mxu0 0
        %1086 = vmatpush1.bf16.msra.mxu0 %v836
        %1087 = vmatprep.subr.bf16.mxu0 0
        %1088 = vmatpush1.bf16.msra.mxu0 %v835
        %1089 = vmatprep.subr.bf16.mxu0 0
        %1090 = vmatpush1.bf16.msra.mxu0 %v824
        %1091 = vmatprep.subr.bf16.mxu0 0
        %1092 = vmatpush1.bf16.msra.mxu0 %v823
        %1093 = vmatprep.subr.bf16.mxu0 0
        %1094 = vmatpush2.bf16.msra.mxu0 0
        %1095 = vmatprep.subr.bf16.mxu0 0
        %1096 = vmatpush2.bf16.msra.mxu0 0
        %1097 = vmatprep.subr.bf16.mxu0 0
        %1098 = vmatpush2.bf16.msra.mxu0 0
        %1099 = vmatprep.subr.bf16.mxu0 0
        %1100 = vmatpush2.bf16.msra.mxu0 0
        %1101 = vmatprep.subr.bf16.mxu0 0
        %1102 = vmatpush2.bf16.msra.mxu0 0
        %1103 = vmatprep.subr.bf16.mxu0 0
        %1104 = vmatpush2.bf16.msra.mxu0 0
        %1105 = vmatprep.subr.bf16.mxu0 0
        %1106 = vmatpush2.bf16.msra.mxu0 0
        %1107 = vmatprep.subr.bf16.mxu0 0
        %1108 = vmatpush2.bf16.msra.mxu0 0
        %1109 = vmatprep.mubr.bf16.mxu0 0
        %1110 = vmatmul.mubr.bf16.gmra.mxu0 %v1072
        %v1111 = vpop.f32.mrf.mxu0
        %v1112 = vadd.f32 0.0, %v1111
        %v1113 = vpop.f32.mrf.mxu0
        %v1114 = vpop.f32.mrf.mxu0
        %v1115 = vadd.f32 0.0, %v1114
        %v1116 = vpop.f32.mrf.mxu0
        %1117 = vmatprep.mubr.bf16.mxu0 0
        %1118 = vmatmul.mubr.bf16.gmra.mxu0 %v1075
        %v1119 = vpop.f32.mrf.mxu0
        %v1120 = vadd.f32 0.0, %v1119
        %v1121 = vpop.f32.mrf.mxu0
        %v1122 = vpop.f32.mrf.mxu0
        %v1123 = vadd.f32 0.0, %v1122
        %v1124 = vpop.f32.mrf.mxu0
        %1125 = vdwg.mxu0
        %v1126 = vrcp.pop %v1059
        %v1127 = vrcp.pop %v1062
        %v1128 = vrcp.pop %v1065
        %v1129 = vrcp.pop %v1068
        %v1130 = vmul.f32 %v1112, %v1126
        %v1131 = vmul.f32 %v1115, %v1127
        %v1132 = vmul.f32 %v1120, %v1128
        %v1133 = vmul.f32 %v1123, %v1129
        %s1134 = scalar_lea.vmem %s245, %s734
        %vm1135 = vcmask 130048
        %1136 = vst.msk [vmem:[%s1134] sm:$0xff] %vm1135, %v1130
        %1137 = vst.msk [vmem:[%s1134 + $0x8] sm:$0xff] %vm1135, %v1131
        %1138 = vst.msk [vmem:[%s1134 + $0x10] sm:$0xff] %vm1135, %v1132
        %1139 = vst.msk [vmem:[%s1134 + $0x18] sm:$0xff] %vm1135, %v1133
        %v1140 = vlog2.pop %v1059
        %v1141 = vmul.f32 %v1140, 0.6931472
        %v1142 = vlog2.pop %v1062
        %v1143 = vmul.f32 %v1142, 0.6931472
        %v1144 = vlog2.pop %v1065
        %v1145 = vmul.f32 %v1144, 0.6931472
        %v1146 = vlog2.pop %v1068
        %v1147 = vmul.f32 %v1146, 0.6931472
        %v1148 = vadd.f32 %v1035, %v1141
        %v1149 = vadd.f32 %v1038, %v1143
        %v1150 = vadd.f32 %v1041, %v1145
        %v1151 = vadd.f32 %v1044, %v1147
        %s1152 = scalar_lea.vmem %s250, %s734
        %vm1153 = vcmask 7168
        %1154 = vst.msk [vmem:[%s1152] sm:$0xff] %vm1153, %v1148
        %1155 = vst.msk [vmem:[%s1152 + $0x8] sm:$0xff] %vm1153, %v1149
        %1156 = vst.msk [vmem:[%s1152 + $0x10] sm:$0xff] %vm1153, %v1150
        %1157 = vst.msk [vmem:[%s1152 + $0x18] sm:$0xff] %vm1153, %v1151
      $region37: #{gla_forward.4} parent=31 // loop_footer
        %s707 = sadd.s32 1, %s703
      $region38: #{gla_forward.4} parent=31 // loop_footer_branch
        %702 = sbr.rel target = $region34
      $region39: #{gla_forward.4} parent=31 // loop_exit
        _
      %p1158 = scmp.lt.s32.totalorder %s16, 7
      %s1159 = scalar_select %p1158, %s16, 7
      %s1160 = smul.addr %s1159, 32
      %s1161 = smul.addr %s1160, 8
      %s1162 = scalar_lea.vmem %s3, %s1161
      %p1163 = scmp.lt.s32.totalorder %s16, 7
      %s1164 = scalar_select %p1163, %s16, 7
      %s1165 = smul.addr %s1164, 32
      %s1166 = smul.addr %s1165, 8
      %s1167 = scalar_lea.vmem %s4, %s1166
      // Predicated region
      $region40: #{gla_forward.4} parent=31 // pred_check
        %p1168 = pneg %p112
      $region41: #{gla_forward.4} parent=31 // pred_check_branch
        %1170 = sbr.rel (%p1168) target = $region43
      $region42: #{gla_forward.4} parent=31 // pred_region
        _
      $region43: #{gla_forward.4} parent=31 // pred_fallthru
        _
      // Predicated region
      $region44: #{gla_forward.4} parent=31 // pred_check
        %p1171 = pneg %p138
      $region45: #{gla_forward.4} parent=31 // pred_check_branch
        %1173 = sbr.rel (%p1171) target = $region47
      $region46: #{gla_forward.4} parent=31 // pred_region
        _
      $region47: #{gla_forward.4} parent=31 // pred_fallthru
        _
    $region32: #{gla_forward.4} parent=5 // pred_fallthru
      _
    %p1174 = scmp.le.s32.totalorder 2, %s11
    // Predicated region
    $region48: #{gla_forward.4} parent=5 // pred_check
      %p1175 = pneg %p1174
    $region49: #{gla_forward.4} parent=5 // pred_check_branch
      %1177 = sbr.rel (%p1175) target = $region51
    $region50: #{gla_forward.4} parent=5 // pred_region
      %s1178 = ssub.s32 %s11, 2
      // Predicated region
      $region52: #{gla_forward.4} parent=50 // pred_check
        %p1179 = pneg %p118
      $region53: #{gla_forward.4} parent=50 // pred_check_branch
        %1181 = sbr.rel (%p1179) target = $region55
      $region54: #{gla_forward.4} parent=50 // pred_region
        %p1182 = scmp.lt.s32.totalorder %s17, 7
        %s1183 = scalar_select %p1182, %s17, 7
        %s1184 = smul.addr %s1183, 32
        %s1185 = smul.addr %s1184, 8
        %s1186 = scalar_lea.vmem %s3, %s1185
      $region55: #{gla_forward.4} parent=50 // pred_fallthru
        _
      // Predicated region
      $region56: #{gla_forward.4} parent=50 // pred_check
        %p1187 = pneg %p144
      $region57: #{gla_forward.4} parent=50 // pred_check_branch
        %1189 = sbr.rel (%p1187) target = $region59
      $region58: #{gla_forward.4} parent=50 // pred_region
        %p1190 = scmp.lt.s32.totalorder %s17, 7
        %s1191 = scalar_select %p1190, %s17, 7
        %s1192 = smul.addr %s1191, 32
        %s1193 = smul.addr %s1192, 8
        %s1194 = scalar_lea.vmem %s4, %s1193
      $region59: #{gla_forward.4} parent=50 // pred_fallthru
        _
    $region51: #{gla_forward.4} parent=5 // pred_fallthru
      _
  $region6: #{gla_forward.4} parent=0 // loop_footer
    %s15 = sadd.s32 1, %s11
  $region7: #{gla_forward.4} parent=0 // loop_footer_branch
    %10 = sbr.rel target = $region3
  $region8: #{gla_forward.4} parent=0 // loop_exit
    _

// kernel: gla_forward.5
$region0: #{gla_forward.5}
  #allocation0 [shape = 'u32[]', space=smem, size = 0x4, offset = 0x4, fixed_abs, tag = 'smem constant byte address 0x4 - core index']
  #allocation1 [shape = 'u32[144,128]{1,0:T(1,128)}', space=vmem, size = 0x12000, scoped, tag = 'internal scratch']
  %s0 = inlined_call_operand.vmem [shape: f32[2,4,256,16], index: 0, kind: input, shape index: {}]
  %s1 = inlined_call_operand.vmem [shape: f32[2,4,256], index: 1, kind: input, shape index: {}]
  %s2 = inlined_call_operand.vmem [shape: f32[2,16,256], index: 2, kind: input, shape index: {}]
  %s3 = inlined_call_operand.vmem [shape: f32[2,16,256], index: 3, kind: output, shape index: {}]
  %s4 = sld [smem:[#allocation0]]
  $region45: #{gla_forward.5} parent=0
    _
  %s6 = ssub.s32 1, %s4
  %s7 = scalar_select 0, %s6, %s4
  loop: start=0, step=1, limit=4
  $region2: #{gla_forward.5} parent=0 // loop_pre_header
    _
  $region3: #{gla_forward.5} parent=0 // loop_header
    %s9 = sphi 0, %s13
    %p10 = scmp.ge.s32.totalorder %s9, 4
    %s16 = sphi 0, %s28
    %s17 = sphi 0, %s24
    %s18 = sphi 0, %s16
    %s19 = sphi 0, %s17
    %s20 = sphi 0, %s18
    %s21 = sphi 0, %s19
    %s33 = sphi 0, %s35
    %s36 = sphi 0, %s33
    %s37 = sphi 0, %s36
    %s53 = sphi 0, %s37
    %s61 = sphi 0, %s63
    %s64 = sphi 0, %s61
    %s65 = sphi 0, %s64
    %s81 = sphi 0, %s65
    %s89 = sphi 0, %s91
    %s92 = sphi 0, %s89
    %s93 = sphi 0, %s92
    %s109 = sphi 0, %s93
    %s117 = sphi 0, %s119
    %s120 = sphi 0, %s117
    %s121 = sphi 0, %s120
    %s137 = sphi 0, %s121
  $region4: #{gla_forward.5} parent=0 // loop_header_branch
    %12 = sbr.rel (%p10) target = $region8
  $region5: #{gla_forward.5} parent=0 // loop_body
    %s14 = ssub.s32 %s9, 1
    %s15 = ssub.s32 %s9, 2
    %s22 = sadd.s32 1, %s17
    %p23 = scmp.ge.s32.totalorder %s22, 1
    %s24 = scalar_select %p23, 0, %s22
    %s25 = sadd.s32 1, %s16
    %s26 = scalar_select %p23, %s25, %s16
    %p27 = scmp.ge.s32.totalorder %s26, 2
    %s28 = scalar_select %p27, 0, %s26
    %s29 = ssub.s32 %s16, %s28
    %s30 = ssub.s32 %s17, %s24
    %s31 = sor.u32 %s29, %s30
    %p32 = scmp.eq.s32.totalorder %s31, 0
    %s34 = sadd.s32 %s33, 1
    %s35 = scalar_select %p32, %s33, %s34
    %p38 = pneg %p32
    %p39 = scmp.eq.s32.totalorder %s9, 1
    %p40 = por %p38, %p39
    %p41 = scmp.ne.s32.totalorder %s33, %s36
    %p42 = scmp.eq.s32.totalorder %s9, 0
    %p43 = por %p41, %p42
    %p44 = scmp.ne.s32.totalorder %s33, %s36
    %p45 = scmp.eq.s32.totalorder %s14, 1
    %p46 = por %p44, %p45
    %p47 = scmp.ne.s32.totalorder %s36, %s37
    %p48 = scmp.eq.s32.totalorder %s14, 0
    %p49 = por %p47, %p48
    %p50 = scmp.ne.s32.totalorder %s36, %s37
    %p51 = scmp.eq.s32.totalorder %s15, 1
    %p52 = por %p50, %p51
    %p54 = scmp.ne.s32.totalorder %s37, %s53
    %p55 = scmp.eq.s32.totalorder %s15, 0
    %p56 = por %p54, %p55
    %s57 = ssub.s32 %s16, %s28
    %s58 = ssub.s32 %s17, %s24
    %s59 = sor.u32 %s57, %s58
    %p60 = scmp.eq.s32.totalorder %s59, 0
    %s62 = sadd.s32 %s61, 1
    %s63 = scalar_select %p60, %s61, %s62
    %p66 = pneg %p60
    %p67 = scmp.eq.s32.totalorder %s9, 1
    %p68 = por %p66, %p67
    %p69 = scmp.ne.s32.totalorder %s61, %s64
    %p70 = scmp.eq.s32.totalorder %s9, 0
    %p71 = por %p69, %p70
    %p72 = scmp.ne.s32.totalorder %s61, %s64
    %p73 = scmp.eq.s32.totalorder %s14, 1
    %p74 = por %p72, %p73
    %p75 = scmp.ne.s32.totalorder %s64, %s65
    %p76 = scmp.eq.s32.totalorder %s14, 0
    %p77 = por %p75, %p76
    %p78 = scmp.ne.s32.totalorder %s64, %s65
    %p79 = scmp.eq.s32.totalorder %s15, 1
    %p80 = por %p78, %p79
    %p82 = scmp.ne.s32.totalorder %s65, %s81
    %p83 = scmp.eq.s32.totalorder %s15, 0
    %p84 = por %p82, %p83
    %s85 = ssub.s32 %s16, %s28
    %s86 = ssub.s32 %s17, %s24
    %s87 = sor.u32 %s85, %s86
    %p88 = scmp.eq.s32.totalorder %s87, 0
    %s90 = sadd.s32 %s89, 1
    %s91 = scalar_select %p88, %s89, %s90
    %p94 = pneg %p88
    %p95 = scmp.eq.s32.totalorder %s9, 1
    %p96 = por %p94, %p95
    %p97 = scmp.ne.s32.totalorder %s89, %s92
    %p98 = scmp.eq.s32.totalorder %s9, 0
    %p99 = por %p97, %p98
    %p100 = scmp.ne.s32.totalorder %s89, %s92
    %p101 = scmp.eq.s32.totalorder %s14, 1
    %p102 = por %p100, %p101
    %p103 = scmp.ne.s32.totalorder %s92, %s93
    %p104 = scmp.eq.s32.totalorder %s14, 0
    %p105 = por %p103, %p104
    %p106 = scmp.ne.s32.totalorder %s92, %s93
    %p107 = scmp.eq.s32.totalorder %s15, 1
    %p108 = por %p106, %p107
    %p110 = scmp.ne.s32.totalorder %s93, %s109
    %p111 = scmp.eq.s32.totalorder %s15, 0
    %p112 = por %p110, %p111
    %s113 = ssub.s32 %s16, %s28
    %s114 = ssub.s32 %s17, %s24
    %s115 = sor.u32 %s113, %s114
    %p116 = scmp.eq.s32.totalorder %s115, 0
    %s118 = sadd.s32 %s117, 1
    %s119 = scalar_select %p116, %s117, %s118
    %p122 = pneg %p116
    %p123 = scmp.eq.s32.totalorder %s9, 1
    %p124 = por %p122, %p123
    %p125 = scmp.ne.s32.totalorder %s117, %s120
    %p126 = scmp.eq.s32.totalorder %s9, 0
    %p127 = por %p125, %p126
    %p128 = scmp.ne.s32.totalorder %s117, %s120
    %p129 = scmp.eq.s32.totalorder %s14, 1
    %p130 = por %p128, %p129
    %p131 = scmp.ne.s32.totalorder %s120, %s121
    %p132 = scmp.eq.s32.totalorder %s14, 0
    %p133 = por %p131, %p132
    %p134 = scmp.ne.s32.totalorder %s120, %s121
    %p135 = scmp.eq.s32.totalorder %s15, 1
    %p136 = por %p134, %p135
    %p138 = scmp.ne.s32.totalorder %s121, %s137
    %p139 = scmp.eq.s32.totalorder %s15, 0
    %p140 = por %p138, %p139
    %p141 = scmp.le.s32.totalorder 1, %s9
    %p142 = scmp.lt.s32.totalorder %s9, 3
    %p143 = pnand %p141, %p142
    %p144 = pneg %p143
    // Predicated region
    $region9: #{gla_forward.5} parent=5 // pred_check
      _
    $region10: #{gla_forward.5} parent=5 // pred_check_branch
      %146 = sbr.rel (%p143) target = $region12
    $region11: #{gla_forward.5} parent=5 // pred_region
      %s147 = ssub.s32 %s9, 1
    $region12: #{gla_forward.5} parent=5 // pred_fallthru
      _
    %p148 = scmp.lt.s32.totalorder %s9, 2
    // Predicated region
    $region13: #{gla_forward.5} parent=5 // pred_check
      %p149 = pneg %p148
    $region14: #{gla_forward.5} parent=5 // pred_check_branch
      %151 = sbr.rel (%p149) target = $region16
    $region15: #{gla_forward.5} parent=5 // pred_region
      // Predicated region
      $region17: #{gla_forward.5} parent=15 // pred_check
        %p152 = pneg %p43
      $region18: #{gla_forward.5} parent=15 // pred_check_branch
        %154 = sbr.rel (%p152) target = $region20
      $region19: #{gla_forward.5} parent=15 // pred_region
        %s155 = smul.u32 32, %s17
        %p156 = scmp.lt.s32.totalorder %s16, 1
        %s157 = scalar_select %p156, %s16, 1
        %p158 = scmp.lt.s32.totalorder %s155, 31
        %s159 = scalar_select %p158, %s155, 31
        %s160 = smul.addr %s157, 128
        %s161 = sadd.s32 %s159, %s160
        %s162 = smul.addr %s161, 8
        %s163 = scalar_lea.vmem %s0, %s162
        %s164 = smul.u32 32, %s17
      $region20: #{gla_forward.5} parent=15 // pred_fallthru
        _
      // Predicated region
      $region21: #{gla_forward.5} parent=15 // pred_check
        %p165 = pneg %p71
      $region22: #{gla_forward.5} parent=15 // pred_check_branch
        %167 = sbr.rel (%p165) target = $region24
      $region23: #{gla_forward.5} parent=15 // pred_region
        %s168 = smul.u32 2, %s17
        %p169 = scmp.lt.s32.totalorder %s16, 1
        %s170 = scalar_select %p169, %s16, 1
        %p171 = scmp.lt.s32.totalorder %s168, 1
        %s172 = scalar_select %p171, %s168, 1
        %s173 = smul.addr %s170, 2
        %s174 = sadd.s32 %s172, %s173
        %s175 = smul.addr %s174, 4
        %s176 = scalar_lea.vmem %s1, %s175
        %s177 = smul.u32 2, %s17
      $region24: #{gla_forward.5} parent=15 // pred_fallthru
        _
      // Predicated region
      $region25: #{gla_forward.5} parent=15 // pred_check
        %p178 = pneg %p99
      $region26: #{gla_forward.5} parent=15 // pred_check_branch
        %180 = sbr.rel (%p178) target = $region28
      $region27: #{gla_forward.5} parent=15 // pred_region
        %s181 = smul.u32 2, %s17
        %p182 = scmp.lt.s32.totalorder %s16, 1
        %s183 = scalar_select %p182, %s16, 1
        %p184 = scmp.lt.s32.totalorder %s181, 1
        %s185 = scalar_select %p184, %s181, 1
        %s186 = smul.addr %s183, 4
        %s187 = sadd.s32 %s185, %s186
        %s188 = smul.addr %s187, 8
        %s189 = scalar_lea.vmem %s2, %s188
        %s190 = smul.u32 2, %s17
      $region28: #{gla_forward.5} parent=15 // pred_fallthru
        _
    $region16: #{gla_forward.5} parent=5 // pred_fallthru
      _
    %p191 = scmp.le.s32.totalorder 1, %s9
    %p192 = scmp.lt.s32.totalorder %s9, 3
    %p193 = pnand %p191, %p192
    %p194 = pneg %p193
    // Predicated region
    $region29: #{gla_forward.5} parent=5 // pred_check
      _
    $region30: #{gla_forward.5} parent=5 // pred_check_branch
      %196 = sbr.rel (%p193) target = $region32
    $region31: #{gla_forward.5} parent=5 // pred_region
      %s197 = ssub.s32 %s9, 1
      %s198 = smul.u32 32, %s19
      %p199 = scmp.lt.s32.totalorder %s18, 1
      %s200 = scalar_select %p199, %s18, 1
      %p201 = scmp.lt.s32.totalorder %s198, 31
      %s202 = scalar_select %p201, %s198, 31
      %s203 = smul.addr %s200, 128
      %s204 = sadd.s32 %s202, %s203
      %s205 = smul.addr %s204, 8
      %s206 = scalar_lea.vmem %s0, %s205
      %p207 = pneg %p49
      %p208 = pneg %p46
      %s209 = smul.u32 2, %s19
      %p210 = scmp.lt.s32.totalorder %s18, 1
      %s211 = scalar_select %p210, %s18, 1
      %p212 = scmp.lt.s32.totalorder %s209, 1
      %s213 = scalar_select %p212, %s209, 1
      %s214 = smul.addr %s211, 2
      %s215 = sadd.s32 %s213, %s214
      %s216 = smul.addr %s215, 4
      %s217 = scalar_lea.vmem %s1, %s216
      %p218 = pneg %p77
      %p219 = pneg %p74
      %s220 = smul.u32 2, %s19
      %p221 = scmp.lt.s32.totalorder %s18, 1
      %s222 = scalar_select %p221, %s18, 1
      %p223 = scmp.lt.s32.totalorder %s220, 1
      %s224 = scalar_select %p223, %s220, 1
      %s225 = smul.addr %s222, 4
      %s226 = sadd.s32 %s224, %s225
      %s227 = smul.addr %s226, 8
      %s228 = scalar_lea.vmem %s2, %s227
      %p229 = pneg %p105
      %p230 = pneg %p102
      %p231 = pneg %p133
      %p232 = pneg %p130
      %s233 = smul.u32 2, %s19
      %p234 = scmp.lt.s32.totalorder %s18, 1
      %s235 = scalar_select %p234, %s18, 1
      %p236 = scmp.lt.s32.totalorder %s233, 1
      %s237 = scalar_select %p236, %s233, 1
      %s238 = smul.addr %s235, 4
      %s239 = sadd.s32 %s237, %s238
      %s240 = smul.addr %s239, 8
      %s241 = scalar_lea.vmem %s3, %s240
      %s242 = smul.u32 32, %s19
      %p243 = scmp.lt.s32.totalorder %s18, 1
      %s244 = scalar_select %p243, %s18, 1
      %p245 = scmp.lt.s32.totalorder %s242, 31
      %s246 = scalar_select %p245, %s242, 31
      %s247 = smul.addr %s244, 128
      %s248 = sadd.s32 %s246, %s247
      %s249 = smul.addr %s248, 8
      %s250 = scalar_lea.vmem %s0, %s249
      %s251 = smul.u32 32, %s19
      %s252 = smul.u32 2, %s19
      %p253 = scmp.lt.s32.totalorder %s18, 1
      %s254 = scalar_select %p253, %s18, 1
      %p255 = scmp.lt.s32.totalorder %s252, 1
      %s256 = scalar_select %p255, %s252, 1
      %s257 = smul.addr %s254, 2
      %s258 = sadd.s32 %s256, %s257
      %s259 = smul.addr %s258, 4
      %s260 = scalar_lea.vmem %s1, %s259
      %s261 = smul.u32 2, %s19
      %s262 = smul.u32 2, %s19
      %p263 = scmp.lt.s32.totalorder %s18, 1
      %s264 = scalar_select %p263, %s18, 1
      %p265 = scmp.lt.s32.totalorder %s262, 1
      %s266 = scalar_select %p265, %s262, 1
      %s267 = smul.addr %s264, 4
      %s268 = sadd.s32 %s266, %s267
      %s269 = smul.addr %s268, 8
      %s270 = scalar_lea.vmem %s2, %s269
      %s271 = smul.u32 2, %s19
      %s272 = smul.u32 2, %s19
      %p273 = scmp.lt.s32.totalorder %s18, 1
      %s274 = scalar_select %p273, %s18, 1
      %p275 = scmp.lt.s32.totalorder %s272, 1
      %s276 = scalar_select %p275, %s272, 1
      %s277 = smul.addr %s274, 4
      %s278 = sadd.s32 %s276, %s277
      %s279 = smul.addr %s278, 8
      %s280 = scalar_lea.vmem %s3, %s279
      %s281 = smul.u32 2, %s19
      %v282 = vld [vmem:[%s260] sm:$0xff]
      %v284 = vcombine.high %v282, %v282
      %vm286 = vcmask 1043456
      %v287 = vsel %vm286, %v282, -inf
      %v288 = vrot.slane %v287, 4
      %v289 = vmax.f32 %v287, %v288
      %v290 = vrot.slane %v289, 2
      %v291 = vmax.f32 %v289, %v290
      %v292 = vrot.slane %v291, 1
      %v293 = vmax.f32 %v291, %v292
      %v294 = vsel %vm286, %v284, -inf
      %v295 = vrot.slane %v294, 4
      %v296 = vmax.f32 %v294, %v295
      %v297 = vrot.slane %v296, 2
      %v298 = vmax.f32 %v296, %v297
      %v299 = vrot.slane %v298, 1
      %v300 = vmax.f32 %v298, %v299
      %v303 = vcombine.low %v293, %v300
      %v305 = vsub.f32 %v282, %v303
      %v306 = vmul.f32 %v305, 1.442695
      %v307 = vpow.pop %v306
      %v309 = vcombine.high %v307, %v307
      %v311 = vsel %vm286, %v307, 0.0
      %v312 = vrot.slane %v311, 4
      %v313 = vadd.f32 %v311, %v312
      %v314 = vrot.slane %v313, 2
      %v315 = vadd.f32 %v313, %v314
      %v316 = vrot.slane %v315, 1
      %v317 = vadd.f32 %v315, %v316
      %v318 = vsel %vm286, %v309, 0.0
      %v319 = vrot.slane %v318, 4
      %v320 = vadd.f32 %v318, %v319
      %v321 = vrot.slane %v320, 2
      %v322 = vadd.f32 %v320, %v321
      %v323 = vrot.slane %v322, 1
      %v324 = vadd.f32 %v322, %v323
      %v325 = vrcp.pop %v317
      %v326 = vrcp.pop %v324
      %v329 = vcombine.low %v325, %v326
      %v331 = vmul.f32 %v307, %v329
      %v332 = vld [vmem:[%s250] sm:$0xff]
      %v333 = vld [vmem:[%s250 + $0x8] sm:$0xff]
      %v334 = vld [vmem:[%s250 + $0x10] sm:$0xff]
      %v335 = vld [vmem:[%s250 + $0x18] sm:$0xff]
      %v336 = vld [vmem:[%s250 + $0x20] sm:$0xff]
      %v337 = vld [vmem:[%s250 + $0x28] sm:$0xff]
      %v338 = vld [vmem:[%s250 + $0x30] sm:$0xff]
      %v339 = vld [vmem:[%s250 + $0x38] sm:$0xff]
      %v340 = vld [vmem:[%s250 + $0x40] sm:$0xff]
      %v341 = vld [vmem:[%s250 + $0x48] sm:$0xff]
      %v342 = vld [vmem:[%s250 + $0x50] sm:$0xff]
      %v343 = vld [vmem:[%s250 + $0x58] sm:$0xff]
      %v344 = vld [vmem:[%s250 + $0x60] sm:$0xff]
      %v345 = vld [vmem:[%s250 + $0x68] sm:$0xff]
      %v346 = vld [vmem:[%s250 + $0x70] sm:$0xff]
      %v347 = vld [vmem:[%s250 + $0x78] sm:$0xff]
      %v348 = vld [vmem:[%s250 + $0x80] sm:$0xff]
      %v349 = vld [vmem:[%s250 + $0x88] sm:$0xff]
      %v350 = vld [vmem:[%s250 + $0x90] sm:$0xff]
      %v351 = vld [vmem:[%s250 + $0x98] sm:$0xff]
      %v352 = vld [vmem:[%s250 + $0xa0] sm:$0xff]
      %v353 = vld [vmem:[%s250 + $0xa8] sm:$0xff]
      %v354 = vld [vmem:[%s250 + $0xb0] sm:$0xff]
      %v355 = vld [vmem:[%s250 + $0xb8] sm:$0xff]
      %v356 = vld [vmem:[%s250 + $0xc0] sm:$0xff]
      %v357 = vld [vmem:[%s250 + $0xc8] sm:$0xff]
      %v358 = vld [vmem:[%s250 + $0xd0] sm:$0xff]
      %v359 = vld [vmem:[%s250 + $0xd8] sm:$0xff]
      %v360 = vld [vmem:[%s250 + $0xe0] sm:$0xff]
      %v361 = vld [vmem:[%s250 + $0xe8] sm:$0xff]
      %v362 = vld [vmem:[%s250 + $0xf0] sm:$0xff]
      %v363 = vld [vmem:[%s250 + $0xf8] sm:$0xff]
      %364 = vxpose.xlu0.b32.start [1/16] %v332, 128
      %365 = vxpose.xlu0.b32.cont [2/16] %v333, 128
      %366 = vxpose.xlu0.b32.cont [3/16] %v334, 128
      %367 = vxpose.xlu0.b32.cont [4/16] %v335, 128
      %368 = vxpose.xlu0.b32.cont [5/16] %v336, 128
      %369 = vxpose.xlu0.b32.cont [6/16] %v337, 128
      %370 = vxpose.xlu0.b32.cont [7/16] %v338, 128
      %371 = vxpose.xlu0.b32.cont [8/16] %v339, 128
      %372 = vxpose.xlu0.b32.cont [9/16] %v340, 128
      %373 = vxpose.xlu0.b32.cont [10/16] %v341, 128
      %374 = vxpose.xlu0.b32.cont [11/16] %v342, 128
      %375 = vxpose.xlu0.b32.cont [12/16] %v343, 128
      %376 = vxpose.xlu0.b32.cont [13/16] %v344, 128
      %377 = vxpose.xlu0.b32.cont [14/16] %v345, 128
      %378 = vxpose.xlu0.b32.cont [15/16] %v346, 128
      %379 = vxpose.xlu0.b32.end [16/16] %v347, 128
      %v380 = vpop.trf.xlu0
      %v381 = vpop.trf.xlu0
      %v382 = vpop.trf.xlu0
      %v383 = vpop.trf.xlu0
      %v384 = vpop.trf.xlu0
      %v385 = vpop.trf.xlu0
      %v386 = vpop.trf.xlu0
      %v387 = vpop.trf.xlu0
      %v388 = vpop.trf.xlu0
      %v389 = vpop.trf.xlu0
      %v390 = vpop.trf.xlu0
      %v391 = vpop.trf.xlu0
      %v392 = vpop.trf.xlu0
      %v393 = vpop.trf.xlu0
      %v394 = vpop.trf.xlu0
      %v395 = vpop.trf.xlu0
      %396 = vxpose.xlu0.b32.start [1/16] %v348, 128
      %397 = vxpose.xlu0.b32.cont [2/16] %v349, 128
      %398 = vxpose.xlu0.b32.cont [3/16] %v350, 128
      %399 = vxpose.xlu0.b32.cont [4/16] %v351, 128
      %400 = vxpose.xlu0.b32.cont [5/16] %v352, 128
      %401 = vxpose.xlu0.b32.cont [6/16] %v353, 128
      %402 = vxpose.xlu0.b32.cont [7/16] %v354, 128
      %403 = vxpose.xlu0.b32.cont [8/16] %v355, 128
      %404 = vxpose.xlu0.b32.cont [9/16] %v356, 128
      %405 = vxpose.xlu0.b32.cont [10/16] %v357, 128
      %406 = vxpose.xlu0.b32.cont [11/16] %v358, 128
      %407 = vxpose.xlu0.b32.cont [12/16] %v359, 128
      %408 = vxpose.xlu0.b32.cont [13/16] %v360, 128
      %409 = vxpose.xlu0.b32.cont [14/16] %v361, 128
      %410 = vxpose.xlu0.b32.cont [15/16] %v362, 128
      %411 = vxpose.xlu0.b32.end [16/16] %v363, 128
      %v412 = vpop.trf.xlu0
      %v413 = vpop.trf.xlu0
      %v414 = vpop.trf.xlu0
      %v415 = vpop.trf.xlu0
      %v416 = vpop.trf.xlu0
      %v417 = vpop.trf.xlu0
      %v418 = vpop.trf.xlu0
      %v419 = vpop.trf.xlu0
      %v420 = vpop.trf.xlu0
      %v421 = vpop.trf.xlu0
      %v422 = vpop.trf.xlu0
      %v423 = vpop.trf.xlu0
      %v424 = vpop.trf.xlu0
      %v425 = vpop.trf.xlu0
      %v426 = vpop.trf.xlu0
      %v427 = vpop.trf.xlu0
      %v429 = vlaneseq
      %v430 = vshrl.u32 %v429, 7
      %v431 = vsub.s32 0, %v430
      %v432 = vrot.slane %v331, %v431
      %v433 = vlaneseq
      %v434 = vshrl.u32 %v433, 7
      %v435 = vsub.s32 4, %v434
      %v436 = vrot.slane %v331, %v435
      %v439 = vlaneseq
      %v440 = vshrl.u32 %v439, 7
      %v441 = vsub.s32 0, %v440
      %v442 = vrot.slane %v432, %v441
      %v443 = vlaneseq
      %v444 = vshrl.u32 %v443, 7
      %v445 = vsub.s32 0, %v444
      %v446 = vrot.slane %v436, %v445
      %v447 = vmul.f32 %v380, %v442
      %v448 = vmul.f32 %v412, %v446
      %v449 = vmul.f32 %v381, %v442
      %v450 = vmul.f32 %v413, %v446
      %s451 = scalar_lea.vmem %s250, 256
      %v452 = vld [vmem:[%s451] sm:$0xff]
      %v453 = vld [vmem:[%s451 + $0x8] sm:$0xff]
      %v454 = vld [vmem:[%s451 + $0x10] sm:$0xff]
      %v455 = vld [vmem:[%s451 + $0x18] sm:$0xff]
      %v456 = vld [vmem:[%s451 + $0x20] sm:$0xff]
      %v457 = vld [vmem:[%s451 + $0x28] sm:$0xff]
      %v458 = vld [vmem:[%s451 + $0x30] sm:$0xff]
      %v459 = vld [vmem:[%s451 + $0x38] sm:$0xff]
      %v460 = vld [vmem:[%s451 + $0x40] sm:$0xff]
      %v461 = vld [vmem:[%s451 + $0x48] sm:$0xff]
      %v462 = vld [vmem:[%s451 + $0x50] sm:$0xff]
      %v463 = vld [vmem:[%s451 + $0x58] sm:$0xff]
      %v464 = vld [vmem:[%s451 + $0x60] sm:$0xff]
      %v465 = vld [vmem:[%s451 + $0x68] sm:$0xff]
      %v466 = vld [vmem:[%s451 + $0x70] sm:$0xff]
      %v467 = vld [vmem:[%s451 + $0x78] sm:$0xff]
      %v468 = vld [vmem:[%s451 + $0x80] sm:$0xff]
      %v469 = vld [vmem:[%s451 + $0x88] sm:$0xff]
      %v470 = vld [vmem:[%s451 + $0x90] sm:$0xff]
      %v471 = vld [vmem:[%s451 + $0x98] sm:$0xff]
      %v472 = vld [vmem:[%s451 + $0xa0] sm:$0xff]
      %v473 = vld [vmem:[%s451 + $0xa8] sm:$0xff]
      %v474 = vld [vmem:[%s451 + $0xb0] sm:$0xff]
      %v475 = vld [vmem:[%s451 + $0xb8] sm:$0xff]
      %v476 = vld [vmem:[%s451 + $0xc0] sm:$0xff]
      %v477 = vld [vmem:[%s451 + $0xc8] sm:$0xff]
      %v478 = vld [vmem:[%s451 + $0xd0] sm:$0xff]
      %v479 = vld [vmem:[%s451 + $0xd8] sm:$0xff]
      %v480 = vld [vmem:[%s451 + $0xe0] sm:$0xff]
      %v481 = vld [vmem:[%s451 + $0xe8] sm:$0xff]
      %v482 = vld [vmem:[%s451 + $0xf0] sm:$0xff]
      %v483 = vld [vmem:[%s451 + $0xf8] sm:$0xff]
      %484 = vxpose.xlu0.b32.start [1/16] %v452, 128
      %485 = vxpose.xlu0.b32.cont [2/16] %v453, 128
      %486 = vxpose.xlu0.b32.cont [3/16] %v454, 128
      %487 = vxpose.xlu0.b32.cont [4/16] %v455, 128
      %488 = vxpose.xlu0.b32.cont [5/16] %v456, 128
      %489 = vxpose.xlu0.b32.cont [6/16] %v457, 128
      %490 = vxpose.xlu0.b32.cont [7/16] %v458, 128
      %491 = vxpose.xlu0.b32.cont [8/16] %v459, 128
      %492 = vxpose.xlu0.b32.cont [9/16] %v460, 128
      %493 = vxpose.xlu0.b32.cont [10/16] %v461, 128
      %494 = vxpose.xlu0.b32.cont [11/16] %v462, 128
      %495 = vxpose.xlu0.b32.cont [12/16] %v463, 128
      %496 = vxpose.xlu0.b32.cont [13/16] %v464, 128
      %497 = vxpose.xlu0.b32.cont [14/16] %v465, 128
      %498 = vxpose.xlu0.b32.cont [15/16] %v466, 128
      %499 = vxpose.xlu0.b32.end [16/16] %v467, 128
      %v500 = vpop.trf.xlu0
      %v501 = vpop.trf.xlu0
      %v502 = vpop.trf.xlu0
      %v503 = vpop.trf.xlu0
      %v504 = vpop.trf.xlu0
      %v505 = vpop.trf.xlu0
      %v506 = vpop.trf.xlu0
      %v507 = vpop.trf.xlu0
      %v508 = vpop.trf.xlu0
      %v509 = vpop.trf.xlu0
      %v510 = vpop.trf.xlu0
      %v511 = vpop.trf.xlu0
      %v512 = vpop.trf.xlu0
      %v513 = vpop.trf.xlu0
      %v514 = vpop.trf.xlu0
      %v515 = vpop.trf.xlu0
      %516 = vxpose.xlu0.b32.start [1/16] %v468, 128
      %517 = vxpose.xlu0.b32.cont [2/16] %v469, 128
      %518 = vxpose.xlu0.b32.cont [3/16] %v470, 128
      %519 = vxpose.xlu0.b32.cont [4/16] %v471, 128
      %520 = vxpose.xlu0.b32.cont [5/16] %v472, 128
      %521 = vxpose.xlu0.b32.cont [6/16] %v473, 128
      %522 = vxpose.xlu0.b32.cont [7/16] %v474, 128
      %523 = vxpose.xlu0.b32.cont [8/16] %v475, 128
      %524 = vxpose.xlu0.b32.cont [9/16] %v476, 128
      %525 = vxpose.xlu0.b32.cont [10/16] %v477, 128
      %526 = vxpose.xlu0.b32.cont [11/16] %v478, 128
      %527 = vxpose.xlu0.b32.cont [12/16] %v479, 128
      %528 = vxpose.xlu0.b32.cont [13/16] %v480, 128
      %529 = vxpose.xlu0.b32.cont [14/16] %v481, 128
      %530 = vxpose.xlu0.b32.cont [15/16] %v482, 128
      %531 = vxpose.xlu0.b32.end [16/16] %v483, 128
      %v532 = vpop.trf.xlu0
      %v533 = vpop.trf.xlu0
      %v534 = vpop.trf.xlu0
      %v535 = vpop.trf.xlu0
      %v536 = vpop.trf.xlu0
      %v537 = vpop.trf.xlu0
      %v538 = vpop.trf.xlu0
      %v539 = vpop.trf.xlu0
      %v540 = vpop.trf.xlu0
      %v541 = vpop.trf.xlu0
      %v542 = vpop.trf.xlu0
      %v543 = vpop.trf.xlu0
      %v544 = vpop.trf.xlu0
      %v545 = vpop.trf.xlu0
      %v546 = vpop.trf.xlu0
      %v547 = vpop.trf.xlu0
      %v548 = vlaneseq
      %v549 = vshrl.u32 %v548, 7
      %v550 = vsub.s32 1, %v549
      %v551 = vrot.slane %v331, %v550
      %v552 = vlaneseq
      %v553 = vshrl.u32 %v552, 7
      %v554 = vsub.s32 5, %v553
      %v555 = vrot.slane %v331, %v554
      %v558 = vlaneseq
      %v559 = vshrl.u32 %v558, 7
      %v560 = vsub.s32 1, %v559
      %v561 = vrot.slane %v551, %v560
      %v562 = vlaneseq
      %v563 = vshrl.u32 %v562, 7
      %v564 = vsub.s32 1, %v563
      %v565 = vrot.slane %v555, %v564
      %v566 = vmul.f32 %v500, %v561
      %v567 = vmul.f32 %v532, %v565
      %v568 = vmul.f32 %v501, %v561
      %v569 = vmul.f32 %v533, %v565
      %v570 = vadd.f32 %v447, %v566
      %v571 = vadd.f32 %v448, %v567
      %v572 = vadd.f32 %v449, %v568
      %v573 = vadd.f32 %v450, %v569
      %s574 = scalar_lea.vmem %s250, 512
      %v575 = vld [vmem:[%s574] sm:$0xff]
      %v576 = vld [vmem:[%s574 + $0x8] sm:$0xff]
      %v577 = vld [vmem:[%s574 + $0x10] sm:$0xff]
      %v578 = vld [vmem:[%s574 + $0x18] sm:$0xff]
      %v579 = vld [vmem:[%s574 + $0x20] sm:$0xff]
      %v580 = vld [vmem:[%s574 + $0x28] sm:$0xff]
      %v581 = vld [vmem:[%s574 + $0x30] sm:$0xff]
      %v582 = vld [vmem:[%s574 + $0x38] sm:$0xff]
      %v583 = vld [vmem:[%s574 + $0x40] sm:$0xff]
      %v584 = vld [vmem:[%s574 + $0x48] sm:$0xff]
      %v585 = vld [vmem:[%s574 + $0x50] sm:$0xff]
      %v586 = vld [vmem:[%s574 + $0x58] sm:$0xff]
      %v587 = vld [vmem:[%s574 + $0x60] sm:$0xff]
      %v588 = vld [vmem:[%s574 + $0x68] sm:$0xff]
      %v589 = vld [vmem:[%s574 + $0x70] sm:$0xff]
      %v590 = vld [vmem:[%s574 + $0x78] sm:$0xff]
      %v591 = vld [vmem:[%s574 + $0x80] sm:$0xff]
      %v592 = vld [vmem:[%s574 + $0x88] sm:$0xff]
      %v593 = vld [vmem:[%s574 + $0x90] sm:$0xff]
      %v594 = vld [vmem:[%s574 + $0x98] sm:$0xff]
      %v595 = vld [vmem:[%s574 + $0xa0] sm:$0xff]
      %v596 = vld [vmem:[%s574 + $0xa8] sm:$0xff]
      %v597 = vld [vmem:[%s574 + $0xb0] sm:$0xff]
      %v598 = vld [vmem:[%s574 + $0xb8] sm:$0xff]
      %v599 = vld [vmem:[%s574 + $0xc0] sm:$0xff]
      %v600 = vld [vmem:[%s574 + $0xc8] sm:$0xff]
      %v601 = vld [vmem:[%s574 + $0xd0] sm:$0xff]
      %v602 = vld [vmem:[%s574 + $0xd8] sm:$0xff]
      %v603 = vld [vmem:[%s574 + $0xe0] sm:$0xff]
      %v604 = vld [vmem:[%s574 + $0xe8] sm:$0xff]
      %v605 = vld [vmem:[%s574 + $0xf0] sm:$0xff]
      %v606 = vld [vmem:[%s574 + $0xf8] sm:$0xff]
      %607 = vxpose.xlu0.b32.start [1/16] %v575, 128
      %608 = vxpose.xlu0.b32.cont [2/16] %v576, 128
      %609 = vxpose.xlu0.b32.cont [3/16] %v577, 128
      %610 = vxpose.xlu0.b32.cont [4/16] %v578, 128
      %611 = vxpose.xlu0.b32.cont [5/16] %v579, 128
      %612 = vxpose.xlu0.b32.cont [6/16] %v580, 128
      %613 = vxpose.xlu0.b32.cont [7/16] %v581, 128
      %614 = vxpose.xlu0.b32.cont [8/16] %v582, 128
      %615 = vxpose.xlu0.b32.cont [9/16] %v583, 128
      %616 = vxpose.xlu0.b32.cont [10/16] %v584, 128
      %617 = vxpose.xlu0.b32.cont [11/16] %v585, 128
      %618 = vxpose.xlu0.b32.cont [12/16] %v586, 128
      %619 = vxpose.xlu0.b32.cont [13/16] %v587, 128
      %620 = vxpose.xlu0.b32.cont [14/16] %v588, 128
      %621 = vxpose.xlu0.b32.cont [15/16] %v589, 128
      %622 = vxpose.xlu0.b32.end [16/16] %v590, 128
      %v623 = vpop.trf.xlu0
      %v624 = vpop.trf.xlu0
      %v625 = vpop.trf.xlu0
      %v626 = vpop.trf.xlu0
      %v627 = vpop.trf.xlu0
      %v628 = vpop.trf.xlu0
      %v629 = vpop.trf.xlu0
      %v630 = vpop.trf.xlu0
      %v631 = vpop.trf.xlu0
      %v632 = vpop.trf.xlu0
      %v633 = vpop.trf.xlu0
      %v634 = vpop.trf.xlu0
      %v635 = vpop.trf.xlu0
      %v636 = vpop.trf.xlu0
      %v637 = vpop.trf.xlu0
      %v638 = vpop.trf.xlu0
      %639 = vxpose.xlu0.b32.start [1/16] %v591, 128
      %640 = vxpose.xlu0.b32.cont [2/16] %v592, 128
      %641 = vxpose.xlu0.b32.cont [3/16] %v593, 128
      %642 = vxpose.xlu0.b32.cont [4/16] %v594, 128
      %643 = vxpose.xlu0.b32.cont [5/16] %v595, 128
      %644 = vxpose.xlu0.b32.cont [6/16] %v596, 128
      %645 = vxpose.xlu0.b32.cont [7/16] %v597, 128
      %646 = vxpose.xlu0.b32.cont [8/16] %v598, 128
      %647 = vxpose.xlu0.b32.cont [9/16] %v599, 128
      %648 = vxpose.xlu0.b32.cont [10/16] %v600, 128
      %649 = vxpose.xlu0.b32.cont [11/16] %v601, 128
      %650 = vxpose.xlu0.b32.cont [12/16] %v602, 128
      %651 = vxpose.xlu0.b32.cont [13/16] %v603, 128
      %652 = vxpose.xlu0.b32.cont [14/16] %v604, 128
      %653 = vxpose.xlu0.b32.cont [15/16] %v605, 128
      %654 = vxpose.xlu0.b32.end [16/16] %v606, 128
      %v655 = vpop.trf.xlu0
      %v656 = vpop.trf.xlu0
      %v657 = vpop.trf.xlu0
      %v658 = vpop.trf.xlu0
      %v659 = vpop.trf.xlu0
      %v660 = vpop.trf.xlu0
      %v661 = vpop.trf.xlu0
      %v662 = vpop.trf.xlu0
      %v663 = vpop.trf.xlu0
      %v664 = vpop.trf.xlu0
      %v665 = vpop.trf.xlu0
      %v666 = vpop.trf.xlu0
      %v667 = vpop.trf.xlu0
      %v668 = vpop.trf.xlu0
      %v669 = vpop.trf.xlu0
      %v670 = vpop.trf.xlu0
      %v671 = vlaneseq
      %v672 = vshrl.u32 %v671, 7
      %v673 = vsub.s32 2, %v672
      %v674 = vrot.slane %v331, %v673
      %v675 = vlaneseq
      %v676 = vshrl.u32 %v675, 7
      %v677 = vsub.s32 6, %v676
      %v678 = vrot.slane %v331, %v677
      %v681 = vlaneseq
      %v682 = vshrl.u32 %v681, 7
      %v683 = vsub.s32 2, %v682
      %v684 = vrot.slane %v674, %v683
      %v685 = vlaneseq
      %v686 = vshrl.u32 %v685, 7
      %v687 = vsub.s32 2, %v686
      %v688 = vrot.slane %v678, %v687
      %v689 = vmul.f32 %v623, %v684
      %v690 = vmul.f32 %v655, %v688
      %v691 = vmul.f32 %v624, %v684
      %v692 = vmul.f32 %v656, %v688
      %v693 = vadd.f32 %v570, %v689
      %v694 = vadd.f32 %v571, %v690
      %v695 = vadd.f32 %v572, %v691
      %v696 = vadd.f32 %v573, %v692
      %s697 = scalar_lea.vmem %s250, 768
      %v698 = vld [vmem:[%s697] sm:$0xff]
      %v699 = vld [vmem:[%s697 + $0x8] sm:$0xff]
      %v700 = vld [vmem:[%s697 + $0x10] sm:$0xff]
      %v701 = vld [vmem:[%s697 + $0x18] sm:$0xff]
      %v702 = vld [vmem:[%s697 + $0x20] sm:$0xff]
      %v703 = vld [vmem:[%s697 + $0x28] sm:$0xff]
      %v704 = vld [vmem:[%s697 + $0x30] sm:$0xff]
      %v705 = vld [vmem:[%s697 + $0x38] sm:$0xff]
      %v706 = vld [vmem:[%s697 + $0x40] sm:$0xff]
      %v707 = vld [vmem:[%s697 + $0x48] sm:$0xff]
      %v708 = vld [vmem:[%s697 + $0x50] sm:$0xff]
      %v709 = vld [vmem:[%s697 + $0x58] sm:$0xff]
      %v710 = vld [vmem:[%s697 + $0x60] sm:$0xff]
      %v711 = vld [vmem:[%s697 + $0x68] sm:$0xff]
      %v712 = vld [vmem:[%s697 + $0x70] sm:$0xff]
      %v713 = vld [vmem:[%s697 + $0x78] sm:$0xff]
      %v714 = vld [vmem:[%s697 + $0x80] sm:$0xff]
      %v715 = vld [vmem:[%s697 + $0x88] sm:$0xff]
      %v716 = vld [vmem:[%s697 + $0x90] sm:$0xff]
      %v717 = vld [vmem:[%s697 + $0x98] sm:$0xff]
      %v718 = vld [vmem:[%s697 + $0xa0] sm:$0xff]
      %v719 = vld [vmem:[%s697 + $0xa8] sm:$0xff]
      %v720 = vld [vmem:[%s697 + $0xb0] sm:$0xff]
      %v721 = vld [vmem:[%s697 + $0xb8] sm:$0xff]
      %v722 = vld [vmem:[%s697 + $0xc0] sm:$0xff]
      %v723 = vld [vmem:[%s697 + $0xc8] sm:$0xff]
      %v724 = vld [vmem:[%s697 + $0xd0] sm:$0xff]
      %v725 = vld [vmem:[%s697 + $0xd8] sm:$0xff]
      %v726 = vld [vmem:[%s697 + $0xe0] sm:$0xff]
      %v727 = vld [vmem:[%s697 + $0xe8] sm:$0xff]
      %v728 = vld [vmem:[%s697 + $0xf0] sm:$0xff]
      %v729 = vld [vmem:[%s697 + $0xf8] sm:$0xff]
      %730 = vxpose.xlu0.b32.start [1/16] %v698, 128
      %731 = vxpose.xlu0.b32.cont [2/16] %v699, 128
      %732 = vxpose.xlu0.b32.cont [3/16] %v700, 128
      %733 = vxpose.xlu0.b32.cont [4/16] %v701, 128
      %734 = vxpose.xlu0.b32.cont [5/16] %v702, 128
      %735 = vxpose.xlu0.b32.cont [6/16] %v703, 128
      %736 = vxpose.xlu0.b32.cont [7/16] %v704, 128
      %737 = vxpose.xlu0.b32.cont [8/16] %v705, 128
      %738 = vxpose.xlu0.b32.cont [9/16] %v706, 128
      %739 = vxpose.xlu0.b32.cont [10/16] %v707, 128
      %740 = vxpose.xlu0.b32.cont [11/16] %v708, 128
      %741 = vxpose.xlu0.b32.cont [12/16] %v709, 128
      %742 = vxpose.xlu0.b32.cont [13/16] %v710, 128
      %743 = vxpose.xlu0.b32.cont [14/16] %v711, 128
      %744 = vxpose.xlu0.b32.cont [15/16] %v712, 128
      %745 = vxpose.xlu0.b32.end [16/16] %v713, 128
      %v746 = vpop.trf.xlu0
      %v747 = vpop.trf.xlu0
      %v748 = vpop.trf.xlu0
      %v749 = vpop.trf.xlu0
      %v750 = vpop.trf.xlu0
      %v751 = vpop.trf.xlu0
      %v752 = vpop.trf.xlu0
      %v753 = vpop.trf.xlu0
      %v754 = vpop.trf.xlu0
      %v755 = vpop.trf.xlu0
      %v756 = vpop.trf.xlu0
      %v757 = vpop.trf.xlu0
      %v758 = vpop.trf.xlu0
      %v759 = vpop.trf.xlu0
      %v760 = vpop.trf.xlu0
      %v761 = vpop.trf.xlu0
      %762 = vxpose.xlu0.b32.start [1/16] %v714, 128
      %763 = vxpose.xlu0.b32.cont [2/16] %v715, 128
      %764 = vxpose.xlu0.b32.cont [3/16] %v716, 128
      %765 = vxpose.xlu0.b32.cont [4/16] %v717, 128
      %766 = vxpose.xlu0.b32.cont [5/16] %v718, 128
      %767 = vxpose.xlu0.b32.cont [6/16] %v719, 128
      %768 = vxpose.xlu0.b32.cont [7/16] %v720, 128
      %769 = vxpose.xlu0.b32.cont [8/16] %v721, 128
      %770 = vxpose.xlu0.b32.cont [9/16] %v722, 128
      %771 = vxpose.xlu0.b32.cont [10/16] %v723, 128
      %772 = vxpose.xlu0.b32.cont [11/16] %v724, 128
      %773 = vxpose.xlu0.b32.cont [12/16] %v725, 128
      %774 = vxpose.xlu0.b32.cont [13/16] %v726, 128
      %775 = vxpose.xlu0.b32.cont [14/16] %v727, 128
      %776 = vxpose.xlu0.b32.cont [15/16] %v728, 128
      %777 = vxpose.xlu0.b32.end [16/16] %v729, 128
      %v778 = vpop.trf.xlu0
      %v779 = vpop.trf.xlu0
      %v780 = vpop.trf.xlu0
      %v781 = vpop.trf.xlu0
      %v782 = vpop.trf.xlu0
      %v783 = vpop.trf.xlu0
      %v784 = vpop.trf.xlu0
      %v785 = vpop.trf.xlu0
      %v786 = vpop.trf.xlu0
      %v787 = vpop.trf.xlu0
      %v788 = vpop.trf.xlu0
      %v789 = vpop.trf.xlu0
      %v790 = vpop.trf.xlu0
      %v791 = vpop.trf.xlu0
      %v792 = vpop.trf.xlu0
      %v793 = vpop.trf.xlu0
      %v794 = vlaneseq
      %v795 = vshrl.u32 %v794, 7
      %v796 = vsub.s32 3, %v795
      %v797 = vrot.slane %v331, %v796
      %v798 = vlaneseq
      %v799 = vshrl.u32 %v798, 7
      %v800 = vsub.s32 7, %v799
      %v801 = vrot.slane %v331, %v800
      %v804 = vlaneseq
      %v805 = vshrl.u32 %v804, 7
      %v806 = vsub.s32 3, %v805
      %v807 = vrot.slane %v797, %v806
      %v808 = vlaneseq
      %v809 = vshrl.u32 %v808, 7
      %v810 = vsub.s32 3, %v809
      %v811 = vrot.slane %v801, %v810
      %v812 = vmul.f32 %v746, %v807
      %v813 = vmul.f32 %v778, %v811
      %v814 = vmul.f32 %v747, %v807
      %v815 = vmul.f32 %v779, %v811
      %v816 = vadd.f32 %v693, %v812
      %v817 = vadd.f32 %v694, %v813
      %v818 = vadd.f32 %v695, %v814
      %v819 = vadd.f32 %v696, %v815
      %v820 = vld [vmem:[%s270] sm:$0xff]
      %v821 = vld [vmem:[%s270 + $0x8] sm:$0xff]
      %v822 = vld [vmem:[%s270 + $0x10] sm:$0xff]
      %v823 = vld [vmem:[%s270 + $0x18] sm:$0xff]
      %v824 = vadd.f32 %v816, %v820
      %v825 = vadd.f32 %v817, %v821
      %v826 = vadd.f32 %v818, %v822
      %v827 = vadd.f32 %v819, %v823
      %828 = vst [vmem:[%s280] sm:$0xff] %v824
      %829 = vst [vmem:[%s280 + $0x8] sm:$0xff] %v825
      %830 = vst [vmem:[%s280 + $0x10] sm:$0xff] %v826
      %831 = vst [vmem:[%s280 + $0x18] sm:$0xff] %v827
      %s832 = smul.u32 2, %s19
      %p833 = scmp.lt.s32.totalorder %s18, 1
      %s834 = scalar_select %p833, %s18, 1
      %p835 = scmp.lt.s32.totalorder %s832, 1
      %s836 = scalar_select %p835, %s832, 1
      %s837 = smul.addr %s834, 4
      %s838 = sadd.s32 %s836, %s837
      %s839 = smul.addr %s838, 8
      %s840 = scalar_lea.vmem %s3, %s839
      // Predicated region
      $region33: #{gla_forward.5} parent=31 // pred_check
        %p841 = pneg %p130
      $region34: #{gla_forward.5} parent=31 // pred_check_branch
        %843 = sbr.rel (%p841) target = $region36
      $region35: #{gla_forward.5} parent=31 // pred_region
        %s844 = smul.u32 2, %s19
      $region36: #{gla_forward.5} parent=31 // pred_fallthru
        _
    $region32: #{gla_forward.5} parent=5 // pred_fallthru
      _
    %p845 = scmp.le.s32.totalorder 2, %s9
    // Predicated region
    $region37: #{gla_forward.5} parent=5 // pred_check
      %p846 = pneg %p845
    $region38: #{gla_forward.5} parent=5 // pred_check_branch
      %848 = sbr.rel (%p846) target = $region40
    $region39: #{gla_forward.5} parent=5 // pred_region
      %s849 = ssub.s32 %s9, 2
      // Predicated region
      $region41: #{gla_forward.5} parent=39 // pred_check
        %p850 = pneg %p136
      $region42: #{gla_forward.5} parent=39 // pred_check_branch
        %852 = sbr.rel (%p850) target = $region44
      $region43: #{gla_forward.5} parent=39 // pred_region
        %s853 = smul.u32 2, %s21
        %p854 = scmp.lt.s32.totalorder %s20, 1
        %s855 = scalar_select %p854, %s20, 1
        %p856 = scmp.lt.s32.totalorder %s853, 1
        %s857 = scalar_select %p856, %s853, 1
        %s858 = smul.addr %s855, 4
        %s859 = sadd.s32 %s857, %s858
        %s860 = smul.addr %s859, 8
        %s861 = scalar_lea.vmem %s3, %s860
      $region44: #{gla_forward.5} parent=39 // pred_fallthru
        _
    $region40: #{gla_forward.5} parent=5 // pred_fallthru
      _
  $region6: #{gla_forward.5} parent=0 // loop_footer
    %s13 = sadd.s32 1, %s9
  $region7: #{gla_forward.5} parent=0 // loop_footer_branch
    %8 = sbr.rel target = $region3
  $region8: #{gla_forward.5} parent=0 // loop_exit
    _

</llo_original>
